<compile_context>
chip_gen: v5e
topology: v5e:2x2
jax: 0.10.0
libtpu: 0.0.40
codegen_flags: <defaults>
</compile_context>

<pallas_src>
import functools

import jax
import jax.numpy as jnp
from jax.experimental import pallas as pl
from jax.experimental.pallas import tpu as pltpu

IMG_SIZE = 28
IN_DIM = IMG_SIZE * IMG_SIZE          # 784
DIMS = [IN_DIM, 1024, 512, 256, 1]    # MLP layer widths


def _critic_kernel(x_ref,
                   w1_ref, b1_ref,
                   w2_ref, b2_ref,
                   w3_ref, b3_ref,
                   w4_ref, b4_ref,
                   o_ref):
    """Fused 4-layer MLP: bf16 matmuls with f32 accumulation, fused bias+ReLU.

    x_ref : (tile, 784) f32 (cast to bf16 in-kernel)
    w*_ref: bf16 weights, (in, out) layout;  b*_ref: (1, out) f32
    o_ref : (tile, 1) f32
    """
    # In-kernel cast: VPU work that hides under the layer-1 MXU time.
    x = x_ref[...].astype(jnp.bfloat16)

    h = jnp.dot(x, w1_ref[...], preferred_element_type=jnp.float32) + b1_ref[...]
    h = jnp.maximum(h, 0.0).astype(jnp.bfloat16)

    h = jnp.dot(h, w2_ref[...], preferred_element_type=jnp.float32) + b2_ref[...]
    h = jnp.maximum(h, 0.0).astype(jnp.bfloat16)

    h = jnp.dot(h, w3_ref[...], preferred_element_type=jnp.float32) + b3_ref[...]
    h = jnp.maximum(h, 0.0).astype(jnp.bfloat16)

    out = jnp.dot(h, w4_ref[...], preferred_element_type=jnp.float32) + b4_ref[...]
    o_ref[...] = out.astype(o_ref.dtype)


def _pick_batch_tile(b, requested):
    """Batch-tile policy.

    * Small/medium batches (<= 2 * requested rows after rounding to 16) run
      as ONE grid step: single-TC v5e/v6e pay the per-step fixed overhead
      only once, and a 2-step split would not help v7x either.
    * Larger batches tile at `requested` (multiple of 128), giving several
      "parallel" steps so v7x's two TensorCores both get work and BlockSpec
      double-buffering can hide the x-tile DMA.
    * Rounding is to 16 (bf16 sublane packing) rather than 8.
    Callers on v5e with very large batches can pass batch_tile=512.
    """
    b16 = ((b + 15) // 16) * 16
    req = max(128, (requested // 128) * 128)
    if b16 <= 2 * req:
        return b16
    return req


def prepare_params(params):
    """f32 (in, out)-layout params -> bf16 weights + f32 (1, out) biases."""
    (w1, b1), (w2, b2), (w3, b3), (w4, b4) = params
    return (w1.astype(jnp.bfloat16), b1.astype(jnp.float32),
            w2.astype(jnp.bfloat16), b2.astype(jnp.float32),
            w3.astype(jnp.bfloat16), b3.astype(jnp.float32),
            w4.astype(jnp.bfloat16), b4.astype(jnp.float32))


@functools.partial(jax.jit, static_argnames=("batch_tile",))
def critic_forward(img, kparams, batch_tile=256):
    """img: (B, 1, 28, 28) float32 -> logits (B, 1) float32."""
    w1, b1, w2, b2, w3, b3, w4, b4 = kparams
    b = img.shape[0]

    x = img.reshape(-1, IN_DIM)                        # free view, stays f32

    tile = _pick_batch_tile(b, batch_tile)
    b_pad = -(-b // tile) * tile
    if b_pad != b:
        x = jnp.pad(x, ((0, b_pad - b), (0, 0)))       # only when B % tile != 0
    grid = (b_pad // tile,)

    # Weight/bias blocks are full arrays with constant index_maps, so they are
    # fetched once and stay VMEM-resident across grid steps.
    const2d = lambda a: pl.BlockSpec(a.shape, lambda i: (0, 0))

    flops = 2 * b_pad * sum(m * n for m, n in zip(DIMS[:-1], DIMS[1:]))
    bytes_accessed = (x.size * x.dtype.itemsize
                      + sum(a.size * a.dtype.itemsize for a in kparams)
                      + b_pad * 4)

    out = pl.pallas_call(
        _critic_kernel,
        out_shape=jax.ShapeDtypeStruct((b_pad, 1), jnp.float32),
        grid_spec=pltpu.PrefetchScalarGridSpec(
            num_scalar_prefetch=0,
            grid=grid,
            in_specs=[
                pl.BlockSpec((tile, IN_DIM), lambda i: (i, 0)),    # x tile (f32)
                const2d(w1), const2d(b1),
                const2d(w2), const2d(b2),
                const2d(w3), const2d(b3),
                const2d(w4), const2d(b4),
            ],
            out_specs=pl.BlockSpec((tile, 1), lambda i: (i, 0)),
        ),
        compiler_params=pltpu.CompilerParams(
            dimension_semantics=("parallel",),
            vmem_limit_bytes=48 << 20,        # well under v7x's 64 MiB physical
        ),
        cost_estimate=pl.CostEstimate(flops=flops, transcendentals=0,
                                      bytes_accessed=bytes_accessed),
    )(x, w1, b1, w2, b2, w3, b3, w4, b4)

    return out[:b]                                     # (B, 1)


def init_params(key):
    """PyTorch-Linear-style init: U(-1/sqrt(fan_in), +1/sqrt(fan_in)).
    Weights stored as (in_features, out_features); biases as (1, out_features)."""
    params = []
    for fan_in, fan_out in zip(DIMS[:-1], DIMS[1:]):
        key, kw, kb = jax.random.split(key, 3)
        bound = 1.0 / jnp.sqrt(jnp.float32(fan_in))
        w = jax.random.uniform(kw, (fan_in, fan_out), jnp.float32, -bound, bound)
        b = jax.random.uniform(kb, (1, fan_out), jnp.float32, -bound, bound)
        params.append((w, b))
    return params


def _reference_forward(img, params):
    """Pure-JAX reference with the same bf16-input / f32-accumulate matmuls."""
    x = img.reshape(-1, IN_DIM).astype(jnp.float32)
    for i, (w, b) in enumerate(params):
        x = jnp.dot(x.astype(jnp.bfloat16), w.astype(jnp.bfloat16),
                    preferred_element_type=jnp.float32) + b
        if i < len(params) - 1:
            x = jnp.maximum(x, 0.0)
    return x


if __name__ == "__main__":
    key = jax.random.PRNGKey(0)
    key, k1, k2, k3 = jax.random.split(key, 4)

    params = init_params(key)
    kparams = prepare_params(params)

    # Small batch: single 16-row step.
    batch = 2
    img = jax.random.normal(k1, (batch, 1, IMG_SIZE, IMG_SIZE), jnp.float32)
    out = jax.block_until_ready(critic_forward(img, kparams))
    ref = _reference_forward(img, params)
    assert out.shape == (batch, 1), out.shape
    assert jnp.allclose(out, ref, atol=1e-2, rtol=1e-2)

    # Medium batch: single big step (no forced halving), with row padding.
    batch2 = 260
    img2 = jax.random.normal(k2, (batch2, 1, IMG_SIZE, IMG_SIZE), jnp.float32)
    out2 = jax.block_until_ready(critic_forward(img2, kparams))
    ref2 = _reference_forward(img2, params)
    assert out2.shape == (batch2, 1), out2.shape
    assert jnp.allclose(out2, ref2, atol=1e-2, rtol=1e-2)

    # Larger batch: multi-step tiled grid (256-row tiles) + padding.
    batch3 = 520
    img3 = jax.random.normal(k3, (batch3, 1, IMG_SIZE, IMG_SIZE), jnp.float32)
    out3 = jax.block_until_ready(critic_forward(img3, kparams))
    ref3 = _reference_forward(img3, params)
    assert out3.shape == (batch3, 1), out3.shape
    assert jnp.allclose(out3, ref3, atol=1e-2, rtol=1e-2)

    print("KERNEL_OK")
</pallas_src>

<mosaic_0001>
module attributes {stable_mosaic.version = 11 : i64} {
  func.func @_critic_kernel(%arg0: i32, %arg1: memref<16x784xf32, #tpu.memory_space<vmem>>, %arg2: memref<784x1024xbf16, #tpu.memory_space<vmem>>, %arg3: memref<1x1024xf32, #tpu.memory_space<vmem>>, %arg4: memref<1024x512xbf16, #tpu.memory_space<vmem>>, %arg5: memref<1x512xf32, #tpu.memory_space<vmem>>, %arg6: memref<512x256xbf16, #tpu.memory_space<vmem>>, %arg7: memref<1x256xf32, #tpu.memory_space<vmem>>, %arg8: memref<256x1xbf16, #tpu.memory_space<vmem>>, %arg9: memref<1x1xf32, #tpu.memory_space<vmem>>, %arg10: memref<16x1xf32, #tpu.memory_space<vmem>>) attributes {dimension_semantics = [#tpu.dimension_semantics<parallel>], iteration_bounds = array<i64: 1>, scalar_prefetch = 0 : i64, scratch_operands = 0 : i64, tpu.core_type = #tpu.core_type<tc>, window_params = [{transform_indices = @transform_0, window_bounds = array<i64: 16, 784>}, {pipeline_mode = #tpu.pipeline_mode<synchronous>, transform_indices = @transform_1, window_bounds = array<i64: 784, 1024>}, {pipeline_mode = #tpu.pipeline_mode<synchronous>, transform_indices = @transform_2, window_bounds = array<i64: 1, 1024>}, {pipeline_mode = #tpu.pipeline_mode<synchronous>, transform_indices = @transform_3, window_bounds = array<i64: 1024, 512>}, {pipeline_mode = #tpu.pipeline_mode<synchronous>, transform_indices = @transform_4, window_bounds = array<i64: 1, 512>}, {pipeline_mode = #tpu.pipeline_mode<synchronous>, transform_indices = @transform_5, window_bounds = array<i64: 512, 256>}, {pipeline_mode = #tpu.pipeline_mode<synchronous>, transform_indices = @transform_6, window_bounds = array<i64: 1, 256>}, {pipeline_mode = #tpu.pipeline_mode<synchronous>, transform_indices = @transform_7, window_bounds = array<i64: 256, 1>}, {pipeline_mode = #tpu.pipeline_mode<synchronous>, transform_indices = @transform_8, window_bounds = array<i64: 1, 1>}, {transform_indices = @transform_9, window_bounds = array<i64: 16, 1>}]} {
    %c0 = arith.constant 0 : index
    %c0_0 = arith.constant 0 : index
    %0 = vector.load %arg1[%c0, %c0_0] : memref<16x784xf32, #tpu.memory_space<vmem>>, vector<16x784xf32>
    %1 = arith.truncf %0 : vector<16x784xf32> to vector<16x784xbf16>
    %c0_1 = arith.constant 0 : index
    %c0_2 = arith.constant 0 : index
    %2 = vector.load %arg2[%c0_1, %c0_2] : memref<784x1024xbf16, #tpu.memory_space<vmem>>, vector<784x1024xbf16>
    %cst = arith.constant dense<0.000000e+00> : vector<16x1024xf32>
    %3 = tpu.matmul %1, %2, %cst {dimension_numbers = #tpu.dot_dimension_numbers<[1], [0], [0], [1], [0, 0, 1, 1], [], []>} : vector<16x784xbf16>, vector<784x1024xbf16>, vector<16x1024xf32> -> vector<16x1024xf32>
    %c0_3 = arith.constant 0 : index
    %c0_4 = arith.constant 0 : index
    %4 = vector.load %arg3[%c0_3, %c0_4] : memref<1x1024xf32, #tpu.memory_space<vmem>>, vector<1x1024xf32>
    %5 = vector.broadcast %4 : vector<1x1024xf32> to vector<16x1024xf32>
    %6 = arith.addf %3, %5 : vector<16x1024xf32>
    %cst_5 = arith.constant 0.000000e+00 : f32
    %7 = vector.broadcast %cst_5 : f32 to vector<16x1024xf32>
    %8 = arith.maximumf %6, %7 : vector<16x1024xf32>
    %9 = arith.truncf %8 : vector<16x1024xf32> to vector<16x1024xbf16>
    %c0_6 = arith.constant 0 : index
    %c0_7 = arith.constant 0 : index
    %10 = vector.load %arg4[%c0_6, %c0_7] : memref<1024x512xbf16, #tpu.memory_space<vmem>>, vector<1024x512xbf16>
    %cst_8 = arith.constant dense<0.000000e+00> : vector<16x512xf32>
    %11 = tpu.matmul %9, %10, %cst_8 {dimension_numbers = #tpu.dot_dimension_numbers<[1], [0], [0], [1], [0, 0, 1, 1], [], []>} : vector<16x1024xbf16>, vector<1024x512xbf16>, vector<16x512xf32> -> vector<16x512xf32>
    %c0_9 = arith.constant 0 : index
    %c0_10 = arith.constant 0 : index
    %12 = vector.load %arg5[%c0_9, %c0_10] : memref<1x512xf32, #tpu.memory_space<vmem>>, vector<1x512xf32>
    %13 = vector.broadcast %12 : vector<1x512xf32> to vector<16x512xf32>
    %14 = arith.addf %11, %13 : vector<16x512xf32>
    %cst_11 = arith.constant 0.000000e+00 : f32
    %15 = vector.broadcast %cst_11 : f32 to vector<16x512xf32>
    %16 = arith.maximumf %14, %15 : vector<16x512xf32>
    %17 = arith.truncf %16 : vector<16x512xf32> to vector<16x512xbf16>
    %c0_12 = arith.constant 0 : index
    %c0_13 = arith.constant 0 : index
    %18 = vector.load %arg6[%c0_12, %c0_13] : memref<512x256xbf16, #tpu.memory_space<vmem>>, vector<512x256xbf16>
    %cst_14 = arith.constant dense<0.000000e+00> : vector<16x256xf32>
    %19 = tpu.matmul %17, %18, %cst_14 {dimension_numbers = #tpu.dot_dimension_numbers<[1], [0], [0], [1], [0, 0, 1, 1], [], []>} : vector<16x512xbf16>, vector<512x256xbf16>, vector<16x256xf32> -> vector<16x256xf32>
    %c0_15 = arith.constant 0 : index
    %c0_16 = arith.constant 0 : index
    %20 = vector.load %arg7[%c0_15, %c0_16] : memref<1x256xf32, #tpu.memory_space<vmem>>, vector<1x256xf32>
    %21 = vector.broadcast %20 : vector<1x256xf32> to vector<16x256xf32>
    %22 = arith.addf %19, %21 : vector<16x256xf32>
    %cst_17 = arith.constant 0.000000e+00 : f32
    %23 = vector.broadcast %cst_17 : f32 to vector<16x256xf32>
    %24 = arith.maximumf %22, %23 : vector<16x256xf32>
    %25 = arith.truncf %24 : vector<16x256xf32> to vector<16x256xbf16>
    %c0_18 = arith.constant 0 : index
    %c0_19 = arith.constant 0 : index
    %26 = vector.load %arg8[%c0_18, %c0_19] : memref<256x1xbf16, #tpu.memory_space<vmem>>, vector<256x1xbf16>
    %cst_20 = arith.constant dense<0.000000e+00> : vector<16x1xf32>
    %27 = tpu.matmul %25, %26, %cst_20 {dimension_numbers = #tpu.dot_dimension_numbers<[1], [0], [0], [1], [0, 0, 1, 1], [], []>} : vector<16x256xbf16>, vector<256x1xbf16>, vector<16x1xf32> -> vector<16x1xf32>
    %c0_21 = arith.constant 0 : index
    %c0_22 = arith.constant 0 : index
    %28 = vector.load %arg9[%c0_21, %c0_22] : memref<1x1xf32, #tpu.memory_space<vmem>>, vector<1x1xf32>
    %29 = vector.broadcast %28 : vector<1x1xf32> to vector<16x1xf32>
    %30 = arith.addf %27, %29 : vector<16x1xf32>
    %c0_23 = arith.constant 0 : index
    %c0_24 = arith.constant 0 : index
    %31 = vector.load %arg10[%c0_23, %c0_24] : memref<16x1xf32, #tpu.memory_space<vmem>>, vector<16x1xf32>
    tpu.vector_store %arg10[%c0_23, %c0_24], %30 {strides = array<i32>} : memref<16x1xf32, #tpu.memory_space<vmem>>, vector<16x1xf32>,
    return
  }
  func.func @transform_0(%arg0: i32) -> (i32, i32) {
    %c0_i32 = arith.constant 0 : i32
    %c0_i32_0 = arith.constant 0 : i32
    return %arg0, %c0_i32 : i32, i32
  }
  func.func @transform_1(%arg0: i32) -> (i32, i32) {
    %c0_i32 = arith.constant 0 : i32
    %c0_i32_0 = arith.constant 0 : i32
    %c0_i32_1 = arith.constant 0 : i32
    return %c0_i32, %c0_i32_0 : i32, i32
  }
  func.func @transform_2(%arg0: i32) -> (i32, i32) {
    %c0_i32 = arith.constant 0 : i32
    %c0_i32_0 = arith.constant 0 : i32
    %c0_i32_1 = arith.constant 0 : i32
    return %c0_i32, %c0_i32_0 : i32, i32
  }
  func.func @transform_3(%arg0: i32) -> (i32, i32) {
    %c0_i32 = arith.constant 0 : i32
    %c0_i32_0 = arith.constant 0 : i32
    %c0_i32_1 = arith.constant 0 : i32
    return %c0_i32, %c0_i32_0 : i32, i32
  }
  func.func @transform_4(%arg0: i32) -> (i32, i32) {
    %c0_i32 = arith.constant 0 : i32
    %c0_i32_0 = arith.constant 0 : i32
    %c0_i32_1 = arith.constant 0 : i32
    return %c0_i32, %c0_i32_0 : i32, i32
  }
  func.func @transform_5(%arg0: i32) -> (i32, i32) {
    %c0_i32 = arith.constant 0 : i32
    %c0_i32_0 = arith.constant 0 : i32
    %c0_i32_1 = arith.constant 0 : i32
    return %c0_i32, %c0_i32_0 : i32, i32
  }
  func.func @transform_6(%arg0: i32) -> (i32, i32) {
    %c0_i32 = arith.constant 0 : i32
    %c0_i32_0 = arith.constant 0 : i32
    %c0_i32_1 = arith.constant 0 : i32
    return %c0_i32, %c0_i32_0 : i32, i32
  }
  func.func @transform_7(%arg0: i32) -> (i32, i32) {
    %c0_i32 = arith.constant 0 : i32
    %c0_i32_0 = arith.constant 0 : i32
    %c0_i32_1 = arith.constant 0 : i32
    return %c0_i32, %c0_i32_0 : i32, i32
  }
  func.func @transform_8(%arg0: i32) -> (i32, i32) {
    %c0_i32 = arith.constant 0 : i32
    %c0_i32_0 = arith.constant 0 : i32
    %c0_i32_1 = arith.constant 0 : i32
    return %c0_i32, %c0_i32_0 : i32, i32
  }
  func.func @transform_9(%arg0: i32) -> (i32, i32) {
    %c0_i32 = arith.constant 0 : i32
    %c0_i32_0 = arith.constant 0 : i32
    return %arg0, %c0_i32 : i32, i32
  }
}

</mosaic_0001>

<llo_original>
// kernel: critic_forward.1
$region0: #{critic_forward.1}
  #allocation0 [shape = 'u32[]', space=smem, size = 0x4, offset = 0x4, fixed_abs, tag = 'smem constant byte address 0x4 - core index']
  #allocation1 [shape = 'u32[72,128]{1,0:T(1,128)}', space=vmem, size = 0x9000, scoped, tag = 'internal scratch']
  #allocation2 [shape = 'f32[1,1]{1,0:T(1,128)S(1)}', space=vmem, size = 0x200, scoped, tag = 'scoped memory for critic_forward.1']
  %s0 = inlined_call_operand.vmem [shape: f32[16,784], index: 0, kind: input, shape index: {}]
  %s1 = inlined_call_operand.hbm [shape: bf16[784,1024], index: 1, kind: input, shape index: {}]
  %s2 = inlined_call_operand.hbm [shape: f32[1,1024], index: 2, kind: input, shape index: {}]
  %s3 = inlined_call_operand.hbm [shape: bf16[1024,512], index: 3, kind: input, shape index: {}]
  %s4 = inlined_call_operand.hbm [shape: f32[1,512], index: 4, kind: input, shape index: {}]
  %s5 = inlined_call_operand.hbm [shape: bf16[512,256], index: 5, kind: input, shape index: {}]
  %s6 = inlined_call_operand.hbm [shape: f32[1,256], index: 6, kind: input, shape index: {}]
  %s7 = inlined_call_operand.vmem [shape: bf16[256,1], index: 7, kind: input, shape index: {}]
  %s8 = inlined_call_operand.<no memory space> [shape: f32[1,1], index: 8, kind: input, shape index: {}]
  %s9 = inlined_call_operand.vmem [shape: f32[16,1], index: 9, kind: output, shape index: {}]
  %s10 = sld [smem:[#allocation0]]
  $region70: #{critic_forward.1} parent=0
    _
  %s12 = ssub.s32 1, %s10
  %s13 = scalar_select 0, %s12, %s10
  %v14 = vstv %s8
  %15 = vst [vmem:[#allocation2] sm:$0x1] %v14
  $region1: #{critic_forward.1} parent=0
    #allocation3 [shape = 'u8[1605632]{0}', space=vmem, size = 0x188000, scoped, tag = 'input window, operand 1, single buffered']
    #allocation4 [shape = 's32[1]{0}', space=sflag, size = 0x4, scoped, tag = 'scoped memory for critic_forward.1']
    #allocation5 [shape = 'u8[4096]{0}', space=vmem, size = 0x1000, scoped, tag = 'input window, operand 2, single buffered']
    #allocation6 [shape = 's32[1]{0}', space=sflag, size = 0x4, scoped, tag = 'scoped memory for critic_forward.1']
    #allocation7 [shape = 'u8[1048576]{0}', space=vmem, size = 0x100000, scoped, tag = 'input window, operand 3, single buffered']
    #allocation8 [shape = 'u8[2048]{0}', space=vmem, size = 0x800, scoped, tag = 'input window, operand 4, single buffered']
    #allocation9 [shape = 's32[1]{0}', space=sflag, size = 0x4, scoped, tag = 'scoped memory for critic_forward.1']
    #allocation10 [shape = 'u8[262144]{0}', space=vmem, size = 0x40000, scoped, tag = 'input window, operand 5, single buffered']
    #allocation11 [shape = 'u8[1024]{0}', space=vmem, size = 0x400, scoped, tag = 'input window, operand 6, single buffered']
    #allocation12 [shape = 's32[1]{0}', space=sflag, size = 0x4, scoped, tag = 'scoped memory for critic_forward.1']
    %16 = vsyncpa [#allocation4], 0
    %17 = vsyncpa [#allocation6], 0
    %18 = vsyncpa [#allocation9], 0
    %19 = vsyncpa [#allocation12], 0
    // Predicated region
    $region2: #{critic_forward.1} parent=1 // pred_check
      _
    $region3: #{critic_forward.1} parent=1 // pred_check_branch
      %21 = sbr.rel (0) target = $region5
    $region4: #{critic_forward.1} parent=1 // pred_region
      _
    $region5: #{critic_forward.1} parent=1 // pred_fallthru
      _
    // Predicated region
    $region6: #{critic_forward.1} parent=1 // pred_check
      _
    $region7: #{critic_forward.1} parent=1 // pred_check_branch
      %23 = sbr.rel (0) target = $region9
    $region8: #{critic_forward.1} parent=1 // pred_region
      %25 = vsyncadd [#allocation4], 0
      %s26 = sshll.u32 %s1, 4
      %s27 = int_to_ptr.hbm [resolvable:$true] %s26
      %s28 = sshll.u32 [#allocation3], 4
      %s29 = int_to_ptr.vmem [resolvable:$true] %s28
      %34 = dma.hbm_to_vmem [thread:$0]  %s27, 50176, %s29, [#allocation4], 512, 512, 32
    $region9: #{critic_forward.1} parent=1 // pred_fallthru
      _
    // Predicated region
    $region10: #{critic_forward.1} parent=1 // pred_check
      _
    $region11: #{critic_forward.1} parent=1 // pred_check_branch
      %36 = sbr.rel (0) target = $region13
    $region12: #{critic_forward.1} parent=1 // pred_region
      %38 = vsyncadd [#allocation6], 0
      %s40 = sshll.u32 %s2, 4
      %s41 = int_to_ptr.hbm [resolvable:$true] %s40
      %s42 = sshll.u32 [#allocation5], 4
      %s43 = int_to_ptr.vmem [resolvable:$true] %s42
      %45 = dma.hbm_to_vmem [thread:$0]  %s41, 128, %s43, [#allocation6]
    $region13: #{critic_forward.1} parent=1 // pred_fallthru
      _
    // Predicated region
    $region14: #{critic_forward.1} parent=1 // pred_check
      _
    $region15: #{critic_forward.1} parent=1 // pred_check_branch
      %47 = sbr.rel (0) target = $region17
    $region16: #{critic_forward.1} parent=1 // pred_region
      %49 = vsyncadd [#allocation6], 0
      %s50 = sshll.u32 %s3, 4
      %s51 = int_to_ptr.hbm [resolvable:$true] %s50
      %s52 = sshll.u32 [#allocation7], 4
      %s53 = int_to_ptr.vmem [resolvable:$true] %s52
      %58 = dma.hbm_to_vmem [thread:$0]  %s51, 32768, %s53, [#allocation6], 256, 256, 16
    $region17: #{critic_forward.1} parent=1 // pred_fallthru
      _
    // Predicated region
    $region18: #{critic_forward.1} parent=1 // pred_check
      _
    $region19: #{critic_forward.1} parent=1 // pred_check_branch
      %60 = sbr.rel (0) target = $region21
    $region20: #{critic_forward.1} parent=1 // pred_region
      %62 = vsyncadd [#allocation9], 0
      %s64 = sshll.u32 %s4, 4
      %s65 = int_to_ptr.hbm [resolvable:$true] %s64
      %s66 = sshll.u32 [#allocation8], 4
      %s67 = int_to_ptr.vmem [resolvable:$true] %s66
      %69 = dma.hbm_to_vmem [thread:$0]  %s65, 64, %s67, [#allocation9]
    $region21: #{critic_forward.1} parent=1 // pred_fallthru
      _
    // Predicated region
    $region22: #{critic_forward.1} parent=1 // pred_check
      _
    $region23: #{critic_forward.1} parent=1 // pred_check_branch
      %71 = sbr.rel (0) target = $region25
    $region24: #{critic_forward.1} parent=1 // pred_region
      %73 = vsyncadd [#allocation9], 0
      %s74 = sshll.u32 %s5, 4
      %s75 = int_to_ptr.hbm [resolvable:$true] %s74
      %s76 = sshll.u32 [#allocation10], 4
      %s77 = int_to_ptr.vmem [resolvable:$true] %s76
      %82 = dma.hbm_to_vmem [thread:$0]  %s75, 8192, %s77, [#allocation9], 128, 128, 8
    $region25: #{critic_forward.1} parent=1 // pred_fallthru
      _
    // Predicated region
    $region26: #{critic_forward.1} parent=1 // pred_check
      _
    $region27: #{critic_forward.1} parent=1 // pred_check_branch
      %84 = sbr.rel (0) target = $region29
    $region28: #{critic_forward.1} parent=1 // pred_region
      %86 = vsyncadd [#allocation12], 0
      %s88 = sshll.u32 %s6, 4
      %s89 = int_to_ptr.hbm [resolvable:$true] %s88
      %s90 = sshll.u32 [#allocation11], 4
      %s91 = int_to_ptr.vmem [resolvable:$true] %s90
      %93 = dma.hbm_to_vmem [thread:$0]  %s89, 32, %s91, [#allocation12]
    $region29: #{critic_forward.1} parent=1 // pred_fallthru
      _
    // Predicated region
    $region30: #{critic_forward.1} parent=1 // pred_check
      _
    $region31: #{critic_forward.1} parent=1 // pred_check_branch
      %95 = sbr.rel (0) target = $region33
    $region32: #{critic_forward.1} parent=1 // pred_region
      _
    $region33: #{critic_forward.1} parent=1 // pred_fallthru
      _
    // Predicated region
    $region34: #{critic_forward.1} parent=1 // pred_check
      _
    $region35: #{critic_forward.1} parent=1 // pred_check_branch
      %97 = sbr.rel (0) target = $region37
    $region36: #{critic_forward.1} parent=1 // pred_region
      _
    $region37: #{critic_forward.1} parent=1 // pred_fallthru
      _
    // Predicated region
    $region38: #{critic_forward.1} parent=1 // pred_check
      _
    $region39: #{critic_forward.1} parent=1 // pred_check_branch
      %99 = sbr.rel (0) target = $region41
    $region40: #{critic_forward.1} parent=1 // pred_region
      %101 = dma.done [#allocation4], 50176
    $region41: #{critic_forward.1} parent=1 // pred_fallthru
      _
    // Predicated region
    $region42: #{critic_forward.1} parent=1 // pred_check
      _
    $region43: #{critic_forward.1} parent=1 // pred_check_branch
      %103 = sbr.rel (0) target = $region45
    $region44: #{critic_forward.1} parent=1 // pred_region
      %105 = dma.done [#allocation6], 128
    $region45: #{critic_forward.1} parent=1 // pred_fallthru
      _
    // Predicated region
    $region46: #{critic_forward.1} parent=1 // pred_check
      _
    $region47: #{critic_forward.1} parent=1 // pred_check_branch
      %107 = sbr.rel (0) target = $region49
    $region48: #{critic_forward.1} parent=1 // pred_region
      %109 = dma.done [#allocation6], 32768
    $region49: #{critic_forward.1} parent=1 // pred_fallthru
      _
    // Predicated region
    $region50: #{critic_forward.1} parent=1 // pred_check
      _
    $region51: #{critic_forward.1} parent=1 // pred_check_branch
      %111 = sbr.rel (0) target = $region53
    $region52: #{critic_forward.1} parent=1 // pred_region
      %113 = dma.done [#allocation9], 64
    $region53: #{critic_forward.1} parent=1 // pred_fallthru
      _
    // Predicated region
    $region54: #{critic_forward.1} parent=1 // pred_check
      _
    $region55: #{critic_forward.1} parent=1 // pred_check_branch
      %115 = sbr.rel (0) target = $region57
    $region56: #{critic_forward.1} parent=1 // pred_region
      %117 = dma.done [#allocation9], 8192
    $region57: #{critic_forward.1} parent=1 // pred_fallthru
      _
    // Predicated region
    $region58: #{critic_forward.1} parent=1 // pred_check
      _
    $region59: #{critic_forward.1} parent=1 // pred_check_branch
      %119 = sbr.rel (0) target = $region61
    $region60: #{critic_forward.1} parent=1 // pred_region
      %121 = dma.done [#allocation12], 32
    $region61: #{critic_forward.1} parent=1 // pred_fallthru
      _
    %v123 = vld [vmem:[%s0] sm:$0xff]
    %v124 = vld [vmem:[%s0 + $0x8] sm:$0xff]
    %v125 = vld [vmem:[%s0 + $0x10] sm:$0xff]
    %v126 = vld [vmem:[%s0 + $0x18] sm:$0xff]
    %v127 = vld [vmem:[%s0 + $0x20] sm:$0xff]
    %v128 = vld [vmem:[%s0 + $0x28] sm:$0xff]
    %v129 = vld [vmem:[%s0 + $0x30] sm:$0xff]
    %v130 = vld [vmem:[%s0 + $0x38] sm:$0xff]
    %v131 = vld [vmem:[%s0 + $0x40] sm:$0xff]
    %v132 = vld [vmem:[%s0 + $0x48] sm:$0xff]
    %v133 = vld [vmem:[%s0 + $0x50] sm:$0xff]
    %v134 = vld [vmem:[%s0 + $0x58] sm:$0xff]
    %v135 = vld [vmem:[%s0 + $0x60] sm:$0xff]
    %v136 = vld [vmem:[%s0 + $0x68] sm:$0xff]
    %v137 = vpack.c.bf16 %v130, %v123
    %v138 = vpack.c.bf16 %v131, %v124
    %v139 = vpack.c.bf16 %v132, %v125
    %v140 = vpack.c.bf16 %v133, %v126
    %v141 = vpack.c.bf16 %v134, %v127
    %v142 = vpack.c.bf16 %v135, %v128
    %v143 = vpack.c.bf16 %v136, %v129
    %v144 = vld [vmem:[#allocation3] sm:$0xff]
    %v145 = vld [vmem:[#allocation3 + $0x8] sm:$0xff]
    %v146 = vld [vmem:[#allocation3 + $0x10] sm:$0xff]
    %v147 = vld [vmem:[#allocation3 + $0x18] sm:$0xff]
    %v148 = vld [vmem:[#allocation3 + $0x20] sm:$0xff]
    %v149 = vld [vmem:[#allocation3 + $0x28] sm:$0xff]
    %v150 = vld [vmem:[#allocation3 + $0x30] sm:$0xff]
    %v151 = vld [vmem:[#allocation3 + $0x38] sm:$0xff]
    %v152 = vld [vmem:[#allocation3 + $0x40] sm:$0xff]
    %v153 = vld [vmem:[#allocation3 + $0x48] sm:$0xff]
    %v154 = vld [vmem:[#allocation3 + $0x50] sm:$0xff]
    %v155 = vld [vmem:[#allocation3 + $0x58] sm:$0xff]
    %v156 = vld [vmem:[#allocation3 + $0x60] sm:$0xff]
    %v157 = vld [vmem:[#allocation3 + $0x68] sm:$0xff]
    %v158 = vld [vmem:[#allocation3 + $0x70] sm:$0xff]
    %v159 = vld [vmem:[#allocation3 + $0x78] sm:$0xff]
    %v160 = vld [vmem:[#allocation3 + $0x80] sm:$0xff]
    %v161 = vld [vmem:[#allocation3 + $0x88] sm:$0xff]
    %v162 = vld [vmem:[#allocation3 + $0x90] sm:$0xff]
    %v163 = vld [vmem:[#allocation3 + $0x98] sm:$0xff]
    %v164 = vld [vmem:[#allocation3 + $0xa0] sm:$0xff]
    %v165 = vld [vmem:[#allocation3 + $0xa8] sm:$0xff]
    %v166 = vld [vmem:[#allocation3 + $0xb0] sm:$0xff]
    %v167 = vld [vmem:[#allocation3 + $0xb8] sm:$0xff]
    %v168 = vld [vmem:[#allocation3 + $0xc0] sm:$0xff]
    %v169 = vld [vmem:[#allocation3 + $0xc8] sm:$0xff]
    %v170 = vld [vmem:[#allocation3 + $0xd0] sm:$0xff]
    %v171 = vld [vmem:[#allocation3 + $0xd8] sm:$0xff]
    %v172 = vld [vmem:[#allocation3 + $0xe0] sm:$0xff]
    %v173 = vld [vmem:[#allocation3 + $0xe8] sm:$0xff]
    %v174 = vld [vmem:[#allocation3 + $0xf0] sm:$0xff]
    %v175 = vld [vmem:[#allocation3 + $0xf8] sm:$0xff]
    %v176 = vld [vmem:[#allocation3 + $0x100] sm:$0xff]
    %v177 = vld [vmem:[#allocation3 + $0x108] sm:$0xff]
    %v178 = vld [vmem:[#allocation3 + $0x110] sm:$0xff]
    %v179 = vld [vmem:[#allocation3 + $0x118] sm:$0xff]
    %v180 = vld [vmem:[#allocation3 + $0x120] sm:$0xff]
    %v181 = vld [vmem:[#allocation3 + $0x128] sm:$0xff]
    %v182 = vld [vmem:[#allocation3 + $0x130] sm:$0xff]
    %v183 = vld [vmem:[#allocation3 + $0x138] sm:$0xff]
    %v184 = vld [vmem:[#allocation3 + $0x140] sm:$0xff]
    %v185 = vld [vmem:[#allocation3 + $0x148] sm:$0xff]
    %v186 = vld [vmem:[#allocation3 + $0x150] sm:$0xff]
    %v187 = vld [vmem:[#allocation3 + $0x158] sm:$0xff]
    %v188 = vld [vmem:[#allocation3 + $0x160] sm:$0xff]
    %v189 = vld [vmem:[#allocation3 + $0x168] sm:$0xff]
    %v190 = vld [vmem:[#allocation3 + $0x170] sm:$0xff]
    %v191 = vld [vmem:[#allocation3 + $0x178] sm:$0xff]
    %v192 = vld [vmem:[#allocation3 + $0x180] sm:$0xff]
    %v193 = vld [vmem:[#allocation3 + $0x188] sm:$0xff]
    %v194 = vld [vmem:[#allocation3 + $0x190] sm:$0xff]
    %v195 = vld [vmem:[#allocation3 + $0x198] sm:$0xff]
    %v196 = vld [vmem:[#allocation3 + $0x1a0] sm:$0xff]
    %v197 = vld [vmem:[#allocation3 + $0x1a8] sm:$0xff]
    %v198 = vld [vmem:[#allocation3 + $0x1b0] sm:$0xff]
    %v199 = vld [vmem:[#allocation3 + $0x1b8] sm:$0xff]
    %v200 = vld [vmem:[#allocation3 + $0x1c0] sm:$0xff]
    %v201 = vld [vmem:[#allocation3 + $0x1c8] sm:$0xff]
    %v202 = vld [vmem:[#allocation3 + $0x1d0] sm:$0xff]
    %v203 = vld [vmem:[#allocation3 + $0x1d8] sm:$0xff]
    %v204 = vld [vmem:[#allocation3 + $0x1e0] sm:$0xff]
    %v205 = vld [vmem:[#allocation3 + $0x1e8] sm:$0xff]
    %v206 = vld [vmem:[#allocation3 + $0x1f0] sm:$0xff]
    %v207 = vld [vmem:[#allocation3 + $0x1f8] sm:$0xff]
    %v208 = vld [vmem:[#allocation3 + $0x200] sm:$0xff]
    %v209 = vld [vmem:[#allocation3 + $0x208] sm:$0xff]
    %v210 = vld [vmem:[#allocation3 + $0x210] sm:$0xff]
    %v211 = vld [vmem:[#allocation3 + $0x218] sm:$0xff]
    %v212 = vld [vmem:[#allocation3 + $0x220] sm:$0xff]
    %v213 = vld [vmem:[#allocation3 + $0x228] sm:$0xff]
    %v214 = vld [vmem:[#allocation3 + $0x230] sm:$0xff]
    %v215 = vld [vmem:[#allocation3 + $0x238] sm:$0xff]
    %v216 = vld [vmem:[#allocation3 + $0x240] sm:$0xff]
    %v217 = vld [vmem:[#allocation3 + $0x248] sm:$0xff]
    %v218 = vld [vmem:[#allocation3 + $0x250] sm:$0xff]
    %v219 = vld [vmem:[#allocation3 + $0x258] sm:$0xff]
    %v220 = vld [vmem:[#allocation3 + $0x260] sm:$0xff]
    %v221 = vld [vmem:[#allocation3 + $0x268] sm:$0xff]
    %v222 = vld [vmem:[#allocation3 + $0x270] sm:$0xff]
    %v223 = vld [vmem:[#allocation3 + $0x278] sm:$0xff]
    %v224 = vld [vmem:[#allocation3 + $0x280] sm:$0xff]
    %v225 = vld [vmem:[#allocation3 + $0x288] sm:$0xff]
    %v226 = vld [vmem:[#allocation3 + $0x290] sm:$0xff]
    %v227 = vld [vmem:[#allocation3 + $0x298] sm:$0xff]
    %v228 = vld [vmem:[#allocation3 + $0x2a0] sm:$0xff]
    %v229 = vld [vmem:[#allocation3 + $0x2a8] sm:$0xff]
    %v230 = vld [vmem:[#allocation3 + $0x2b0] sm:$0xff]
    %v231 = vld [vmem:[#allocation3 + $0x2b8] sm:$0xff]
    %v232 = vld [vmem:[#allocation3 + $0x2c0] sm:$0xff]
    %v233 = vld [vmem:[#allocation3 + $0x2c8] sm:$0xff]
    %v234 = vld [vmem:[#allocation3 + $0x2d0] sm:$0xff]
    %v235 = vld [vmem:[#allocation3 + $0x2d8] sm:$0xff]
    %v236 = vld [vmem:[#allocation3 + $0x2e0] sm:$0xff]
    %v237 = vld [vmem:[#allocation3 + $0x2e8] sm:$0xff]
    %v238 = vld [vmem:[#allocation3 + $0x2f0] sm:$0xff]
    %v239 = vld [vmem:[#allocation3 + $0x2f8] sm:$0xff]
    %v240 = vld [vmem:[#allocation3 + $0x300] sm:$0xff]
    %v241 = vld [vmem:[#allocation3 + $0x308] sm:$0xff]
    %v242 = vld [vmem:[#allocation3 + $0x310] sm:$0xff]
    %v243 = vld [vmem:[#allocation3 + $0x318] sm:$0xff]
    %v244 = vld [vmem:[#allocation3 + $0x320] sm:$0xff]
    %v245 = vld [vmem:[#allocation3 + $0x328] sm:$0xff]
    %v246 = vld [vmem:[#allocation3 + $0x330] sm:$0xff]
    %v247 = vld [vmem:[#allocation3 + $0x338] sm:$0xff]
    %v248 = vld [vmem:[#allocation3 + $0x340] sm:$0xff]
    %v249 = vld [vmem:[#allocation3 + $0x348] sm:$0xff]
    %v250 = vld [vmem:[#allocation3 + $0x350] sm:$0xff]
    %v251 = vld [vmem:[#allocation3 + $0x358] sm:$0xff]
    %v252 = vld [vmem:[#allocation3 + $0x360] sm:$0xff]
    %v253 = vld [vmem:[#allocation3 + $0x368] sm:$0xff]
    %v254 = vld [vmem:[#allocation3 + $0x370] sm:$0xff]
    %v255 = vld [vmem:[#allocation3 + $0x378] sm:$0xff]
    %v256 = vld [vmem:[#allocation3 + $0x380] sm:$0xff]
    %v257 = vld [vmem:[#allocation3 + $0x388] sm:$0xff]
    %v258 = vld [vmem:[#allocation3 + $0x390] sm:$0xff]
    %v259 = vld [vmem:[#allocation3 + $0x398] sm:$0xff]
    %v260 = vld [vmem:[#allocation3 + $0x3a0] sm:$0xff]
    %v261 = vld [vmem:[#allocation3 + $0x3a8] sm:$0xff]
    %v262 = vld [vmem:[#allocation3 + $0x3b0] sm:$0xff]
    %v263 = vld [vmem:[#allocation3 + $0x3b8] sm:$0xff]
    %v264 = vld [vmem:[#allocation3 + $0x3c0] sm:$0xff]
    %v265 = vld [vmem:[#allocation3 + $0x3c8] sm:$0xff]
    %v266 = vld [vmem:[#allocation3 + $0x3d0] sm:$0xff]
    %v267 = vld [vmem:[#allocation3 + $0x3d8] sm:$0xff]
    %v268 = vld [vmem:[#allocation3 + $0x3e0] sm:$0xff]
    %v269 = vld [vmem:[#allocation3 + $0x3e8] sm:$0xff]
    %v270 = vld [vmem:[#allocation3 + $0x3f0] sm:$0xff]
    %v271 = vld [vmem:[#allocation3 + $0x3f8] sm:$0xff]
    %v272 = vld [vmem:[#allocation3 + $0x400] sm:$0xff]
    %v273 = vld [vmem:[#allocation3 + $0x408] sm:$0xff]
    %v274 = vld [vmem:[#allocation3 + $0x410] sm:$0xff]
    %v275 = vld [vmem:[#allocation3 + $0x418] sm:$0xff]
    %v276 = vld [vmem:[#allocation3 + $0x420] sm:$0xff]
    %v277 = vld [vmem:[#allocation3 + $0x428] sm:$0xff]
    %v278 = vld [vmem:[#allocation3 + $0x430] sm:$0xff]
    %v279 = vld [vmem:[#allocation3 + $0x438] sm:$0xff]
    %v280 = vld [vmem:[#allocation3 + $0x440] sm:$0xff]
    %v281 = vld [vmem:[#allocation3 + $0x448] sm:$0xff]
    %v282 = vld [vmem:[#allocation3 + $0x450] sm:$0xff]
    %v283 = vld [vmem:[#allocation3 + $0x458] sm:$0xff]
    %v284 = vld [vmem:[#allocation3 + $0x460] sm:$0xff]
    %v285 = vld [vmem:[#allocation3 + $0x468] sm:$0xff]
    %v286 = vld [vmem:[#allocation3 + $0x470] sm:$0xff]
    %v287 = vld [vmem:[#allocation3 + $0x478] sm:$0xff]
    %v288 = vld [vmem:[#allocation3 + $0x480] sm:$0xff]
    %v289 = vld [vmem:[#allocation3 + $0x488] sm:$0xff]
    %v290 = vld [vmem:[#allocation3 + $0x490] sm:$0xff]
    %v291 = vld [vmem:[#allocation3 + $0x498] sm:$0xff]
    %v292 = vld [vmem:[#allocation3 + $0x4a0] sm:$0xff]
    %v293 = vld [vmem:[#allocation3 + $0x4a8] sm:$0xff]
    %v294 = vld [vmem:[#allocation3 + $0x4b0] sm:$0xff]
    %v295 = vld [vmem:[#allocation3 + $0x4b8] sm:$0xff]
    %v296 = vld [vmem:[#allocation3 + $0x4c0] sm:$0xff]
    %v297 = vld [vmem:[#allocation3 + $0x4c8] sm:$0xff]
    %v298 = vld [vmem:[#allocation3 + $0x4d0] sm:$0xff]
    %v299 = vld [vmem:[#allocation3 + $0x4d8] sm:$0xff]
    %v300 = vld [vmem:[#allocation3 + $0x4e0] sm:$0xff]
    %v301 = vld [vmem:[#allocation3 + $0x4e8] sm:$0xff]
    %v302 = vld [vmem:[#allocation3 + $0x4f0] sm:$0xff]
    %v303 = vld [vmem:[#allocation3 + $0x4f8] sm:$0xff]
    %v304 = vld [vmem:[#allocation3 + $0x500] sm:$0xff]
    %v305 = vld [vmem:[#allocation3 + $0x508] sm:$0xff]
    %v306 = vld [vmem:[#allocation3 + $0x510] sm:$0xff]
    %v307 = vld [vmem:[#allocation3 + $0x518] sm:$0xff]
    %v308 = vld [vmem:[#allocation3 + $0x520] sm:$0xff]
    %v309 = vld [vmem:[#allocation3 + $0x528] sm:$0xff]
    %v310 = vld [vmem:[#allocation3 + $0x530] sm:$0xff]
    %v311 = vld [vmem:[#allocation3 + $0x538] sm:$0xff]
    %v312 = vld [vmem:[#allocation3 + $0x540] sm:$0xff]
    %v313 = vld [vmem:[#allocation3 + $0x548] sm:$0xff]
    %v314 = vld [vmem:[#allocation3 + $0x550] sm:$0xff]
    %v315 = vld [vmem:[#allocation3 + $0x558] sm:$0xff]
    %v316 = vld [vmem:[#allocation3 + $0x560] sm:$0xff]
    %v317 = vld [vmem:[#allocation3 + $0x568] sm:$0xff]
    %v318 = vld [vmem:[#allocation3 + $0x570] sm:$0xff]
    %v319 = vld [vmem:[#allocation3 + $0x578] sm:$0xff]
    %v320 = vld [vmem:[#allocation3 + $0x580] sm:$0xff]
    %v321 = vld [vmem:[#allocation3 + $0x588] sm:$0xff]
    %v322 = vld [vmem:[#allocation3 + $0x590] sm:$0xff]
    %v323 = vld [vmem:[#allocation3 + $0x598] sm:$0xff]
    %v324 = vld [vmem:[#allocation3 + $0x5a0] sm:$0xff]
    %v325 = vld [vmem:[#allocation3 + $0x5a8] sm:$0xff]
    %v326 = vld [vmem:[#allocation3 + $0x5b0] sm:$0xff]
    %v327 = vld [vmem:[#allocation3 + $0x5b8] sm:$0xff]
    %v328 = vld [vmem:[#allocation3 + $0x5c0] sm:$0xff]
    %v329 = vld [vmem:[#allocation3 + $0x5c8] sm:$0xff]
    %v330 = vld [vmem:[#allocation3 + $0x5d0] sm:$0xff]
    %v331 = vld [vmem:[#allocation3 + $0x5d8] sm:$0xff]
    %v332 = vld [vmem:[#allocation3 + $0x5e0] sm:$0xff]
    %v333 = vld [vmem:[#allocation3 + $0x5e8] sm:$0xff]
    %v334 = vld [vmem:[#allocation3 + $0x5f0] sm:$0xff]
    %v335 = vld [vmem:[#allocation3 + $0x5f8] sm:$0xff]
    %v336 = vld [vmem:[#allocation3 + $0x600] sm:$0xff]
    %v337 = vld [vmem:[#allocation3 + $0x608] sm:$0xff]
    %v338 = vld [vmem:[#allocation3 + $0x610] sm:$0xff]
    %v339 = vld [vmem:[#allocation3 + $0x618] sm:$0xff]
    %v340 = vld [vmem:[#allocation3 + $0x620] sm:$0xff]
    %v341 = vld [vmem:[#allocation3 + $0x628] sm:$0xff]
    %v342 = vld [vmem:[#allocation3 + $0x630] sm:$0xff]
    %v343 = vld [vmem:[#allocation3 + $0x638] sm:$0xff]
    %v344 = vld [vmem:[#allocation3 + $0x640] sm:$0xff]
    %v345 = vld [vmem:[#allocation3 + $0x648] sm:$0xff]
    %v346 = vld [vmem:[#allocation3 + $0x650] sm:$0xff]
    %v347 = vld [vmem:[#allocation3 + $0x658] sm:$0xff]
    %v348 = vld [vmem:[#allocation3 + $0x660] sm:$0xff]
    %v349 = vld [vmem:[#allocation3 + $0x668] sm:$0xff]
    %v350 = vld [vmem:[#allocation3 + $0x670] sm:$0xff]
    %v351 = vld [vmem:[#allocation3 + $0x678] sm:$0xff]
    %v352 = vld [vmem:[#allocation3 + $0x680] sm:$0xff]
    %v353 = vld [vmem:[#allocation3 + $0x688] sm:$0xff]
    %v354 = vld [vmem:[#allocation3 + $0x690] sm:$0xff]
    %v355 = vld [vmem:[#allocation3 + $0x698] sm:$0xff]
    %v356 = vld [vmem:[#allocation3 + $0x6a0] sm:$0xff]
    %v357 = vld [vmem:[#allocation3 + $0x6a8] sm:$0xff]
    %v358 = vld [vmem:[#allocation3 + $0x6b0] sm:$0xff]
    %v359 = vld [vmem:[#allocation3 + $0x6b8] sm:$0xff]
    %v360 = vld [vmem:[#allocation3 + $0x6c0] sm:$0xff]
    %v361 = vld [vmem:[#allocation3 + $0x6c8] sm:$0xff]
    %v362 = vld [vmem:[#allocation3 + $0x6d0] sm:$0xff]
    %v363 = vld [vmem:[#allocation3 + $0x6d8] sm:$0xff]
    %v364 = vld [vmem:[#allocation3 + $0x6e0] sm:$0xff]
    %v365 = vld [vmem:[#allocation3 + $0x6e8] sm:$0xff]
    %v366 = vld [vmem:[#allocation3 + $0x6f0] sm:$0xff]
    %v367 = vld [vmem:[#allocation3 + $0x6f8] sm:$0xff]
    %v368 = vld [vmem:[#allocation3 + $0x700] sm:$0xff]
    %v369 = vld [vmem:[#allocation3 + $0x708] sm:$0xff]
    %v370 = vld [vmem:[#allocation3 + $0x710] sm:$0xff]
    %v371 = vld [vmem:[#allocation3 + $0x718] sm:$0xff]
    %v372 = vld [vmem:[#allocation3 + $0x720] sm:$0xff]
    %v373 = vld [vmem:[#allocation3 + $0x728] sm:$0xff]
    %v374 = vld [vmem:[#allocation3 + $0x730] sm:$0xff]
    %v375 = vld [vmem:[#allocation3 + $0x738] sm:$0xff]
    %v376 = vld [vmem:[#allocation3 + $0x740] sm:$0xff]
    %v377 = vld [vmem:[#allocation3 + $0x748] sm:$0xff]
    %v378 = vld [vmem:[#allocation3 + $0x750] sm:$0xff]
    %v379 = vld [vmem:[#allocation3 + $0x758] sm:$0xff]
    %v380 = vld [vmem:[#allocation3 + $0x760] sm:$0xff]
    %v381 = vld [vmem:[#allocation3 + $0x768] sm:$0xff]
    %v382 = vld [vmem:[#allocation3 + $0x770] sm:$0xff]
    %v383 = vld [vmem:[#allocation3 + $0x778] sm:$0xff]
    %v384 = vld [vmem:[#allocation3 + $0x780] sm:$0xff]
    %v385 = vld [vmem:[#allocation3 + $0x788] sm:$0xff]
    %v386 = vld [vmem:[#allocation3 + $0x790] sm:$0xff]
    %v387 = vld [vmem:[#allocation3 + $0x798] sm:$0xff]
    %v388 = vld [vmem:[#allocation3 + $0x7a0] sm:$0xff]
    %v389 = vld [vmem:[#allocation3 + $0x7a8] sm:$0xff]
    %v390 = vld [vmem:[#allocation3 + $0x7b0] sm:$0xff]
    %v391 = vld [vmem:[#allocation3 + $0x7b8] sm:$0xff]
    %v392 = vld [vmem:[#allocation3 + $0x7c0] sm:$0xff]
    %v393 = vld [vmem:[#allocation3 + $0x7c8] sm:$0xff]
    %v394 = vld [vmem:[#allocation3 + $0x7d0] sm:$0xff]
    %v395 = vld [vmem:[#allocation3 + $0x7d8] sm:$0xff]
    %v396 = vld [vmem:[#allocation3 + $0x7e0] sm:$0xff]
    %v397 = vld [vmem:[#allocation3 + $0x7e8] sm:$0xff]
    %v398 = vld [vmem:[#allocation3 + $0x7f0] sm:$0xff]
    %v399 = vld [vmem:[#allocation3 + $0x7f8] sm:$0xff]
    %v400 = vld [vmem:[#allocation3 + $0x800] sm:$0xff]
    %v401 = vld [vmem:[#allocation3 + $0x808] sm:$0xff]
    %v402 = vld [vmem:[#allocation3 + $0x810] sm:$0xff]
    %v403 = vld [vmem:[#allocation3 + $0x818] sm:$0xff]
    %v404 = vld [vmem:[#allocation3 + $0x820] sm:$0xff]
    %v405 = vld [vmem:[#allocation3 + $0x828] sm:$0xff]
    %v406 = vld [vmem:[#allocation3 + $0x830] sm:$0xff]
    %v407 = vld [vmem:[#allocation3 + $0x838] sm:$0xff]
    %v408 = vld [vmem:[#allocation3 + $0x840] sm:$0xff]
    %v409 = vld [vmem:[#allocation3 + $0x848] sm:$0xff]
    %v410 = vld [vmem:[#allocation3 + $0x850] sm:$0xff]
    %v411 = vld [vmem:[#allocation3 + $0x858] sm:$0xff]
    %v412 = vld [vmem:[#allocation3 + $0x860] sm:$0xff]
    %v413 = vld [vmem:[#allocation3 + $0x868] sm:$0xff]
    %v414 = vld [vmem:[#allocation3 + $0x870] sm:$0xff]
    %v415 = vld [vmem:[#allocation3 + $0x878] sm:$0xff]
    %v416 = vld [vmem:[#allocation3 + $0x880] sm:$0xff]
    %v417 = vld [vmem:[#allocation3 + $0x888] sm:$0xff]
    %v418 = vld [vmem:[#allocation3 + $0x890] sm:$0xff]
    %v419 = vld [vmem:[#allocation3 + $0x898] sm:$0xff]
    %v420 = vld [vmem:[#allocation3 + $0x8a0] sm:$0xff]
    %v421 = vld [vmem:[#allocation3 + $0x8a8] sm:$0xff]
    %v422 = vld [vmem:[#allocation3 + $0x8b0] sm:$0xff]
    %v423 = vld [vmem:[#allocation3 + $0x8b8] sm:$0xff]
    %v424 = vld [vmem:[#allocation3 + $0x8c0] sm:$0xff]
    %v425 = vld [vmem:[#allocation3 + $0x8c8] sm:$0xff]
    %v426 = vld [vmem:[#allocation3 + $0x8d0] sm:$0xff]
    %v427 = vld [vmem:[#allocation3 + $0x8d8] sm:$0xff]
    %v428 = vld [vmem:[#allocation3 + $0x8e0] sm:$0xff]
    %v429 = vld [vmem:[#allocation3 + $0x8e8] sm:$0xff]
    %v430 = vld [vmem:[#allocation3 + $0x8f0] sm:$0xff]
    %v431 = vld [vmem:[#allocation3 + $0x8f8] sm:$0xff]
    %v432 = vld [vmem:[#allocation3 + $0x900] sm:$0xff]
    %v433 = vld [vmem:[#allocation3 + $0x908] sm:$0xff]
    %v434 = vld [vmem:[#allocation3 + $0x910] sm:$0xff]
    %v435 = vld [vmem:[#allocation3 + $0x918] sm:$0xff]
    %v436 = vld [vmem:[#allocation3 + $0x920] sm:$0xff]
    %v437 = vld [vmem:[#allocation3 + $0x928] sm:$0xff]
    %v438 = vld [vmem:[#allocation3 + $0x930] sm:$0xff]
    %v439 = vld [vmem:[#allocation3 + $0x938] sm:$0xff]
    %v440 = vld [vmem:[#allocation3 + $0x940] sm:$0xff]
    %v441 = vld [vmem:[#allocation3 + $0x948] sm:$0xff]
    %v442 = vld [vmem:[#allocation3 + $0x950] sm:$0xff]
    %v443 = vld [vmem:[#allocation3 + $0x958] sm:$0xff]
    %v444 = vld [vmem:[#allocation3 + $0x960] sm:$0xff]
    %v445 = vld [vmem:[#allocation3 + $0x968] sm:$0xff]
    %v446 = vld [vmem:[#allocation3 + $0x970] sm:$0xff]
    %v447 = vld [vmem:[#allocation3 + $0x978] sm:$0xff]
    %v448 = vld [vmem:[#allocation3 + $0x980] sm:$0xff]
    %v449 = vld [vmem:[#allocation3 + $0x988] sm:$0xff]
    %v450 = vld [vmem:[#allocation3 + $0x990] sm:$0xff]
    %v451 = vld [vmem:[#allocation3 + $0x998] sm:$0xff]
    %v452 = vld [vmem:[#allocation3 + $0x9a0] sm:$0xff]
    %v453 = vld [vmem:[#allocation3 + $0x9a8] sm:$0xff]
    %v454 = vld [vmem:[#allocation3 + $0x9b0] sm:$0xff]
    %v455 = vld [vmem:[#allocation3 + $0x9b8] sm:$0xff]
    %v456 = vld [vmem:[#allocation3 + $0x9c0] sm:$0xff]
    %v457 = vld [vmem:[#allocation3 + $0x9c8] sm:$0xff]
    %v458 = vld [vmem:[#allocation3 + $0x9d0] sm:$0xff]
    %v459 = vld [vmem:[#allocation3 + $0x9d8] sm:$0xff]
    %v460 = vld [vmem:[#allocation3 + $0x9e0] sm:$0xff]
    %v461 = vld [vmem:[#allocation3 + $0x9e8] sm:$0xff]
    %v462 = vld [vmem:[#allocation3 + $0x9f0] sm:$0xff]
    %v463 = vld [vmem:[#allocation3 + $0x9f8] sm:$0xff]
    %v464 = vld [vmem:[#allocation3 + $0xa00] sm:$0xff]
    %v465 = vld [vmem:[#allocation3 + $0xa08] sm:$0xff]
    %v466 = vld [vmem:[#allocation3 + $0xa10] sm:$0xff]
    %v467 = vld [vmem:[#allocation3 + $0xa18] sm:$0xff]
    %v468 = vld [vmem:[#allocation3 + $0xa20] sm:$0xff]
    %v469 = vld [vmem:[#allocation3 + $0xa28] sm:$0xff]
    %v470 = vld [vmem:[#allocation3 + $0xa30] sm:$0xff]
    %v471 = vld [vmem:[#allocation3 + $0xa38] sm:$0xff]
    %v472 = vld [vmem:[#allocation3 + $0xa40] sm:$0xff]
    %v473 = vld [vmem:[#allocation3 + $0xa48] sm:$0xff]
    %v474 = vld [vmem:[#allocation3 + $0xa50] sm:$0xff]
    %v475 = vld [vmem:[#allocation3 + $0xa58] sm:$0xff]
    %v476 = vld [vmem:[#allocation3 + $0xa60] sm:$0xff]
    %v477 = vld [vmem:[#allocation3 + $0xa68] sm:$0xff]
    %v478 = vld [vmem:[#allocation3 + $0xa70] sm:$0xff]
    %v479 = vld [vmem:[#allocation3 + $0xa78] sm:$0xff]
    %v480 = vld [vmem:[#allocation3 + $0xa80] sm:$0xff]
    %v481 = vld [vmem:[#allocation3 + $0xa88] sm:$0xff]
    %v482 = vld [vmem:[#allocation3 + $0xa90] sm:$0xff]
    %v483 = vld [vmem:[#allocation3 + $0xa98] sm:$0xff]
    %v484 = vld [vmem:[#allocation3 + $0xaa0] sm:$0xff]
    %v485 = vld [vmem:[#allocation3 + $0xaa8] sm:$0xff]
    %v486 = vld [vmem:[#allocation3 + $0xab0] sm:$0xff]
    %v487 = vld [vmem:[#allocation3 + $0xab8] sm:$0xff]
    %v488 = vld [vmem:[#allocation3 + $0xac0] sm:$0xff]
    %v489 = vld [vmem:[#allocation3 + $0xac8] sm:$0xff]
    %v490 = vld [vmem:[#allocation3 + $0xad0] sm:$0xff]
    %v491 = vld [vmem:[#allocation3 + $0xad8] sm:$0xff]
    %v492 = vld [vmem:[#allocation3 + $0xae0] sm:$0xff]
    %v493 = vld [vmem:[#allocation3 + $0xae8] sm:$0xff]
    %v494 = vld [vmem:[#allocation3 + $0xaf0] sm:$0xff]
    %v495 = vld [vmem:[#allocation3 + $0xaf8] sm:$0xff]
    %v496 = vld [vmem:[#allocation3 + $0xb00] sm:$0xff]
    %v497 = vld [vmem:[#allocation3 + $0xb08] sm:$0xff]
    %v498 = vld [vmem:[#allocation3 + $0xb10] sm:$0xff]
    %v499 = vld [vmem:[#allocation3 + $0xb18] sm:$0xff]
    %v500 = vld [vmem:[#allocation3 + $0xb20] sm:$0xff]
    %v501 = vld [vmem:[#allocation3 + $0xb28] sm:$0xff]
    %v502 = vld [vmem:[#allocation3 + $0xb30] sm:$0xff]
    %v503 = vld [vmem:[#allocation3 + $0xb38] sm:$0xff]
    %v504 = vld [vmem:[#allocation3 + $0xb40] sm:$0xff]
    %v505 = vld [vmem:[#allocation3 + $0xb48] sm:$0xff]
    %v506 = vld [vmem:[#allocation3 + $0xb50] sm:$0xff]
    %v507 = vld [vmem:[#allocation3 + $0xb58] sm:$0xff]
    %v508 = vld [vmem:[#allocation3 + $0xb60] sm:$0xff]
    %v509 = vld [vmem:[#allocation3 + $0xb68] sm:$0xff]
    %v510 = vld [vmem:[#allocation3 + $0xb70] sm:$0xff]
    %v511 = vld [vmem:[#allocation3 + $0xb78] sm:$0xff]
    %v512 = vld [vmem:[#allocation3 + $0xb80] sm:$0xff]
    %v513 = vld [vmem:[#allocation3 + $0xb88] sm:$0xff]
    %v514 = vld [vmem:[#allocation3 + $0xb90] sm:$0xff]
    %v515 = vld [vmem:[#allocation3 + $0xb98] sm:$0xff]
    %v516 = vld [vmem:[#allocation3 + $0xba0] sm:$0xff]
    %v517 = vld [vmem:[#allocation3 + $0xba8] sm:$0xff]
    %v518 = vld [vmem:[#allocation3 + $0xbb0] sm:$0xff]
    %v519 = vld [vmem:[#allocation3 + $0xbb8] sm:$0xff]
    %v520 = vld [vmem:[#allocation3 + $0xbc0] sm:$0xff]
    %v521 = vld [vmem:[#allocation3 + $0xbc8] sm:$0xff]
    %v522 = vld [vmem:[#allocation3 + $0xbd0] sm:$0xff]
    %v523 = vld [vmem:[#allocation3 + $0xbd8] sm:$0xff]
    %v524 = vld [vmem:[#allocation3 + $0xbe0] sm:$0xff]
    %v525 = vld [vmem:[#allocation3 + $0xbe8] sm:$0xff]
    %v526 = vld [vmem:[#allocation3 + $0xbf0] sm:$0xff]
    %v527 = vld [vmem:[#allocation3 + $0xbf8] sm:$0xff]
    %v528 = vld [vmem:[#allocation3 + $0xc00] sm:$0xff]
    %v529 = vld [vmem:[#allocation3 + $0xc08] sm:$0xff]
    %v530 = vld [vmem:[#allocation3 + $0xc10] sm:$0xff]
    %v531 = vld [vmem:[#allocation3 + $0xc18] sm:$0xff]
    %v532 = vld [vmem:[#allocation3 + $0xc20] sm:$0xff]
    %v533 = vld [vmem:[#allocation3 + $0xc28] sm:$0xff]
    %v534 = vld [vmem:[#allocation3 + $0xc30] sm:$0xff]
    %v535 = vld [vmem:[#allocation3 + $0xc38] sm:$0xff]
    %v536 = vld [vmem:[#allocation5] sm:$0xff]
    %v538 = vperm.slane %v536, 0
    %v539 = vperm.slane %v536, 1
    %v540 = vperm.slane %v536, 2
    %v541 = vperm.slane %v536, 3
    %v542 = vperm.slane %v536, 4
    %v543 = vperm.slane %v536, 5
    %v544 = vperm.slane %v536, 6
    %v545 = vperm.slane %v536, 7
    %v946 = vunpack.c.l.b16 %v144
    %v947 = vunpack.c.h.b16 %v144
    %v948 = vunpack.c.l.b16 %v145
    %v949 = vunpack.c.h.b16 %v145
    %v950 = vunpack.c.l.b16 %v146
    %v951 = vunpack.c.h.b16 %v146
    %v952 = vunpack.c.l.b16 %v147
    %v953 = vunpack.c.h.b16 %v147
    %v954 = vunpack.c.l.b16 %v148
    %v955 = vunpack.c.h.b16 %v148
    %v956 = vunpack.c.l.b16 %v149
    %v957 = vunpack.c.h.b16 %v149
    %v958 = vunpack.c.l.b16 %v150
    %v959 = vunpack.c.h.b16 %v150
    %v960 = vunpack.c.l.b16 %v151
    %v961 = vunpack.c.h.b16 %v151
    %v962 = vunpack.c.l.b16 %v152
    %v963 = vunpack.c.h.b16 %v152
    %v964 = vunpack.c.l.b16 %v153
    %v965 = vunpack.c.h.b16 %v153
    %v966 = vunpack.c.l.b16 %v154
    %v967 = vunpack.c.h.b16 %v154
    %v968 = vunpack.c.l.b16 %v155
    %v969 = vunpack.c.h.b16 %v155
    %v970 = vunpack.c.l.b16 %v156
    %v971 = vunpack.c.h.b16 %v156
    %v972 = vunpack.c.l.b16 %v157
    %v973 = vunpack.c.h.b16 %v157
    %v974 = vunpack.c.l.b16 %v158
    %v975 = vunpack.c.h.b16 %v158
    %v976 = vunpack.c.l.b16 %v159
    %v977 = vunpack.c.h.b16 %v159
    %v978 = vunpack.c.l.b16 %v160
    %v979 = vunpack.c.h.b16 %v160
    %v980 = vunpack.c.l.b16 %v161
    %v981 = vunpack.c.h.b16 %v161
    %v982 = vunpack.c.l.b16 %v162
    %v983 = vunpack.c.h.b16 %v162
    %v984 = vunpack.c.l.b16 %v163
    %v985 = vunpack.c.h.b16 %v163
    %v986 = vunpack.c.l.b16 %v164
    %v987 = vunpack.c.h.b16 %v164
    %v988 = vunpack.c.l.b16 %v165
    %v989 = vunpack.c.h.b16 %v165
    %v990 = vunpack.c.l.b16 %v166
    %v991 = vunpack.c.h.b16 %v166
    %v992 = vunpack.c.l.b16 %v167
    %v993 = vunpack.c.h.b16 %v167
    %v994 = vunpack.c.l.b16 %v168
    %v995 = vunpack.c.h.b16 %v168
    %v996 = vunpack.c.l.b16 %v169
    %v997 = vunpack.c.h.b16 %v169
    %v998 = vunpack.c.l.b16 %v170
    %v999 = vunpack.c.h.b16 %v170
    %v1000 = vunpack.c.l.b16 %v171
    %v1001 = vunpack.c.h.b16 %v171
    %v1002 = vunpack.c.l.b16 %v172
    %v1003 = vunpack.c.h.b16 %v172
    %v1004 = vunpack.c.l.b16 %v173
    %v1005 = vunpack.c.h.b16 %v173
    %v1006 = vunpack.c.l.b16 %v174
    %v1007 = vunpack.c.h.b16 %v174
    %v1008 = vunpack.c.l.b16 %v175
    %v1009 = vunpack.c.h.b16 %v175
    %v1010 = vunpack.c.l.b16 %v176
    %v1011 = vunpack.c.h.b16 %v176
    %v1012 = vunpack.c.l.b16 %v177
    %v1013 = vunpack.c.h.b16 %v177
    %v1014 = vunpack.c.l.b16 %v178
    %v1015 = vunpack.c.h.b16 %v178
    %v1016 = vunpack.c.l.b16 %v179
    %v1017 = vunpack.c.h.b16 %v179
    %v1018 = vunpack.c.l.b16 %v180
    %v1019 = vunpack.c.h.b16 %v180
    %v1020 = vunpack.c.l.b16 %v181
    %v1021 = vunpack.c.h.b16 %v181
    %v1022 = vunpack.c.l.b16 %v182
    %v1023 = vunpack.c.h.b16 %v182
    %v1024 = vunpack.c.l.b16 %v183
    %v1025 = vunpack.c.h.b16 %v183
    %v1026 = vunpack.c.l.b16 %v184
    %v1027 = vunpack.c.h.b16 %v184
    %v1028 = vunpack.c.l.b16 %v185
    %v1029 = vunpack.c.h.b16 %v185
    %v1030 = vunpack.c.l.b16 %v186
    %v1031 = vunpack.c.h.b16 %v186
    %v1032 = vunpack.c.l.b16 %v187
    %v1033 = vunpack.c.h.b16 %v187
    %v1034 = vunpack.c.l.b16 %v188
    %v1035 = vunpack.c.h.b16 %v188
    %v1036 = vunpack.c.l.b16 %v189
    %v1037 = vunpack.c.h.b16 %v189
    %v1038 = vunpack.c.l.b16 %v190
    %v1039 = vunpack.c.h.b16 %v190
    %v1040 = vunpack.c.l.b16 %v191
    %v1041 = vunpack.c.h.b16 %v191
    %v1042 = vunpack.c.l.b16 %v192
    %v1043 = vunpack.c.h.b16 %v192
    %v1044 = vunpack.c.l.b16 %v193
    %v1045 = vunpack.c.h.b16 %v193
    %v1046 = vunpack.c.l.b16 %v194
    %v1047 = vunpack.c.h.b16 %v194
    %v1048 = vunpack.c.l.b16 %v195
    %v1049 = vunpack.c.h.b16 %v195
    %v1050 = vunpack.c.l.b16 %v196
    %v1051 = vunpack.c.h.b16 %v196
    %v1052 = vunpack.c.l.b16 %v197
    %v1053 = vunpack.c.h.b16 %v197
    %v1054 = vunpack.c.l.b16 %v198
    %v1055 = vunpack.c.h.b16 %v198
    %v1056 = vunpack.c.l.b16 %v199
    %v1057 = vunpack.c.h.b16 %v199
    %v1058 = vunpack.c.l.b16 %v200
    %v1059 = vunpack.c.h.b16 %v200
    %v1060 = vunpack.c.l.b16 %v201
    %v1061 = vunpack.c.h.b16 %v201
    %v1062 = vunpack.c.l.b16 %v202
    %v1063 = vunpack.c.h.b16 %v202
    %v1064 = vunpack.c.l.b16 %v203
    %v1065 = vunpack.c.h.b16 %v203
    %v1066 = vunpack.c.l.b16 %v204
    %v1067 = vunpack.c.h.b16 %v204
    %v1068 = vunpack.c.l.b16 %v205
    %v1069 = vunpack.c.h.b16 %v205
    %v1070 = vunpack.c.l.b16 %v206
    %v1071 = vunpack.c.h.b16 %v206
    %v1072 = vunpack.c.l.b16 %v207
    %v1073 = vunpack.c.h.b16 %v207
    %v1074 = vunpack.c.l.b16 %v208
    %v1075 = vunpack.c.h.b16 %v208
    %v1076 = vunpack.c.l.b16 %v209
    %v1077 = vunpack.c.h.b16 %v209
    %v1078 = vunpack.c.l.b16 %v210
    %v1079 = vunpack.c.h.b16 %v210
    %v1080 = vunpack.c.l.b16 %v211
    %v1081 = vunpack.c.h.b16 %v211
    %v1082 = vunpack.c.l.b16 %v212
    %v1083 = vunpack.c.h.b16 %v212
    %v1084 = vunpack.c.l.b16 %v213
    %v1085 = vunpack.c.h.b16 %v213
    %v1086 = vunpack.c.l.b16 %v214
    %v1087 = vunpack.c.h.b16 %v214
    %v1088 = vunpack.c.l.b16 %v215
    %v1089 = vunpack.c.h.b16 %v215
    %v1090 = vunpack.c.l.b16 %v216
    %v1091 = vunpack.c.h.b16 %v216
    %v1092 = vunpack.c.l.b16 %v217
    %v1093 = vunpack.c.h.b16 %v217
    %v1094 = vunpack.c.l.b16 %v218
    %v1095 = vunpack.c.h.b16 %v218
    %v1096 = vunpack.c.l.b16 %v219
    %v1097 = vunpack.c.h.b16 %v219
    %v1098 = vunpack.c.l.b16 %v220
    %v1099 = vunpack.c.h.b16 %v220
    %v1100 = vunpack.c.l.b16 %v221
    %v1101 = vunpack.c.h.b16 %v221
    %v1102 = vunpack.c.l.b16 %v222
    %v1103 = vunpack.c.h.b16 %v222
    %v1104 = vunpack.c.l.b16 %v223
    %v1105 = vunpack.c.h.b16 %v223
    %v1106 = vunpack.c.l.b16 %v224
    %v1107 = vunpack.c.h.b16 %v224
    %v1108 = vunpack.c.l.b16 %v225
    %v1109 = vunpack.c.h.b16 %v225
    %v1110 = vunpack.c.l.b16 %v226
    %v1111 = vunpack.c.h.b16 %v226
    %v1112 = vunpack.c.l.b16 %v227
    %v1113 = vunpack.c.h.b16 %v227
    %v1114 = vunpack.c.l.b16 %v228
    %v1115 = vunpack.c.h.b16 %v228
    %v1116 = vunpack.c.l.b16 %v229
    %v1117 = vunpack.c.h.b16 %v229
    %v1118 = vunpack.c.l.b16 %v230
    %v1119 = vunpack.c.h.b16 %v230
    %v1120 = vunpack.c.l.b16 %v231
    %v1121 = vunpack.c.h.b16 %v231
    %v1122 = vunpack.c.l.b16 %v232
    %v1123 = vunpack.c.h.b16 %v232
    %v1124 = vunpack.c.l.b16 %v233
    %v1125 = vunpack.c.h.b16 %v233
    %v1126 = vunpack.c.l.b16 %v234
    %v1127 = vunpack.c.h.b16 %v234
    %v1128 = vunpack.c.l.b16 %v235
    %v1129 = vunpack.c.h.b16 %v235
    %v1130 = vunpack.c.l.b16 %v236
    %v1131 = vunpack.c.h.b16 %v236
    %v1132 = vunpack.c.l.b16 %v237
    %v1133 = vunpack.c.h.b16 %v237
    %v1134 = vunpack.c.l.b16 %v238
    %v1135 = vunpack.c.h.b16 %v238
    %v1136 = vunpack.c.l.b16 %v239
    %v1137 = vunpack.c.h.b16 %v239
    %v1138 = vunpack.c.l.b16 %v240
    %v1139 = vunpack.c.h.b16 %v240
    %v1140 = vunpack.c.l.b16 %v241
    %v1141 = vunpack.c.h.b16 %v241
    %v1142 = vunpack.c.l.b16 %v242
    %v1143 = vunpack.c.h.b16 %v242
    %v1144 = vunpack.c.l.b16 %v243
    %v1145 = vunpack.c.h.b16 %v243
    %v1146 = vunpack.c.l.b16 %v244
    %v1147 = vunpack.c.h.b16 %v244
    %v1148 = vunpack.c.l.b16 %v245
    %v1149 = vunpack.c.h.b16 %v245
    %v1150 = vunpack.c.l.b16 %v246
    %v1151 = vunpack.c.h.b16 %v246
    %v1152 = vunpack.c.l.b16 %v247
    %v1153 = vunpack.c.h.b16 %v247
    %v1154 = vunpack.c.l.b16 %v248
    %v1155 = vunpack.c.h.b16 %v248
    %v1156 = vunpack.c.l.b16 %v249
    %v1157 = vunpack.c.h.b16 %v249
    %v1158 = vunpack.c.l.b16 %v250
    %v1159 = vunpack.c.h.b16 %v250
    %v1160 = vunpack.c.l.b16 %v251
    %v1161 = vunpack.c.h.b16 %v251
    %v1162 = vunpack.c.l.b16 %v252
    %v1163 = vunpack.c.h.b16 %v252
    %v1164 = vunpack.c.l.b16 %v253
    %v1165 = vunpack.c.h.b16 %v253
    %v1166 = vunpack.c.l.b16 %v254
    %v1167 = vunpack.c.h.b16 %v254
    %v1168 = vunpack.c.l.b16 %v255
    %v1169 = vunpack.c.h.b16 %v255
    %v1170 = vunpack.c.l.b16 %v256
    %v1171 = vunpack.c.h.b16 %v256
    %v1172 = vunpack.c.l.b16 %v257
    %v1173 = vunpack.c.h.b16 %v257
    %v1174 = vunpack.c.l.b16 %v258
    %v1175 = vunpack.c.h.b16 %v258
    %v1176 = vunpack.c.l.b16 %v259
    %v1177 = vunpack.c.h.b16 %v259
    %v1178 = vunpack.c.l.b16 %v260
    %v1179 = vunpack.c.h.b16 %v260
    %v1180 = vunpack.c.l.b16 %v261
    %v1181 = vunpack.c.h.b16 %v261
    %v1182 = vunpack.c.l.b16 %v262
    %v1183 = vunpack.c.h.b16 %v262
    %v1184 = vunpack.c.l.b16 %v263
    %v1185 = vunpack.c.h.b16 %v263
    %v1186 = vunpack.c.l.b16 %v264
    %v1187 = vunpack.c.h.b16 %v264
    %v1188 = vunpack.c.l.b16 %v265
    %v1189 = vunpack.c.h.b16 %v265
    %v1190 = vunpack.c.l.b16 %v266
    %v1191 = vunpack.c.h.b16 %v266
    %v1192 = vunpack.c.l.b16 %v267
    %v1193 = vunpack.c.h.b16 %v267
    %v1194 = vunpack.c.l.b16 %v268
    %v1195 = vunpack.c.h.b16 %v268
    %v1196 = vunpack.c.l.b16 %v269
    %v1197 = vunpack.c.h.b16 %v269
    %v1198 = vunpack.c.l.b16 %v270
    %v1199 = vunpack.c.h.b16 %v270
    %v1200 = vunpack.c.l.b16 %v271
    %v1201 = vunpack.c.h.b16 %v271
    %v1202 = vunpack.c.l.b16 %v272
    %v1203 = vunpack.c.h.b16 %v272
    %v1204 = vunpack.c.l.b16 %v273
    %v1205 = vunpack.c.h.b16 %v273
    %v1206 = vunpack.c.l.b16 %v274
    %v1207 = vunpack.c.h.b16 %v274
    %v1208 = vunpack.c.l.b16 %v275
    %v1209 = vunpack.c.h.b16 %v275
    %v1210 = vunpack.c.l.b16 %v276
    %v1211 = vunpack.c.h.b16 %v276
    %v1212 = vunpack.c.l.b16 %v277
    %v1213 = vunpack.c.h.b16 %v277
    %v1214 = vunpack.c.l.b16 %v278
    %v1215 = vunpack.c.h.b16 %v278
    %v1216 = vunpack.c.l.b16 %v279
    %v1217 = vunpack.c.h.b16 %v279
    %v1218 = vunpack.c.l.b16 %v280
    %v1219 = vunpack.c.h.b16 %v280
    %v1220 = vunpack.c.l.b16 %v281
    %v1221 = vunpack.c.h.b16 %v281
    %v1222 = vunpack.c.l.b16 %v282
    %v1223 = vunpack.c.h.b16 %v282
    %v1224 = vunpack.c.l.b16 %v283
    %v1225 = vunpack.c.h.b16 %v283
    %v1226 = vunpack.c.l.b16 %v284
    %v1227 = vunpack.c.h.b16 %v284
    %v1228 = vunpack.c.l.b16 %v285
    %v1229 = vunpack.c.h.b16 %v285
    %v1230 = vunpack.c.l.b16 %v286
    %v1231 = vunpack.c.h.b16 %v286
    %v1232 = vunpack.c.l.b16 %v287
    %v1233 = vunpack.c.h.b16 %v287
    %v1234 = vunpack.c.l.b16 %v288
    %v1235 = vunpack.c.h.b16 %v288
    %v1236 = vunpack.c.l.b16 %v289
    %v1237 = vunpack.c.h.b16 %v289
    %v1238 = vunpack.c.l.b16 %v290
    %v1239 = vunpack.c.h.b16 %v290
    %v1240 = vunpack.c.l.b16 %v291
    %v1241 = vunpack.c.h.b16 %v291
    %v1242 = vunpack.c.l.b16 %v292
    %v1243 = vunpack.c.h.b16 %v292
    %v1244 = vunpack.c.l.b16 %v293
    %v1245 = vunpack.c.h.b16 %v293
    %v1246 = vunpack.c.l.b16 %v294
    %v1247 = vunpack.c.h.b16 %v294
    %v1248 = vunpack.c.l.b16 %v295
    %v1249 = vunpack.c.h.b16 %v295
    %v1250 = vunpack.c.l.b16 %v296
    %v1251 = vunpack.c.h.b16 %v296
    %v1252 = vunpack.c.l.b16 %v297
    %v1253 = vunpack.c.h.b16 %v297
    %v1254 = vunpack.c.l.b16 %v298
    %v1255 = vunpack.c.h.b16 %v298
    %v1256 = vunpack.c.l.b16 %v299
    %v1257 = vunpack.c.h.b16 %v299
    %v1258 = vunpack.c.l.b16 %v300
    %v1259 = vunpack.c.h.b16 %v300
    %v1260 = vunpack.c.l.b16 %v301
    %v1261 = vunpack.c.h.b16 %v301
    %v1262 = vunpack.c.l.b16 %v302
    %v1263 = vunpack.c.h.b16 %v302
    %v1264 = vunpack.c.l.b16 %v303
    %v1265 = vunpack.c.h.b16 %v303
    %v1266 = vunpack.c.l.b16 %v304
    %v1267 = vunpack.c.h.b16 %v304
    %v1268 = vunpack.c.l.b16 %v305
    %v1269 = vunpack.c.h.b16 %v305
    %v1270 = vunpack.c.l.b16 %v306
    %v1271 = vunpack.c.h.b16 %v306
    %v1272 = vunpack.c.l.b16 %v307
    %v1273 = vunpack.c.h.b16 %v307
    %v1274 = vunpack.c.l.b16 %v308
    %v1275 = vunpack.c.h.b16 %v308
    %v1276 = vunpack.c.l.b16 %v309
    %v1277 = vunpack.c.h.b16 %v309
    %v1278 = vunpack.c.l.b16 %v310
    %v1279 = vunpack.c.h.b16 %v310
    %v1280 = vunpack.c.l.b16 %v311
    %v1281 = vunpack.c.h.b16 %v311
    %v1282 = vunpack.c.l.b16 %v312
    %v1283 = vunpack.c.h.b16 %v312
    %v1284 = vunpack.c.l.b16 %v313
    %v1285 = vunpack.c.h.b16 %v313
    %v1286 = vunpack.c.l.b16 %v314
    %v1287 = vunpack.c.h.b16 %v314
    %v1288 = vunpack.c.l.b16 %v315
    %v1289 = vunpack.c.h.b16 %v315
    %v1290 = vunpack.c.l.b16 %v316
    %v1291 = vunpack.c.h.b16 %v316
    %v1292 = vunpack.c.l.b16 %v317
    %v1293 = vunpack.c.h.b16 %v317
    %v1294 = vunpack.c.l.b16 %v318
    %v1295 = vunpack.c.h.b16 %v318
    %v1296 = vunpack.c.l.b16 %v319
    %v1297 = vunpack.c.h.b16 %v319
    %v1298 = vunpack.c.l.b16 %v320
    %v1299 = vunpack.c.h.b16 %v320
    %v1300 = vunpack.c.l.b16 %v321
    %v1301 = vunpack.c.h.b16 %v321
    %v1302 = vunpack.c.l.b16 %v322
    %v1303 = vunpack.c.h.b16 %v322
    %v1304 = vunpack.c.l.b16 %v323
    %v1305 = vunpack.c.h.b16 %v323
    %v1306 = vunpack.c.l.b16 %v324
    %v1307 = vunpack.c.h.b16 %v324
    %v1308 = vunpack.c.l.b16 %v325
    %v1309 = vunpack.c.h.b16 %v325
    %v1310 = vunpack.c.l.b16 %v326
    %v1311 = vunpack.c.h.b16 %v326
    %v1312 = vunpack.c.l.b16 %v327
    %v1313 = vunpack.c.h.b16 %v327
    %v1314 = vunpack.c.l.b16 %v328
    %v1315 = vunpack.c.h.b16 %v328
    %v1316 = vunpack.c.l.b16 %v329
    %v1317 = vunpack.c.h.b16 %v329
    %v1318 = vunpack.c.l.b16 %v330
    %v1319 = vunpack.c.h.b16 %v330
    %v1320 = vunpack.c.l.b16 %v331
    %v1321 = vunpack.c.h.b16 %v331
    %v1322 = vunpack.c.l.b16 %v332
    %v1323 = vunpack.c.h.b16 %v332
    %v1324 = vunpack.c.l.b16 %v333
    %v1325 = vunpack.c.h.b16 %v333
    %v1326 = vunpack.c.l.b16 %v334
    %v1327 = vunpack.c.h.b16 %v334
    %v1328 = vunpack.c.l.b16 %v335
    %v1329 = vunpack.c.h.b16 %v335
    %v1330 = vunpack.c.l.b16 %v336
    %v1331 = vunpack.c.h.b16 %v336
    %v1332 = vunpack.c.l.b16 %v337
    %v1333 = vunpack.c.h.b16 %v337
    %v1334 = vunpack.c.l.b16 %v338
    %v1335 = vunpack.c.h.b16 %v338
    %v1336 = vunpack.c.l.b16 %v339
    %v1337 = vunpack.c.h.b16 %v339
    %v1338 = vunpack.c.l.b16 %v340
    %v1339 = vunpack.c.h.b16 %v340
    %v1340 = vunpack.c.l.b16 %v341
    %v1341 = vunpack.c.h.b16 %v341
    %v1342 = vunpack.c.l.b16 %v342
    %v1343 = vunpack.c.h.b16 %v342
    %v1344 = vunpack.c.l.b16 %v343
    %v1345 = vunpack.c.h.b16 %v343
    %v1346 = vunpack.c.l.b16 %v344
    %v1347 = vunpack.c.h.b16 %v344
    %v1348 = vunpack.c.l.b16 %v345
    %v1349 = vunpack.c.h.b16 %v345
    %v1350 = vunpack.c.l.b16 %v346
    %v1351 = vunpack.c.h.b16 %v346
    %v1352 = vunpack.c.l.b16 %v347
    %v1353 = vunpack.c.h.b16 %v347
    %v1354 = vunpack.c.l.b16 %v348
    %v1355 = vunpack.c.h.b16 %v348
    %v1356 = vunpack.c.l.b16 %v349
    %v1357 = vunpack.c.h.b16 %v349
    %v1358 = vunpack.c.l.b16 %v350
    %v1359 = vunpack.c.h.b16 %v350
    %v1360 = vunpack.c.l.b16 %v351
    %v1361 = vunpack.c.h.b16 %v351
    %v1362 = vunpack.c.l.b16 %v352
    %v1363 = vunpack.c.h.b16 %v352
    %v1364 = vunpack.c.l.b16 %v353
    %v1365 = vunpack.c.h.b16 %v353
    %v1366 = vunpack.c.l.b16 %v354
    %v1367 = vunpack.c.h.b16 %v354
    %v1368 = vunpack.c.l.b16 %v355
    %v1369 = vunpack.c.h.b16 %v355
    %v1370 = vunpack.c.l.b16 %v356
    %v1371 = vunpack.c.h.b16 %v356
    %v1372 = vunpack.c.l.b16 %v357
    %v1373 = vunpack.c.h.b16 %v357
    %v1374 = vunpack.c.l.b16 %v358
    %v1375 = vunpack.c.h.b16 %v358
    %v1376 = vunpack.c.l.b16 %v359
    %v1377 = vunpack.c.h.b16 %v359
    %v1378 = vunpack.c.l.b16 %v360
    %v1379 = vunpack.c.h.b16 %v360
    %v1380 = vunpack.c.l.b16 %v361
    %v1381 = vunpack.c.h.b16 %v361
    %v1382 = vunpack.c.l.b16 %v362
    %v1383 = vunpack.c.h.b16 %v362
    %v1384 = vunpack.c.l.b16 %v363
    %v1385 = vunpack.c.h.b16 %v363
    %v1386 = vunpack.c.l.b16 %v364
    %v1387 = vunpack.c.h.b16 %v364
    %v1388 = vunpack.c.l.b16 %v365
    %v1389 = vunpack.c.h.b16 %v365
    %v1390 = vunpack.c.l.b16 %v366
    %v1391 = vunpack.c.h.b16 %v366
    %v1392 = vunpack.c.l.b16 %v367
    %v1393 = vunpack.c.h.b16 %v367
    %v1394 = vunpack.c.l.b16 %v368
    %v1395 = vunpack.c.h.b16 %v368
    %v1396 = vunpack.c.l.b16 %v369
    %v1397 = vunpack.c.h.b16 %v369
    %v1398 = vunpack.c.l.b16 %v370
    %v1399 = vunpack.c.h.b16 %v370
    %v1400 = vunpack.c.l.b16 %v371
    %v1401 = vunpack.c.h.b16 %v371
    %v1402 = vunpack.c.l.b16 %v372
    %v1403 = vunpack.c.h.b16 %v372
    %v1404 = vunpack.c.l.b16 %v373
    %v1405 = vunpack.c.h.b16 %v373
    %v1406 = vunpack.c.l.b16 %v374
    %v1407 = vunpack.c.h.b16 %v374
    %v1408 = vunpack.c.l.b16 %v375
    %v1409 = vunpack.c.h.b16 %v375
    %v1410 = vunpack.c.l.b16 %v376
    %v1411 = vunpack.c.h.b16 %v376
    %v1412 = vunpack.c.l.b16 %v377
    %v1413 = vunpack.c.h.b16 %v377
    %v1414 = vunpack.c.l.b16 %v378
    %v1415 = vunpack.c.h.b16 %v378
    %v1416 = vunpack.c.l.b16 %v379
    %v1417 = vunpack.c.h.b16 %v379
    %v1418 = vunpack.c.l.b16 %v380
    %v1419 = vunpack.c.h.b16 %v380
    %v1420 = vunpack.c.l.b16 %v381
    %v1421 = vunpack.c.h.b16 %v381
    %v1422 = vunpack.c.l.b16 %v382
    %v1423 = vunpack.c.h.b16 %v382
    %v1424 = vunpack.c.l.b16 %v383
    %v1425 = vunpack.c.h.b16 %v383
    %v1426 = vunpack.c.l.b16 %v384
    %v1427 = vunpack.c.h.b16 %v384
    %v1428 = vunpack.c.l.b16 %v385
    %v1429 = vunpack.c.h.b16 %v385
    %v1430 = vunpack.c.l.b16 %v386
    %v1431 = vunpack.c.h.b16 %v386
    %v1432 = vunpack.c.l.b16 %v387
    %v1433 = vunpack.c.h.b16 %v387
    %v1434 = vunpack.c.l.b16 %v388
    %v1435 = vunpack.c.h.b16 %v388
    %v1436 = vunpack.c.l.b16 %v389
    %v1437 = vunpack.c.h.b16 %v389
    %v1438 = vunpack.c.l.b16 %v390
    %v1439 = vunpack.c.h.b16 %v390
    %v1440 = vunpack.c.l.b16 %v391
    %v1441 = vunpack.c.h.b16 %v391
    %v1442 = vunpack.c.l.b16 %v392
    %v1443 = vunpack.c.h.b16 %v392
    %v1444 = vunpack.c.l.b16 %v393
    %v1445 = vunpack.c.h.b16 %v393
    %v1446 = vunpack.c.l.b16 %v394
    %v1447 = vunpack.c.h.b16 %v394
    %v1448 = vunpack.c.l.b16 %v395
    %v1449 = vunpack.c.h.b16 %v395
    %v1450 = vunpack.c.l.b16 %v396
    %v1451 = vunpack.c.h.b16 %v396
    %v1452 = vunpack.c.l.b16 %v397
    %v1453 = vunpack.c.h.b16 %v397
    %v1454 = vunpack.c.l.b16 %v398
    %v1455 = vunpack.c.h.b16 %v398
    %v1456 = vunpack.c.l.b16 %v399
    %v1457 = vunpack.c.h.b16 %v399
    %v1458 = vunpack.c.l.b16 %v400
    %v1459 = vunpack.c.h.b16 %v400
    %v1460 = vunpack.c.l.b16 %v401
    %v1461 = vunpack.c.h.b16 %v401
    %v1462 = vunpack.c.l.b16 %v402
    %v1463 = vunpack.c.h.b16 %v402
    %v1464 = vunpack.c.l.b16 %v403
    %v1465 = vunpack.c.h.b16 %v403
    %v1466 = vunpack.c.l.b16 %v404
    %v1467 = vunpack.c.h.b16 %v404
    %v1468 = vunpack.c.l.b16 %v405
    %v1469 = vunpack.c.h.b16 %v405
    %v1470 = vunpack.c.l.b16 %v406
    %v1471 = vunpack.c.h.b16 %v406
    %v1472 = vunpack.c.l.b16 %v407
    %v1473 = vunpack.c.h.b16 %v407
    %v1474 = vunpack.c.l.b16 %v408
    %v1475 = vunpack.c.h.b16 %v408
    %v1476 = vunpack.c.l.b16 %v409
    %v1477 = vunpack.c.h.b16 %v409
    %v1478 = vunpack.c.l.b16 %v410
    %v1479 = vunpack.c.h.b16 %v410
    %v1480 = vunpack.c.l.b16 %v411
    %v1481 = vunpack.c.h.b16 %v411
    %v1482 = vunpack.c.l.b16 %v412
    %v1483 = vunpack.c.h.b16 %v412
    %v1484 = vunpack.c.l.b16 %v413
    %v1485 = vunpack.c.h.b16 %v413
    %v1486 = vunpack.c.l.b16 %v414
    %v1487 = vunpack.c.h.b16 %v414
    %v1488 = vunpack.c.l.b16 %v415
    %v1489 = vunpack.c.h.b16 %v415
    %v1490 = vunpack.c.l.b16 %v416
    %v1491 = vunpack.c.h.b16 %v416
    %v1492 = vunpack.c.l.b16 %v417
    %v1493 = vunpack.c.h.b16 %v417
    %v1494 = vunpack.c.l.b16 %v418
    %v1495 = vunpack.c.h.b16 %v418
    %v1496 = vunpack.c.l.b16 %v419
    %v1497 = vunpack.c.h.b16 %v419
    %v1498 = vunpack.c.l.b16 %v420
    %v1499 = vunpack.c.h.b16 %v420
    %v1500 = vunpack.c.l.b16 %v421
    %v1501 = vunpack.c.h.b16 %v421
    %v1502 = vunpack.c.l.b16 %v422
    %v1503 = vunpack.c.h.b16 %v422
    %v1504 = vunpack.c.l.b16 %v423
    %v1505 = vunpack.c.h.b16 %v423
    %v1506 = vunpack.c.l.b16 %v424
    %v1507 = vunpack.c.h.b16 %v424
    %v1508 = vunpack.c.l.b16 %v425
    %v1509 = vunpack.c.h.b16 %v425
    %v1510 = vunpack.c.l.b16 %v426
    %v1511 = vunpack.c.h.b16 %v426
    %v1512 = vunpack.c.l.b16 %v427
    %v1513 = vunpack.c.h.b16 %v427
    %v1514 = vunpack.c.l.b16 %v428
    %v1515 = vunpack.c.h.b16 %v428
    %v1516 = vunpack.c.l.b16 %v429
    %v1517 = vunpack.c.h.b16 %v429
    %v1518 = vunpack.c.l.b16 %v430
    %v1519 = vunpack.c.h.b16 %v430
    %v1520 = vunpack.c.l.b16 %v431
    %v1521 = vunpack.c.h.b16 %v431
    %v1522 = vunpack.c.l.b16 %v432
    %v1523 = vunpack.c.h.b16 %v432
    %v1524 = vunpack.c.l.b16 %v433
    %v1525 = vunpack.c.h.b16 %v433
    %v1526 = vunpack.c.l.b16 %v434
    %v1527 = vunpack.c.h.b16 %v434
    %v1528 = vunpack.c.l.b16 %v435
    %v1529 = vunpack.c.h.b16 %v435
    %v1530 = vunpack.c.l.b16 %v436
    %v1531 = vunpack.c.h.b16 %v436
    %v1532 = vunpack.c.l.b16 %v437
    %v1533 = vunpack.c.h.b16 %v437
    %v1534 = vunpack.c.l.b16 %v438
    %v1535 = vunpack.c.h.b16 %v438
    %v1536 = vunpack.c.l.b16 %v439
    %v1537 = vunpack.c.h.b16 %v439
    %v1538 = vunpack.c.l.b16 %v440
    %v1539 = vunpack.c.h.b16 %v440
    %v1540 = vunpack.c.l.b16 %v441
    %v1541 = vunpack.c.h.b16 %v441
    %v1542 = vunpack.c.l.b16 %v442
    %v1543 = vunpack.c.h.b16 %v442
    %v1544 = vunpack.c.l.b16 %v443
    %v1545 = vunpack.c.h.b16 %v443
    %v1546 = vunpack.c.l.b16 %v444
    %v1547 = vunpack.c.h.b16 %v444
    %v1548 = vunpack.c.l.b16 %v445
    %v1549 = vunpack.c.h.b16 %v445
    %v1550 = vunpack.c.l.b16 %v446
    %v1551 = vunpack.c.h.b16 %v446
    %v1552 = vunpack.c.l.b16 %v447
    %v1553 = vunpack.c.h.b16 %v447
    %v1554 = vunpack.c.l.b16 %v448
    %v1555 = vunpack.c.h.b16 %v448
    %v1556 = vunpack.c.l.b16 %v449
    %v1557 = vunpack.c.h.b16 %v449
    %v1558 = vunpack.c.l.b16 %v450
    %v1559 = vunpack.c.h.b16 %v450
    %v1560 = vunpack.c.l.b16 %v451
    %v1561 = vunpack.c.h.b16 %v451
    %v1562 = vunpack.c.l.b16 %v452
    %v1563 = vunpack.c.h.b16 %v452
    %v1564 = vunpack.c.l.b16 %v453
    %v1565 = vunpack.c.h.b16 %v453
    %v1566 = vunpack.c.l.b16 %v454
    %v1567 = vunpack.c.h.b16 %v454
    %v1568 = vunpack.c.l.b16 %v455
    %v1569 = vunpack.c.h.b16 %v455
    %v1570 = vunpack.c.l.b16 %v456
    %v1571 = vunpack.c.h.b16 %v456
    %v1572 = vunpack.c.l.b16 %v457
    %v1573 = vunpack.c.h.b16 %v457
    %v1574 = vunpack.c.l.b16 %v458
    %v1575 = vunpack.c.h.b16 %v458
    %v1576 = vunpack.c.l.b16 %v459
    %v1577 = vunpack.c.h.b16 %v459
    %v1578 = vunpack.c.l.b16 %v460
    %v1579 = vunpack.c.h.b16 %v460
    %v1580 = vunpack.c.l.b16 %v461
    %v1581 = vunpack.c.h.b16 %v461
    %v1582 = vunpack.c.l.b16 %v462
    %v1583 = vunpack.c.h.b16 %v462
    %v1584 = vunpack.c.l.b16 %v463
    %v1585 = vunpack.c.h.b16 %v463
    %v1586 = vunpack.c.l.b16 %v464
    %v1587 = vunpack.c.h.b16 %v464
    %v1588 = vunpack.c.l.b16 %v465
    %v1589 = vunpack.c.h.b16 %v465
    %v1590 = vunpack.c.l.b16 %v466
    %v1591 = vunpack.c.h.b16 %v466
    %v1592 = vunpack.c.l.b16 %v467
    %v1593 = vunpack.c.h.b16 %v467
    %v1594 = vunpack.c.l.b16 %v468
    %v1595 = vunpack.c.h.b16 %v468
    %v1596 = vunpack.c.l.b16 %v469
    %v1597 = vunpack.c.h.b16 %v469
    %v1598 = vunpack.c.l.b16 %v470
    %v1599 = vunpack.c.h.b16 %v470
    %v1600 = vunpack.c.l.b16 %v471
    %v1601 = vunpack.c.h.b16 %v471
    %v1602 = vunpack.c.l.b16 %v472
    %v1603 = vunpack.c.h.b16 %v472
    %v1604 = vunpack.c.l.b16 %v473
    %v1605 = vunpack.c.h.b16 %v473
    %v1606 = vunpack.c.l.b16 %v474
    %v1607 = vunpack.c.h.b16 %v474
    %v1608 = vunpack.c.l.b16 %v475
    %v1609 = vunpack.c.h.b16 %v475
    %v1610 = vunpack.c.l.b16 %v476
    %v1611 = vunpack.c.h.b16 %v476
    %v1612 = vunpack.c.l.b16 %v477
    %v1613 = vunpack.c.h.b16 %v477
    %v1614 = vunpack.c.l.b16 %v478
    %v1615 = vunpack.c.h.b16 %v478
    %v1616 = vunpack.c.l.b16 %v479
    %v1617 = vunpack.c.h.b16 %v479
    %v1618 = vunpack.c.l.b16 %v480
    %v1619 = vunpack.c.h.b16 %v480
    %v1620 = vunpack.c.l.b16 %v481
    %v1621 = vunpack.c.h.b16 %v481
    %v1622 = vunpack.c.l.b16 %v482
    %v1623 = vunpack.c.h.b16 %v482
    %v1624 = vunpack.c.l.b16 %v483
    %v1625 = vunpack.c.h.b16 %v483
    %v1626 = vunpack.c.l.b16 %v484
    %v1627 = vunpack.c.h.b16 %v484
    %v1628 = vunpack.c.l.b16 %v485
    %v1629 = vunpack.c.h.b16 %v485
    %v1630 = vunpack.c.l.b16 %v486
    %v1631 = vunpack.c.h.b16 %v486
    %v1632 = vunpack.c.l.b16 %v487
    %v1633 = vunpack.c.h.b16 %v487
    %v1634 = vunpack.c.l.b16 %v488
    %v1635 = vunpack.c.h.b16 %v488
    %v1636 = vunpack.c.l.b16 %v489
    %v1637 = vunpack.c.h.b16 %v489
    %v1638 = vunpack.c.l.b16 %v490
    %v1639 = vunpack.c.h.b16 %v490
    %v1640 = vunpack.c.l.b16 %v491
    %v1641 = vunpack.c.h.b16 %v491
    %v1642 = vunpack.c.l.b16 %v492
    %v1643 = vunpack.c.h.b16 %v492
    %v1644 = vunpack.c.l.b16 %v493
    %v1645 = vunpack.c.h.b16 %v493
    %v1646 = vunpack.c.l.b16 %v494
    %v1647 = vunpack.c.h.b16 %v494
    %v1648 = vunpack.c.l.b16 %v495
    %v1649 = vunpack.c.h.b16 %v495
    %v1650 = vunpack.c.l.b16 %v496
    %v1651 = vunpack.c.h.b16 %v496
    %v1652 = vunpack.c.l.b16 %v497
    %v1653 = vunpack.c.h.b16 %v497
    %v1654 = vunpack.c.l.b16 %v498
    %v1655 = vunpack.c.h.b16 %v498
    %v1656 = vunpack.c.l.b16 %v499
    %v1657 = vunpack.c.h.b16 %v499
    %v1658 = vunpack.c.l.b16 %v500
    %v1659 = vunpack.c.h.b16 %v500
    %v1660 = vunpack.c.l.b16 %v501
    %v1661 = vunpack.c.h.b16 %v501
    %v1662 = vunpack.c.l.b16 %v502
    %v1663 = vunpack.c.h.b16 %v502
    %v1664 = vunpack.c.l.b16 %v503
    %v1665 = vunpack.c.h.b16 %v503
    %v1666 = vunpack.c.l.b16 %v504
    %v1667 = vunpack.c.h.b16 %v504
    %v1668 = vunpack.c.l.b16 %v505
    %v1669 = vunpack.c.h.b16 %v505
    %v1670 = vunpack.c.l.b16 %v506
    %v1671 = vunpack.c.h.b16 %v506
    %v1672 = vunpack.c.l.b16 %v507
    %v1673 = vunpack.c.h.b16 %v507
    %v1674 = vunpack.c.l.b16 %v508
    %v1675 = vunpack.c.h.b16 %v508
    %v1676 = vunpack.c.l.b16 %v509
    %v1677 = vunpack.c.h.b16 %v509
    %v1678 = vunpack.c.l.b16 %v510
    %v1679 = vunpack.c.h.b16 %v510
    %v1680 = vunpack.c.l.b16 %v511
    %v1681 = vunpack.c.h.b16 %v511
    %v1682 = vunpack.c.l.b16 %v512
    %v1683 = vunpack.c.h.b16 %v512
    %v1684 = vunpack.c.l.b16 %v513
    %v1685 = vunpack.c.h.b16 %v513
    %v1686 = vunpack.c.l.b16 %v514
    %v1687 = vunpack.c.h.b16 %v514
    %v1688 = vunpack.c.l.b16 %v515
    %v1689 = vunpack.c.h.b16 %v515
    %v1690 = vunpack.c.l.b16 %v516
    %v1691 = vunpack.c.h.b16 %v516
    %v1692 = vunpack.c.l.b16 %v517
    %v1693 = vunpack.c.h.b16 %v517
    %v1694 = vunpack.c.l.b16 %v518
    %v1695 = vunpack.c.h.b16 %v518
    %v1696 = vunpack.c.l.b16 %v519
    %v1697 = vunpack.c.h.b16 %v519
    %v1698 = vunpack.c.l.b16 %v520
    %v1699 = vunpack.c.h.b16 %v520
    %v1700 = vunpack.c.l.b16 %v521
    %v1701 = vunpack.c.h.b16 %v521
    %v1702 = vunpack.c.l.b16 %v522
    %v1703 = vunpack.c.h.b16 %v522
    %v1704 = vunpack.c.l.b16 %v523
    %v1705 = vunpack.c.h.b16 %v523
    %v1706 = vunpack.c.l.b16 %v524
    %v1707 = vunpack.c.h.b16 %v524
    %v1708 = vunpack.c.l.b16 %v525
    %v1709 = vunpack.c.h.b16 %v525
    %v1710 = vunpack.c.l.b16 %v526
    %v1711 = vunpack.c.h.b16 %v526
    %v1712 = vunpack.c.l.b16 %v527
    %v1713 = vunpack.c.h.b16 %v527
    %v1714 = vunpack.c.l.b16 %v528
    %v1715 = vunpack.c.h.b16 %v528
    %v1716 = vunpack.c.l.b16 %v529
    %v1717 = vunpack.c.h.b16 %v529
    %v1718 = vunpack.c.l.b16 %v530
    %v1719 = vunpack.c.h.b16 %v530
    %v1720 = vunpack.c.l.b16 %v531
    %v1721 = vunpack.c.h.b16 %v531
    %v1722 = vunpack.c.l.b16 %v532
    %v1723 = vunpack.c.h.b16 %v532
    %v1724 = vunpack.c.l.b16 %v533
    %v1725 = vunpack.c.h.b16 %v533
    %v1726 = vunpack.c.l.b16 %v534
    %v1727 = vunpack.c.h.b16 %v534
    %v1728 = vunpack.c.l.b16 %v535
    %v1729 = vunpack.c.h.b16 %v535
    %v1730 = vpack.c.b16 %v954, %v946
    %v1731 = vpack.c.b16 %v955, %v947
    %v1732 = vpack.c.b16 %v956, %v948
    %v1733 = vpack.c.b16 %v957, %v949
    %v1734 = vpack.c.b16 %v958, %v950
    %v1735 = vpack.c.b16 %v959, %v951
    %v1736 = vpack.c.b16 %v960, %v952
    %v1737 = vpack.c.b16 %v961, %v953
    %v1738 = vpack.c.b16 %v970, %v962
    %v1739 = vpack.c.b16 %v971, %v963
    %v1740 = vpack.c.b16 %v972, %v964
    %v1741 = vpack.c.b16 %v973, %v965
    %v1742 = vpack.c.b16 %v974, %v966
    %v1743 = vpack.c.b16 %v975, %v967
    %v1744 = vpack.c.b16 %v976, %v968
    %v1745 = vpack.c.b16 %v977, %v969
    %v1746 = vpack.c.b16 %v986, %v978
    %v1747 = vpack.c.b16 %v987, %v979
    %v1748 = vpack.c.b16 %v988, %v980
    %v1749 = vpack.c.b16 %v989, %v981
    %v1750 = vpack.c.b16 %v990, %v982
    %v1751 = vpack.c.b16 %v991, %v983
    %v1752 = vpack.c.b16 %v992, %v984
    %v1753 = vpack.c.b16 %v993, %v985
    %v1754 = vpack.c.b16 %v1002, %v994
    %v1755 = vpack.c.b16 %v1003, %v995
    %v1756 = vpack.c.b16 %v1004, %v996
    %v1757 = vpack.c.b16 %v1005, %v997
    %v1758 = vpack.c.b16 %v1006, %v998
    %v1759 = vpack.c.b16 %v1007, %v999
    %v1760 = vpack.c.b16 %v1008, %v1000
    %v1761 = vpack.c.b16 %v1009, %v1001
    %v1762 = vpack.c.b16 %v1018, %v1010
    %v1763 = vpack.c.b16 %v1019, %v1011
    %v1764 = vpack.c.b16 %v1020, %v1012
    %v1765 = vpack.c.b16 %v1021, %v1013
    %v1766 = vpack.c.b16 %v1022, %v1014
    %v1767 = vpack.c.b16 %v1023, %v1015
    %v1768 = vpack.c.b16 %v1024, %v1016
    %v1769 = vpack.c.b16 %v1025, %v1017
    %v1770 = vpack.c.b16 %v1034, %v1026
    %v1771 = vpack.c.b16 %v1035, %v1027
    %v1772 = vpack.c.b16 %v1036, %v1028
    %v1773 = vpack.c.b16 %v1037, %v1029
    %v1774 = vpack.c.b16 %v1038, %v1030
    %v1775 = vpack.c.b16 %v1039, %v1031
    %v1776 = vpack.c.b16 %v1040, %v1032
    %v1777 = vpack.c.b16 %v1041, %v1033
    %v1778 = vpack.c.b16 %v1050, %v1042
    %v1779 = vpack.c.b16 %v1051, %v1043
    %v1780 = vpack.c.b16 %v1052, %v1044
    %v1781 = vpack.c.b16 %v1053, %v1045
    %v1782 = vpack.c.b16 %v1054, %v1046
    %v1783 = vpack.c.b16 %v1055, %v1047
    %v1784 = vpack.c.b16 %v1056, %v1048
    %v1785 = vpack.c.b16 %v1057, %v1049
    %v1786 = vpack.c.b16 %v1066, %v1058
    %v1787 = vpack.c.b16 %v1067, %v1059
    %v1788 = vpack.c.b16 %v1068, %v1060
    %v1789 = vpack.c.b16 %v1069, %v1061
    %v1790 = vpack.c.b16 %v1070, %v1062
    %v1791 = vpack.c.b16 %v1071, %v1063
    %v1792 = vpack.c.b16 %v1072, %v1064
    %v1793 = vpack.c.b16 %v1073, %v1065
    %v1794 = vpack.c.b16 %v1082, %v1074
    %v1795 = vpack.c.b16 %v1083, %v1075
    %v1796 = vpack.c.b16 %v1084, %v1076
    %v1797 = vpack.c.b16 %v1085, %v1077
    %v1798 = vpack.c.b16 %v1086, %v1078
    %v1799 = vpack.c.b16 %v1087, %v1079
    %v1800 = vpack.c.b16 %v1088, %v1080
    %v1801 = vpack.c.b16 %v1089, %v1081
    %v1802 = vpack.c.b16 %v1098, %v1090
    %v1803 = vpack.c.b16 %v1099, %v1091
    %v1804 = vpack.c.b16 %v1100, %v1092
    %v1805 = vpack.c.b16 %v1101, %v1093
    %v1806 = vpack.c.b16 %v1102, %v1094
    %v1807 = vpack.c.b16 %v1103, %v1095
    %v1808 = vpack.c.b16 %v1104, %v1096
    %v1809 = vpack.c.b16 %v1105, %v1097
    %v1810 = vpack.c.b16 %v1114, %v1106
    %v1811 = vpack.c.b16 %v1115, %v1107
    %v1812 = vpack.c.b16 %v1116, %v1108
    %v1813 = vpack.c.b16 %v1117, %v1109
    %v1814 = vpack.c.b16 %v1118, %v1110
    %v1815 = vpack.c.b16 %v1119, %v1111
    %v1816 = vpack.c.b16 %v1120, %v1112
    %v1817 = vpack.c.b16 %v1121, %v1113
    %v1818 = vpack.c.b16 %v1130, %v1122
    %v1819 = vpack.c.b16 %v1131, %v1123
    %v1820 = vpack.c.b16 %v1132, %v1124
    %v1821 = vpack.c.b16 %v1133, %v1125
    %v1822 = vpack.c.b16 %v1134, %v1126
    %v1823 = vpack.c.b16 %v1135, %v1127
    %v1824 = vpack.c.b16 %v1136, %v1128
    %v1825 = vpack.c.b16 %v1137, %v1129
    %v1826 = vpack.c.b16 %v1146, %v1138
    %v1827 = vpack.c.b16 %v1147, %v1139
    %v1828 = vpack.c.b16 %v1148, %v1140
    %v1829 = vpack.c.b16 %v1149, %v1141
    %v1830 = vpack.c.b16 %v1150, %v1142
    %v1831 = vpack.c.b16 %v1151, %v1143
    %v1832 = vpack.c.b16 %v1152, %v1144
    %v1833 = vpack.c.b16 %v1153, %v1145
    %v1834 = vpack.c.b16 %v1162, %v1154
    %v1835 = vpack.c.b16 %v1163, %v1155
    %v1836 = vpack.c.b16 %v1164, %v1156
    %v1837 = vpack.c.b16 %v1165, %v1157
    %v1838 = vpack.c.b16 %v1166, %v1158
    %v1839 = vpack.c.b16 %v1167, %v1159
    %v1840 = vpack.c.b16 %v1168, %v1160
    %v1841 = vpack.c.b16 %v1169, %v1161
    %v1842 = vpack.c.b16 %v1178, %v1170
    %v1843 = vpack.c.b16 %v1179, %v1171
    %v1844 = vpack.c.b16 %v1180, %v1172
    %v1845 = vpack.c.b16 %v1181, %v1173
    %v1846 = vpack.c.b16 %v1182, %v1174
    %v1847 = vpack.c.b16 %v1183, %v1175
    %v1848 = vpack.c.b16 %v1184, %v1176
    %v1849 = vpack.c.b16 %v1185, %v1177
    %v1850 = vpack.c.b16 %v1194, %v1186
    %v1851 = vpack.c.b16 %v1195, %v1187
    %v1852 = vpack.c.b16 %v1196, %v1188
    %v1853 = vpack.c.b16 %v1197, %v1189
    %v1854 = vpack.c.b16 %v1198, %v1190
    %v1855 = vpack.c.b16 %v1199, %v1191
    %v1856 = vpack.c.b16 %v1200, %v1192
    %v1857 = vpack.c.b16 %v1201, %v1193
    %v1858 = vpack.c.b16 %v1210, %v1202
    %v1859 = vpack.c.b16 %v1211, %v1203
    %v1860 = vpack.c.b16 %v1212, %v1204
    %v1861 = vpack.c.b16 %v1213, %v1205
    %v1862 = vpack.c.b16 %v1214, %v1206
    %v1863 = vpack.c.b16 %v1215, %v1207
    %v1864 = vpack.c.b16 %v1216, %v1208
    %v1865 = vpack.c.b16 %v1217, %v1209
    %v1866 = vpack.c.b16 %v1226, %v1218
    %v1867 = vpack.c.b16 %v1227, %v1219
    %v1868 = vpack.c.b16 %v1228, %v1220
    %v1869 = vpack.c.b16 %v1229, %v1221
    %v1870 = vpack.c.b16 %v1230, %v1222
    %v1871 = vpack.c.b16 %v1231, %v1223
    %v1872 = vpack.c.b16 %v1232, %v1224
    %v1873 = vpack.c.b16 %v1233, %v1225
    %v1874 = vpack.c.b16 %v1242, %v1234
    %v1875 = vpack.c.b16 %v1243, %v1235
    %v1876 = vpack.c.b16 %v1244, %v1236
    %v1877 = vpack.c.b16 %v1245, %v1237
    %v1878 = vpack.c.b16 %v1246, %v1238
    %v1879 = vpack.c.b16 %v1247, %v1239
    %v1880 = vpack.c.b16 %v1248, %v1240
    %v1881 = vpack.c.b16 %v1249, %v1241
    %v1882 = vpack.c.b16 %v1258, %v1250
    %v1883 = vpack.c.b16 %v1259, %v1251
    %v1884 = vpack.c.b16 %v1260, %v1252
    %v1885 = vpack.c.b16 %v1261, %v1253
    %v1886 = vpack.c.b16 %v1262, %v1254
    %v1887 = vpack.c.b16 %v1263, %v1255
    %v1888 = vpack.c.b16 %v1264, %v1256
    %v1889 = vpack.c.b16 %v1265, %v1257
    %v1890 = vpack.c.b16 %v1274, %v1266
    %v1891 = vpack.c.b16 %v1275, %v1267
    %v1892 = vpack.c.b16 %v1276, %v1268
    %v1893 = vpack.c.b16 %v1277, %v1269
    %v1894 = vpack.c.b16 %v1278, %v1270
    %v1895 = vpack.c.b16 %v1279, %v1271
    %v1896 = vpack.c.b16 %v1280, %v1272
    %v1897 = vpack.c.b16 %v1281, %v1273
    %v1898 = vpack.c.b16 %v1290, %v1282
    %v1899 = vpack.c.b16 %v1291, %v1283
    %v1900 = vpack.c.b16 %v1292, %v1284
    %v1901 = vpack.c.b16 %v1293, %v1285
    %v1902 = vpack.c.b16 %v1294, %v1286
    %v1903 = vpack.c.b16 %v1295, %v1287
    %v1904 = vpack.c.b16 %v1296, %v1288
    %v1905 = vpack.c.b16 %v1297, %v1289
    %v1906 = vpack.c.b16 %v1306, %v1298
    %v1907 = vpack.c.b16 %v1307, %v1299
    %v1908 = vpack.c.b16 %v1308, %v1300
    %v1909 = vpack.c.b16 %v1309, %v1301
    %v1910 = vpack.c.b16 %v1310, %v1302
    %v1911 = vpack.c.b16 %v1311, %v1303
    %v1912 = vpack.c.b16 %v1312, %v1304
    %v1913 = vpack.c.b16 %v1313, %v1305
    %v1914 = vpack.c.b16 %v1322, %v1314
    %v1915 = vpack.c.b16 %v1323, %v1315
    %v1916 = vpack.c.b16 %v1324, %v1316
    %v1917 = vpack.c.b16 %v1325, %v1317
    %v1918 = vpack.c.b16 %v1326, %v1318
    %v1919 = vpack.c.b16 %v1327, %v1319
    %v1920 = vpack.c.b16 %v1328, %v1320
    %v1921 = vpack.c.b16 %v1329, %v1321
    %v1922 = vpack.c.b16 %v1338, %v1330
    %v1923 = vpack.c.b16 %v1339, %v1331
    %v1924 = vpack.c.b16 %v1340, %v1332
    %v1925 = vpack.c.b16 %v1341, %v1333
    %v1926 = vpack.c.b16 %v1342, %v1334
    %v1927 = vpack.c.b16 %v1343, %v1335
    %v1928 = vpack.c.b16 %v1344, %v1336
    %v1929 = vpack.c.b16 %v1345, %v1337
    %v1930 = vpack.c.b16 %v1354, %v1346
    %v1931 = vpack.c.b16 %v1355, %v1347
    %v1932 = vpack.c.b16 %v1356, %v1348
    %v1933 = vpack.c.b16 %v1357, %v1349
    %v1934 = vpack.c.b16 %v1358, %v1350
    %v1935 = vpack.c.b16 %v1359, %v1351
    %v1936 = vpack.c.b16 %v1360, %v1352
    %v1937 = vpack.c.b16 %v1361, %v1353
    %v1938 = vpack.c.b16 %v1370, %v1362
    %v1939 = vpack.c.b16 %v1371, %v1363
    %v1940 = vpack.c.b16 %v1372, %v1364
    %v1941 = vpack.c.b16 %v1373, %v1365
    %v1942 = vpack.c.b16 %v1374, %v1366
    %v1943 = vpack.c.b16 %v1375, %v1367
    %v1944 = vpack.c.b16 %v1376, %v1368
    %v1945 = vpack.c.b16 %v1377, %v1369
    %v1946 = vpack.c.b16 %v1386, %v1378
    %v1947 = vpack.c.b16 %v1387, %v1379
    %v1948 = vpack.c.b16 %v1388, %v1380
    %v1949 = vpack.c.b16 %v1389, %v1381
    %v1950 = vpack.c.b16 %v1390, %v1382
    %v1951 = vpack.c.b16 %v1391, %v1383
    %v1952 = vpack.c.b16 %v1392, %v1384
    %v1953 = vpack.c.b16 %v1393, %v1385
    %v1954 = vpack.c.b16 %v1402, %v1394
    %v1955 = vpack.c.b16 %v1403, %v1395
    %v1956 = vpack.c.b16 %v1404, %v1396
    %v1957 = vpack.c.b16 %v1405, %v1397
    %v1958 = vpack.c.b16 %v1406, %v1398
    %v1959 = vpack.c.b16 %v1407, %v1399
    %v1960 = vpack.c.b16 %v1408, %v1400
    %v1961 = vpack.c.b16 %v1409, %v1401
    %v1962 = vpack.c.b16 %v1418, %v1410
    %v1963 = vpack.c.b16 %v1419, %v1411
    %v1964 = vpack.c.b16 %v1420, %v1412
    %v1965 = vpack.c.b16 %v1421, %v1413
    %v1966 = vpack.c.b16 %v1422, %v1414
    %v1967 = vpack.c.b16 %v1423, %v1415
    %v1968 = vpack.c.b16 %v1424, %v1416
    %v1969 = vpack.c.b16 %v1425, %v1417
    %v1970 = vpack.c.b16 %v1434, %v1426
    %v1971 = vpack.c.b16 %v1435, %v1427
    %v1972 = vpack.c.b16 %v1436, %v1428
    %v1973 = vpack.c.b16 %v1437, %v1429
    %v1974 = vpack.c.b16 %v1438, %v1430
    %v1975 = vpack.c.b16 %v1439, %v1431
    %v1976 = vpack.c.b16 %v1440, %v1432
    %v1977 = vpack.c.b16 %v1441, %v1433
    %v1978 = vpack.c.b16 %v1450, %v1442
    %v1979 = vpack.c.b16 %v1451, %v1443
    %v1980 = vpack.c.b16 %v1452, %v1444
    %v1981 = vpack.c.b16 %v1453, %v1445
    %v1982 = vpack.c.b16 %v1454, %v1446
    %v1983 = vpack.c.b16 %v1455, %v1447
    %v1984 = vpack.c.b16 %v1456, %v1448
    %v1985 = vpack.c.b16 %v1457, %v1449
    %v1986 = vpack.c.b16 %v1466, %v1458
    %v1987 = vpack.c.b16 %v1467, %v1459
    %v1988 = vpack.c.b16 %v1468, %v1460
    %v1989 = vpack.c.b16 %v1469, %v1461
    %v1990 = vpack.c.b16 %v1470, %v1462
    %v1991 = vpack.c.b16 %v1471, %v1463
    %v1992 = vpack.c.b16 %v1472, %v1464
    %v1993 = vpack.c.b16 %v1473, %v1465
    %v1994 = vpack.c.b16 %v1482, %v1474
    %v1995 = vpack.c.b16 %v1483, %v1475
    %v1996 = vpack.c.b16 %v1484, %v1476
    %v1997 = vpack.c.b16 %v1485, %v1477
    %v1998 = vpack.c.b16 %v1486, %v1478
    %v1999 = vpack.c.b16 %v1487, %v1479
    %v2000 = vpack.c.b16 %v1488, %v1480
    %v2001 = vpack.c.b16 %v1489, %v1481
    %v2002 = vpack.c.b16 %v1498, %v1490
    %v2003 = vpack.c.b16 %v1499, %v1491
    %v2004 = vpack.c.b16 %v1500, %v1492
    %v2005 = vpack.c.b16 %v1501, %v1493
    %v2006 = vpack.c.b16 %v1502, %v1494
    %v2007 = vpack.c.b16 %v1503, %v1495
    %v2008 = vpack.c.b16 %v1504, %v1496
    %v2009 = vpack.c.b16 %v1505, %v1497
    %v2010 = vpack.c.b16 %v1514, %v1506
    %v2011 = vpack.c.b16 %v1515, %v1507
    %v2012 = vpack.c.b16 %v1516, %v1508
    %v2013 = vpack.c.b16 %v1517, %v1509
    %v2014 = vpack.c.b16 %v1518, %v1510
    %v2015 = vpack.c.b16 %v1519, %v1511
    %v2016 = vpack.c.b16 %v1520, %v1512
    %v2017 = vpack.c.b16 %v1521, %v1513
    %v2018 = vpack.c.b16 %v1530, %v1522
    %v2019 = vpack.c.b16 %v1531, %v1523
    %v2020 = vpack.c.b16 %v1532, %v1524
    %v2021 = vpack.c.b16 %v1533, %v1525
    %v2022 = vpack.c.b16 %v1534, %v1526
    %v2023 = vpack.c.b16 %v1535, %v1527
    %v2024 = vpack.c.b16 %v1536, %v1528
    %v2025 = vpack.c.b16 %v1537, %v1529
    %v2026 = vpack.c.b16 %v1546, %v1538
    %v2027 = vpack.c.b16 %v1547, %v1539
    %v2028 = vpack.c.b16 %v1548, %v1540
    %v2029 = vpack.c.b16 %v1549, %v1541
    %v2030 = vpack.c.b16 %v1550, %v1542
    %v2031 = vpack.c.b16 %v1551, %v1543
    %v2032 = vpack.c.b16 %v1552, %v1544
    %v2033 = vpack.c.b16 %v1553, %v1545
    %v2034 = vpack.c.b16 %v1562, %v1554
    %v2035 = vpack.c.b16 %v1563, %v1555
    %v2036 = vpack.c.b16 %v1564, %v1556
    %v2037 = vpack.c.b16 %v1565, %v1557
    %v2038 = vpack.c.b16 %v1566, %v1558
    %v2039 = vpack.c.b16 %v1567, %v1559
    %v2040 = vpack.c.b16 %v1568, %v1560
    %v2041 = vpack.c.b16 %v1569, %v1561
    %v2042 = vpack.c.b16 %v1578, %v1570
    %v2043 = vpack.c.b16 %v1579, %v1571
    %v2044 = vpack.c.b16 %v1580, %v1572
    %v2045 = vpack.c.b16 %v1581, %v1573
    %v2046 = vpack.c.b16 %v1582, %v1574
    %v2047 = vpack.c.b16 %v1583, %v1575
    %v2048 = vpack.c.b16 %v1584, %v1576
    %v2049 = vpack.c.b16 %v1585, %v1577
    %v2050 = vpack.c.b16 %v1594, %v1586
    %v2051 = vpack.c.b16 %v1595, %v1587
    %v2052 = vpack.c.b16 %v1596, %v1588
    %v2053 = vpack.c.b16 %v1597, %v1589
    %v2054 = vpack.c.b16 %v1598, %v1590
    %v2055 = vpack.c.b16 %v1599, %v1591
    %v2056 = vpack.c.b16 %v1600, %v1592
    %v2057 = vpack.c.b16 %v1601, %v1593
    %v2058 = vpack.c.b16 %v1610, %v1602
    %v2059 = vpack.c.b16 %v1611, %v1603
    %v2060 = vpack.c.b16 %v1612, %v1604
    %v2061 = vpack.c.b16 %v1613, %v1605
    %v2062 = vpack.c.b16 %v1614, %v1606
    %v2063 = vpack.c.b16 %v1615, %v1607
    %v2064 = vpack.c.b16 %v1616, %v1608
    %v2065 = vpack.c.b16 %v1617, %v1609
    %v2066 = vpack.c.b16 %v1626, %v1618
    %v2067 = vpack.c.b16 %v1627, %v1619
    %v2068 = vpack.c.b16 %v1628, %v1620
    %v2069 = vpack.c.b16 %v1629, %v1621
    %v2070 = vpack.c.b16 %v1630, %v1622
    %v2071 = vpack.c.b16 %v1631, %v1623
    %v2072 = vpack.c.b16 %v1632, %v1624
    %v2073 = vpack.c.b16 %v1633, %v1625
    %v2074 = vpack.c.b16 %v1642, %v1634
    %v2075 = vpack.c.b16 %v1643, %v1635
    %v2076 = vpack.c.b16 %v1644, %v1636
    %v2077 = vpack.c.b16 %v1645, %v1637
    %v2078 = vpack.c.b16 %v1646, %v1638
    %v2079 = vpack.c.b16 %v1647, %v1639
    %v2080 = vpack.c.b16 %v1648, %v1640
    %v2081 = vpack.c.b16 %v1649, %v1641
    %v2082 = vpack.c.b16 %v1658, %v1650
    %v2083 = vpack.c.b16 %v1659, %v1651
    %v2084 = vpack.c.b16 %v1660, %v1652
    %v2085 = vpack.c.b16 %v1661, %v1653
    %v2086 = vpack.c.b16 %v1662, %v1654
    %v2087 = vpack.c.b16 %v1663, %v1655
    %v2088 = vpack.c.b16 %v1664, %v1656
    %v2089 = vpack.c.b16 %v1665, %v1657
    %v2090 = vpack.c.b16 %v1674, %v1666
    %v2091 = vpack.c.b16 %v1675, %v1667
    %v2092 = vpack.c.b16 %v1676, %v1668
    %v2093 = vpack.c.b16 %v1677, %v1669
    %v2094 = vpack.c.b16 %v1678, %v1670
    %v2095 = vpack.c.b16 %v1679, %v1671
    %v2096 = vpack.c.b16 %v1680, %v1672
    %v2097 = vpack.c.b16 %v1681, %v1673
    %v2098 = vpack.c.b16 %v1690, %v1682
    %v2099 = vpack.c.b16 %v1691, %v1683
    %v2100 = vpack.c.b16 %v1692, %v1684
    %v2101 = vpack.c.b16 %v1693, %v1685
    %v2102 = vpack.c.b16 %v1694, %v1686
    %v2103 = vpack.c.b16 %v1695, %v1687
    %v2104 = vpack.c.b16 %v1696, %v1688
    %v2105 = vpack.c.b16 %v1697, %v1689
    %v2106 = vpack.c.b16 %v1706, %v1698
    %v2107 = vpack.c.b16 %v1707, %v1699
    %v2108 = vpack.c.b16 %v1708, %v1700
    %v2109 = vpack.c.b16 %v1709, %v1701
    %v2110 = vpack.c.b16 %v1710, %v1702
    %v2111 = vpack.c.b16 %v1711, %v1703
    %v2112 = vpack.c.b16 %v1712, %v1704
    %v2113 = vpack.c.b16 %v1713, %v1705
    %v2114 = vpack.c.b16 %v1722, %v1714
    %v2115 = vpack.c.b16 %v1723, %v1715
    %v2116 = vpack.c.b16 %v1724, %v1716
    %v2117 = vpack.c.b16 %v1725, %v1717
    %v2118 = vpack.c.b16 %v1726, %v1718
    %v2119 = vpack.c.b16 %v1727, %v1719
    %v2120 = vpack.c.b16 %v1728, %v1720
    %v2121 = vpack.c.b16 %v1729, %v1721
    %vm2514 = vcmask 130048
    %v2516 = vsel %vm2514, %v143, 0
    %2518 = vmatpush.bf16.msra.mxu0 %v1786
    %2519 = vmatpush.bf16.msra.mxu0 %v1778
    %2520 = vmatpush.bf16.msra.mxu0 %v1770
    %2521 = vmatpush.bf16.msra.mxu0 %v1762
    %2522 = vmatpush.bf16.msra.mxu0 %v1754
    %2523 = vmatpush.bf16.msra.mxu0 %v1746
    %2524 = vmatpush.bf16.msra.mxu0 %v1738
    %2525 = vmatpush.bf16.msra.mxu0 %v1730
    %2526 = vmatmul.bf16.gmra.mxu0 %v137
    %v2527 = vpop.f32.mrf.mxu0
    %v2528 = vadd.f32 %v538, %v2527
    %v2529 = vpop.f32.mrf.mxu0
    %v2530 = vadd.f32 %v538, %v2529
    %2531 = vdwg.mxu0
    %2532 = vmatpush.bf16.msra.mxu0 %v1850
    %2533 = vmatpush.bf16.msra.mxu0 %v1842
    %2534 = vmatpush.bf16.msra.mxu0 %v1834
    %2535 = vmatpush.bf16.msra.mxu0 %v1826
    %2536 = vmatpush.bf16.msra.mxu0 %v1818
    %2537 = vmatpush.bf16.msra.mxu0 %v1810
    %2538 = vmatpush.bf16.msra.mxu0 %v1802
    %2539 = vmatpush.bf16.msra.mxu0 %v1794
    %2540 = vmatmul.bf16.gmra.mxu0 %v138
    %v2541 = vpop.f32.mrf.mxu0
    %v2542 = vadd.f32 %v2528, %v2541
    %v2543 = vpop.f32.mrf.mxu0
    %v2544 = vadd.f32 %v2530, %v2543
    %2545 = vdwg.mxu0
    %2546 = vmatpush.bf16.msra.mxu0 %v1914
    %2547 = vmatpush.bf16.msra.mxu0 %v1906
    %2548 = vmatpush.bf16.msra.mxu0 %v1898
    %2549 = vmatpush.bf16.msra.mxu0 %v1890
    %2550 = vmatpush.bf16.msra.mxu0 %v1882
    %2551 = vmatpush.bf16.msra.mxu0 %v1874
    %2552 = vmatpush.bf16.msra.mxu0 %v1866
    %2553 = vmatpush.bf16.msra.mxu0 %v1858
    %2554 = vmatmul.bf16.gmra.mxu0 %v139
    %v2555 = vpop.f32.mrf.mxu0
    %v2556 = vadd.f32 %v2542, %v2555
    %v2557 = vpop.f32.mrf.mxu0
    %v2558 = vadd.f32 %v2544, %v2557
    %2559 = vdwg.mxu0
    %2560 = vmatpush.bf16.msra.mxu0 %v1978
    %2561 = vmatpush.bf16.msra.mxu0 %v1970
    %2562 = vmatpush.bf16.msra.mxu0 %v1962
    %2563 = vmatpush.bf16.msra.mxu0 %v1954
    %2564 = vmatpush.bf16.msra.mxu0 %v1946
    %2565 = vmatpush.bf16.msra.mxu0 %v1938
    %2566 = vmatpush.bf16.msra.mxu0 %v1930
    %2567 = vmatpush.bf16.msra.mxu0 %v1922
    %2568 = vmatmul.bf16.gmra.mxu0 %v140
    %v2569 = vpop.f32.mrf.mxu0
    %v2570 = vadd.f32 %v2556, %v2569
    %v2571 = vpop.f32.mrf.mxu0
    %v2572 = vadd.f32 %v2558, %v2571
    %2573 = vdwg.mxu0
    %2574 = vmatpush.bf16.msra.mxu0 %v2042
    %2575 = vmatpush.bf16.msra.mxu0 %v2034
    %2576 = vmatpush.bf16.msra.mxu0 %v2026
    %2577 = vmatpush.bf16.msra.mxu0 %v2018
    %2578 = vmatpush.bf16.msra.mxu0 %v2010
    %2579 = vmatpush.bf16.msra.mxu0 %v2002
    %2580 = vmatpush.bf16.msra.mxu0 %v1994
    %2581 = vmatpush.bf16.msra.mxu0 %v1986
    %2582 = vmatmul.bf16.gmra.mxu0 %v141
    %v2583 = vpop.f32.mrf.mxu0
    %v2584 = vadd.f32 %v2570, %v2583
    %v2585 = vpop.f32.mrf.mxu0
    %v2586 = vadd.f32 %v2572, %v2585
    %2587 = vdwg.mxu0
    %2588 = vmatpush.bf16.msra.mxu0 %v2106
    %2589 = vmatpush.bf16.msra.mxu0 %v2098
    %2590 = vmatpush.bf16.msra.mxu0 %v2090
    %2591 = vmatpush.bf16.msra.mxu0 %v2082
    %2592 = vmatpush.bf16.msra.mxu0 %v2074
    %2593 = vmatpush.bf16.msra.mxu0 %v2066
    %2594 = vmatpush.bf16.msra.mxu0 %v2058
    %2595 = vmatpush.bf16.msra.mxu0 %v2050
    %2596 = vmatmul.bf16.gmra.mxu0 %v142
    %v2597 = vpop.f32.mrf.mxu0
    %v2598 = vadd.f32 %v2584, %v2597
    %v2599 = vpop.f32.mrf.mxu0
    %v2600 = vadd.f32 %v2586, %v2599
    %2601 = vdwg.mxu0
    %2602 = vmatpush.bf16.msra.mxu0 0
    %2603 = vmatpush.bf16.msra.mxu0 0
    %2604 = vmatpush.bf16.msra.mxu0 0
    %2605 = vmatpush.bf16.msra.mxu0 0
    %2606 = vmatpush.bf16.msra.mxu0 0
    %2607 = vmatpush.bf16.msra.mxu0 0
    %2608 = vmatpush.bf16.msra.mxu0 0
    %2609 = vmatpush.bf16.msra.mxu0 %v2114
    %2610 = vmatmul.bf16.gmra.mxu0 %v2516
    %v2611 = vpop.f32.mrf.mxu0
    %v2612 = vadd.f32 %v2598, %v2611
    %v2613 = vpop.f32.mrf.mxu0
    %v2614 = vadd.f32 %v2600, %v2613
    %2615 = vdwg.mxu0
    %2616 = vmatpush.bf16.msra.mxu0 %v1787
    %2617 = vmatpush.bf16.msra.mxu0 %v1779
    %2618 = vmatpush.bf16.msra.mxu0 %v1771
    %2619 = vmatpush.bf16.msra.mxu0 %v1763
    %2620 = vmatpush.bf16.msra.mxu0 %v1755
    %2621 = vmatpush.bf16.msra.mxu0 %v1747
    %2622 = vmatpush.bf16.msra.mxu0 %v1739
    %2623 = vmatpush.bf16.msra.mxu0 %v1731
    %2624 = vmatmul.bf16.gmra.mxu0 %v137
    %v2625 = vpop.f32.mrf.mxu0
    %v2626 = vadd.f32 %v539, %v2625
    %v2627 = vpop.f32.mrf.mxu0
    %v2628 = vadd.f32 %v539, %v2627
    %2629 = vdwg.mxu0
    %2630 = vmatpush.bf16.msra.mxu0 %v1851
    %2631 = vmatpush.bf16.msra.mxu0 %v1843
    %2632 = vmatpush.bf16.msra.mxu0 %v1835
    %2633 = vmatpush.bf16.msra.mxu0 %v1827
    %2634 = vmatpush.bf16.msra.mxu0 %v1819
    %2635 = vmatpush.bf16.msra.mxu0 %v1811
    %2636 = vmatpush.bf16.msra.mxu0 %v1803
    %2637 = vmatpush.bf16.msra.mxu0 %v1795
    %2638 = vmatmul.bf16.gmra.mxu0 %v138
    %v2639 = vpop.f32.mrf.mxu0
    %v2640 = vadd.f32 %v2626, %v2639
    %v2641 = vpop.f32.mrf.mxu0
    %v2642 = vadd.f32 %v2628, %v2641
    %2643 = vdwg.mxu0
    %2644 = vmatpush.bf16.msra.mxu0 %v1915
    %2645 = vmatpush.bf16.msra.mxu0 %v1907
    %2646 = vmatpush.bf16.msra.mxu0 %v1899
    %2647 = vmatpush.bf16.msra.mxu0 %v1891
    %2648 = vmatpush.bf16.msra.mxu0 %v1883
    %2649 = vmatpush.bf16.msra.mxu0 %v1875
    %2650 = vmatpush.bf16.msra.mxu0 %v1867
    %2651 = vmatpush.bf16.msra.mxu0 %v1859
    %2652 = vmatmul.bf16.gmra.mxu0 %v139
    %v2653 = vpop.f32.mrf.mxu0
    %v2654 = vadd.f32 %v2640, %v2653
    %v2655 = vpop.f32.mrf.mxu0
    %v2656 = vadd.f32 %v2642, %v2655
    %2657 = vdwg.mxu0
    %2658 = vmatpush.bf16.msra.mxu0 %v1979
    %2659 = vmatpush.bf16.msra.mxu0 %v1971
    %2660 = vmatpush.bf16.msra.mxu0 %v1963
    %2661 = vmatpush.bf16.msra.mxu0 %v1955
    %2662 = vmatpush.bf16.msra.mxu0 %v1947
    %2663 = vmatpush.bf16.msra.mxu0 %v1939
    %2664 = vmatpush.bf16.msra.mxu0 %v1931
    %2665 = vmatpush.bf16.msra.mxu0 %v1923
    %2666 = vmatmul.bf16.gmra.mxu0 %v140
    %v2667 = vpop.f32.mrf.mxu0
    %v2668 = vadd.f32 %v2654, %v2667
    %v2669 = vpop.f32.mrf.mxu0
    %v2670 = vadd.f32 %v2656, %v2669
    %2671 = vdwg.mxu0
    %2672 = vmatpush.bf16.msra.mxu0 %v2043
    %2673 = vmatpush.bf16.msra.mxu0 %v2035
    %2674 = vmatpush.bf16.msra.mxu0 %v2027
    %2675 = vmatpush.bf16.msra.mxu0 %v2019
    %2676 = vmatpush.bf16.msra.mxu0 %v2011
    %2677 = vmatpush.bf16.msra.mxu0 %v2003
    %2678 = vmatpush.bf16.msra.mxu0 %v1995
    %2679 = vmatpush.bf16.msra.mxu0 %v1987
    %2680 = vmatmul.bf16.gmra.mxu0 %v141
    %v2681 = vpop.f32.mrf.mxu0
    %v2682 = vadd.f32 %v2668, %v2681
    %v2683 = vpop.f32.mrf.mxu0
    %v2684 = vadd.f32 %v2670, %v2683
    %2685 = vdwg.mxu0
    %2686 = vmatpush.bf16.msra.mxu0 %v2107
    %2687 = vmatpush.bf16.msra.mxu0 %v2099
    %2688 = vmatpush.bf16.msra.mxu0 %v2091
    %2689 = vmatpush.bf16.msra.mxu0 %v2083
    %2690 = vmatpush.bf16.msra.mxu0 %v2075
    %2691 = vmatpush.bf16.msra.mxu0 %v2067
    %2692 = vmatpush.bf16.msra.mxu0 %v2059
    %2693 = vmatpush.bf16.msra.mxu0 %v2051
    %2694 = vmatmul.bf16.gmra.mxu0 %v142
    %v2695 = vpop.f32.mrf.mxu0
    %v2696 = vadd.f32 %v2682, %v2695
    %v2697 = vpop.f32.mrf.mxu0
    %v2698 = vadd.f32 %v2684, %v2697
    %2699 = vdwg.mxu0
    %2700 = vmatpush.bf16.msra.mxu0 0
    %2701 = vmatpush.bf16.msra.mxu0 0
    %2702 = vmatpush.bf16.msra.mxu0 0
    %2703 = vmatpush.bf16.msra.mxu0 0
    %2704 = vmatpush.bf16.msra.mxu0 0
    %2705 = vmatpush.bf16.msra.mxu0 0
    %2706 = vmatpush.bf16.msra.mxu0 0
    %2707 = vmatpush.bf16.msra.mxu0 %v2115
    %2708 = vmatmul.bf16.gmra.mxu0 %v2516
    %v2709 = vpop.f32.mrf.mxu0
    %v2710 = vadd.f32 %v2696, %v2709
    %v2711 = vpop.f32.mrf.mxu0
    %v2712 = vadd.f32 %v2698, %v2711
    %2713 = vdwg.mxu0
    %2714 = vmatpush.bf16.msra.mxu0 %v1788
    %2715 = vmatpush.bf16.msra.mxu0 %v1780
    %2716 = vmatpush.bf16.msra.mxu0 %v1772
    %2717 = vmatpush.bf16.msra.mxu0 %v1764
    %2718 = vmatpush.bf16.msra.mxu0 %v1756
    %2719 = vmatpush.bf16.msra.mxu0 %v1748
    %2720 = vmatpush.bf16.msra.mxu0 %v1740
    %2721 = vmatpush.bf16.msra.mxu0 %v1732
    %2722 = vmatmul.bf16.gmra.mxu0 %v137
    %v2723 = vpop.f32.mrf.mxu0
    %v2724 = vadd.f32 %v540, %v2723
    %v2725 = vpop.f32.mrf.mxu0
    %v2726 = vadd.f32 %v540, %v2725
    %2727 = vdwg.mxu0
    %2728 = vmatpush.bf16.msra.mxu0 %v1852
    %2729 = vmatpush.bf16.msra.mxu0 %v1844
    %2730 = vmatpush.bf16.msra.mxu0 %v1836
    %2731 = vmatpush.bf16.msra.mxu0 %v1828
    %2732 = vmatpush.bf16.msra.mxu0 %v1820
    %2733 = vmatpush.bf16.msra.mxu0 %v1812
    %2734 = vmatpush.bf16.msra.mxu0 %v1804
    %2735 = vmatpush.bf16.msra.mxu0 %v1796
    %2736 = vmatmul.bf16.gmra.mxu0 %v138
    %v2737 = vpop.f32.mrf.mxu0
    %v2738 = vadd.f32 %v2724, %v2737
    %v2739 = vpop.f32.mrf.mxu0
    %v2740 = vadd.f32 %v2726, %v2739
    %2741 = vdwg.mxu0
    %2742 = vmatpush.bf16.msra.mxu0 %v1916
    %2743 = vmatpush.bf16.msra.mxu0 %v1908
    %2744 = vmatpush.bf16.msra.mxu0 %v1900
    %2745 = vmatpush.bf16.msra.mxu0 %v1892
    %2746 = vmatpush.bf16.msra.mxu0 %v1884
    %2747 = vmatpush.bf16.msra.mxu0 %v1876
    %2748 = vmatpush.bf16.msra.mxu0 %v1868
    %2749 = vmatpush.bf16.msra.mxu0 %v1860
    %2750 = vmatmul.bf16.gmra.mxu0 %v139
    %v2751 = vpop.f32.mrf.mxu0
    %v2752 = vadd.f32 %v2738, %v2751
    %v2753 = vpop.f32.mrf.mxu0
    %v2754 = vadd.f32 %v2740, %v2753
    %2755 = vdwg.mxu0
    %2756 = vmatpush.bf16.msra.mxu0 %v1980
    %2757 = vmatpush.bf16.msra.mxu0 %v1972
    %2758 = vmatpush.bf16.msra.mxu0 %v1964
    %2759 = vmatpush.bf16.msra.mxu0 %v1956
    %2760 = vmatpush.bf16.msra.mxu0 %v1948
    %2761 = vmatpush.bf16.msra.mxu0 %v1940
    %2762 = vmatpush.bf16.msra.mxu0 %v1932
    %2763 = vmatpush.bf16.msra.mxu0 %v1924
    %2764 = vmatmul.bf16.gmra.mxu0 %v140
    %v2765 = vpop.f32.mrf.mxu0
    %v2766 = vadd.f32 %v2752, %v2765
    %v2767 = vpop.f32.mrf.mxu0
    %v2768 = vadd.f32 %v2754, %v2767
    %2769 = vdwg.mxu0
    %2770 = vmatpush.bf16.msra.mxu0 %v2044
    %2771 = vmatpush.bf16.msra.mxu0 %v2036
    %2772 = vmatpush.bf16.msra.mxu0 %v2028
    %2773 = vmatpush.bf16.msra.mxu0 %v2020
    %2774 = vmatpush.bf16.msra.mxu0 %v2012
    %2775 = vmatpush.bf16.msra.mxu0 %v2004
    %2776 = vmatpush.bf16.msra.mxu0 %v1996
    %2777 = vmatpush.bf16.msra.mxu0 %v1988
    %2778 = vmatmul.bf16.gmra.mxu0 %v141
    %v2779 = vpop.f32.mrf.mxu0
    %v2780 = vadd.f32 %v2766, %v2779
    %v2781 = vpop.f32.mrf.mxu0
    %v2782 = vadd.f32 %v2768, %v2781
    %2783 = vdwg.mxu0
    %2784 = vmatpush.bf16.msra.mxu0 %v2108
    %2785 = vmatpush.bf16.msra.mxu0 %v2100
    %2786 = vmatpush.bf16.msra.mxu0 %v2092
    %2787 = vmatpush.bf16.msra.mxu0 %v2084
    %2788 = vmatpush.bf16.msra.mxu0 %v2076
    %2789 = vmatpush.bf16.msra.mxu0 %v2068
    %2790 = vmatpush.bf16.msra.mxu0 %v2060
    %2791 = vmatpush.bf16.msra.mxu0 %v2052
    %2792 = vmatmul.bf16.gmra.mxu0 %v142
    %v2793 = vpop.f32.mrf.mxu0
    %v2794 = vadd.f32 %v2780, %v2793
    %v2795 = vpop.f32.mrf.mxu0
    %v2796 = vadd.f32 %v2782, %v2795
    %2797 = vdwg.mxu0
    %2798 = vmatpush.bf16.msra.mxu0 0
    %2799 = vmatpush.bf16.msra.mxu0 0
    %2800 = vmatpush.bf16.msra.mxu0 0
    %2801 = vmatpush.bf16.msra.mxu0 0
    %2802 = vmatpush.bf16.msra.mxu0 0
    %2803 = vmatpush.bf16.msra.mxu0 0
    %2804 = vmatpush.bf16.msra.mxu0 0
    %2805 = vmatpush.bf16.msra.mxu0 %v2116
    %2806 = vmatmul.bf16.gmra.mxu0 %v2516
    %v2807 = vpop.f32.mrf.mxu0
    %v2808 = vadd.f32 %v2794, %v2807
    %v2809 = vpop.f32.mrf.mxu0
    %v2810 = vadd.f32 %v2796, %v2809
    %2811 = vdwg.mxu0
    %2812 = vmatpush.bf16.msra.mxu0 %v1789
    %2813 = vmatpush.bf16.msra.mxu0 %v1781
    %2814 = vmatpush.bf16.msra.mxu0 %v1773
    %2815 = vmatpush.bf16.msra.mxu0 %v1765
    %2816 = vmatpush.bf16.msra.mxu0 %v1757
    %2817 = vmatpush.bf16.msra.mxu0 %v1749
    %2818 = vmatpush.bf16.msra.mxu0 %v1741
    %2819 = vmatpush.bf16.msra.mxu0 %v1733
    %2820 = vmatmul.bf16.gmra.mxu0 %v137
    %v2821 = vpop.f32.mrf.mxu0
    %v2822 = vadd.f32 %v541, %v2821
    %v2823 = vpop.f32.mrf.mxu0
    %v2824 = vadd.f32 %v541, %v2823
    %2825 = vdwg.mxu0
    %2826 = vmatpush.bf16.msra.mxu0 %v1853
    %2827 = vmatpush.bf16.msra.mxu0 %v1845
    %2828 = vmatpush.bf16.msra.mxu0 %v1837
    %2829 = vmatpush.bf16.msra.mxu0 %v1829
    %2830 = vmatpush.bf16.msra.mxu0 %v1821
    %2831 = vmatpush.bf16.msra.mxu0 %v1813
    %2832 = vmatpush.bf16.msra.mxu0 %v1805
    %2833 = vmatpush.bf16.msra.mxu0 %v1797
    %2834 = vmatmul.bf16.gmra.mxu0 %v138
    %v2835 = vpop.f32.mrf.mxu0
    %v2836 = vadd.f32 %v2822, %v2835
    %v2837 = vpop.f32.mrf.mxu0
    %v2838 = vadd.f32 %v2824, %v2837
    %2839 = vdwg.mxu0
    %2840 = vmatpush.bf16.msra.mxu0 %v1917
    %2841 = vmatpush.bf16.msra.mxu0 %v1909
    %2842 = vmatpush.bf16.msra.mxu0 %v1901
    %2843 = vmatpush.bf16.msra.mxu0 %v1893
    %2844 = vmatpush.bf16.msra.mxu0 %v1885
    %2845 = vmatpush.bf16.msra.mxu0 %v1877
    %2846 = vmatpush.bf16.msra.mxu0 %v1869
    %2847 = vmatpush.bf16.msra.mxu0 %v1861
    %2848 = vmatmul.bf16.gmra.mxu0 %v139
    %v2849 = vpop.f32.mrf.mxu0
    %v2850 = vadd.f32 %v2836, %v2849
    %v2851 = vpop.f32.mrf.mxu0
    %v2852 = vadd.f32 %v2838, %v2851
    %2853 = vdwg.mxu0
    %2854 = vmatpush.bf16.msra.mxu0 %v1981
    %2855 = vmatpush.bf16.msra.mxu0 %v1973
    %2856 = vmatpush.bf16.msra.mxu0 %v1965
    %2857 = vmatpush.bf16.msra.mxu0 %v1957
    %2858 = vmatpush.bf16.msra.mxu0 %v1949
    %2859 = vmatpush.bf16.msra.mxu0 %v1941
    %2860 = vmatpush.bf16.msra.mxu0 %v1933
    %2861 = vmatpush.bf16.msra.mxu0 %v1925
    %2862 = vmatmul.bf16.gmra.mxu0 %v140
    %v2863 = vpop.f32.mrf.mxu0
    %v2864 = vadd.f32 %v2850, %v2863
    %v2865 = vpop.f32.mrf.mxu0
    %v2866 = vadd.f32 %v2852, %v2865
    %2867 = vdwg.mxu0
    %2868 = vmatpush.bf16.msra.mxu0 %v2045
    %2869 = vmatpush.bf16.msra.mxu0 %v2037
    %2870 = vmatpush.bf16.msra.mxu0 %v2029
    %2871 = vmatpush.bf16.msra.mxu0 %v2021
    %2872 = vmatpush.bf16.msra.mxu0 %v2013
    %2873 = vmatpush.bf16.msra.mxu0 %v2005
    %2874 = vmatpush.bf16.msra.mxu0 %v1997
    %2875 = vmatpush.bf16.msra.mxu0 %v1989
    %2876 = vmatmul.bf16.gmra.mxu0 %v141
    %v2877 = vpop.f32.mrf.mxu0
    %v2878 = vadd.f32 %v2864, %v2877
    %v2879 = vpop.f32.mrf.mxu0
    %v2880 = vadd.f32 %v2866, %v2879
    %2881 = vdwg.mxu0
    %2882 = vmatpush.bf16.msra.mxu0 %v2109
    %2883 = vmatpush.bf16.msra.mxu0 %v2101
    %2884 = vmatpush.bf16.msra.mxu0 %v2093
    %2885 = vmatpush.bf16.msra.mxu0 %v2085
    %2886 = vmatpush.bf16.msra.mxu0 %v2077
    %2887 = vmatpush.bf16.msra.mxu0 %v2069
    %2888 = vmatpush.bf16.msra.mxu0 %v2061
    %2889 = vmatpush.bf16.msra.mxu0 %v2053
    %2890 = vmatmul.bf16.gmra.mxu0 %v142
    %v2891 = vpop.f32.mrf.mxu0
    %v2892 = vadd.f32 %v2878, %v2891
    %v2893 = vpop.f32.mrf.mxu0
    %v2894 = vadd.f32 %v2880, %v2893
    %2895 = vdwg.mxu0
    %2896 = vmatpush.bf16.msra.mxu0 0
    %2897 = vmatpush.bf16.msra.mxu0 0
    %2898 = vmatpush.bf16.msra.mxu0 0
    %2899 = vmatpush.bf16.msra.mxu0 0
    %2900 = vmatpush.bf16.msra.mxu0 0
    %2901 = vmatpush.bf16.msra.mxu0 0
    %2902 = vmatpush.bf16.msra.mxu0 0
    %2903 = vmatpush.bf16.msra.mxu0 %v2117
    %2904 = vmatmul.bf16.gmra.mxu0 %v2516
    %v2905 = vpop.f32.mrf.mxu0
    %v2906 = vadd.f32 %v2892, %v2905
    %v2907 = vpop.f32.mrf.mxu0
    %v2908 = vadd.f32 %v2894, %v2907
    %2909 = vdwg.mxu0
    %2910 = vmatpush.bf16.msra.mxu0 %v1790
    %2911 = vmatpush.bf16.msra.mxu0 %v1782
    %2912 = vmatpush.bf16.msra.mxu0 %v1774
    %2913 = vmatpush.bf16.msra.mxu0 %v1766
    %2914 = vmatpush.bf16.msra.mxu0 %v1758
    %2915 = vmatpush.bf16.msra.mxu0 %v1750
    %2916 = vmatpush.bf16.msra.mxu0 %v1742
    %2917 = vmatpush.bf16.msra.mxu0 %v1734
    %2918 = vmatmul.bf16.gmra.mxu0 %v137
    %v2919 = vpop.f32.mrf.mxu0
    %v2920 = vadd.f32 %v542, %v2919
    %v2921 = vpop.f32.mrf.mxu0
    %v2922 = vadd.f32 %v542, %v2921
    %2923 = vdwg.mxu0
    %2924 = vmatpush.bf16.msra.mxu0 %v1854
    %2925 = vmatpush.bf16.msra.mxu0 %v1846
    %2926 = vmatpush.bf16.msra.mxu0 %v1838
    %2927 = vmatpush.bf16.msra.mxu0 %v1830
    %2928 = vmatpush.bf16.msra.mxu0 %v1822
    %2929 = vmatpush.bf16.msra.mxu0 %v1814
    %2930 = vmatpush.bf16.msra.mxu0 %v1806
    %2931 = vmatpush.bf16.msra.mxu0 %v1798
    %2932 = vmatmul.bf16.gmra.mxu0 %v138
    %v2933 = vpop.f32.mrf.mxu0
    %v2934 = vadd.f32 %v2920, %v2933
    %v2935 = vpop.f32.mrf.mxu0
    %v2936 = vadd.f32 %v2922, %v2935
    %2937 = vdwg.mxu0
    %2938 = vmatpush.bf16.msra.mxu0 %v1918
    %2939 = vmatpush.bf16.msra.mxu0 %v1910
    %2940 = vmatpush.bf16.msra.mxu0 %v1902
    %2941 = vmatpush.bf16.msra.mxu0 %v1894
    %2942 = vmatpush.bf16.msra.mxu0 %v1886
    %2943 = vmatpush.bf16.msra.mxu0 %v1878
    %2944 = vmatpush.bf16.msra.mxu0 %v1870
    %2945 = vmatpush.bf16.msra.mxu0 %v1862
    %2946 = vmatmul.bf16.gmra.mxu0 %v139
    %v2947 = vpop.f32.mrf.mxu0
    %v2948 = vadd.f32 %v2934, %v2947
    %v2949 = vpop.f32.mrf.mxu0
    %v2950 = vadd.f32 %v2936, %v2949
    %2951 = vdwg.mxu0
    %2952 = vmatpush.bf16.msra.mxu0 %v1982
    %2953 = vmatpush.bf16.msra.mxu0 %v1974
    %2954 = vmatpush.bf16.msra.mxu0 %v1966
    %2955 = vmatpush.bf16.msra.mxu0 %v1958
    %2956 = vmatpush.bf16.msra.mxu0 %v1950
    %2957 = vmatpush.bf16.msra.mxu0 %v1942
    %2958 = vmatpush.bf16.msra.mxu0 %v1934
    %2959 = vmatpush.bf16.msra.mxu0 %v1926
    %2960 = vmatmul.bf16.gmra.mxu0 %v140
    %v2961 = vpop.f32.mrf.mxu0
    %v2962 = vadd.f32 %v2948, %v2961
    %v2963 = vpop.f32.mrf.mxu0
    %v2964 = vadd.f32 %v2950, %v2963
    %2965 = vdwg.mxu0
    %2966 = vmatpush.bf16.msra.mxu0 %v2046
    %2967 = vmatpush.bf16.msra.mxu0 %v2038
    %2968 = vmatpush.bf16.msra.mxu0 %v2030
    %2969 = vmatpush.bf16.msra.mxu0 %v2022
    %2970 = vmatpush.bf16.msra.mxu0 %v2014
    %2971 = vmatpush.bf16.msra.mxu0 %v2006
    %2972 = vmatpush.bf16.msra.mxu0 %v1998
    %2973 = vmatpush.bf16.msra.mxu0 %v1990
    %2974 = vmatmul.bf16.gmra.mxu0 %v141
    %v2975 = vpop.f32.mrf.mxu0
    %v2976 = vadd.f32 %v2962, %v2975
    %v2977 = vpop.f32.mrf.mxu0
    %v2978 = vadd.f32 %v2964, %v2977
    %2979 = vdwg.mxu0
    %2980 = vmatpush.bf16.msra.mxu0 %v2110
    %2981 = vmatpush.bf16.msra.mxu0 %v2102
    %2982 = vmatpush.bf16.msra.mxu0 %v2094
    %2983 = vmatpush.bf16.msra.mxu0 %v2086
    %2984 = vmatpush.bf16.msra.mxu0 %v2078
    %2985 = vmatpush.bf16.msra.mxu0 %v2070
    %2986 = vmatpush.bf16.msra.mxu0 %v2062
    %2987 = vmatpush.bf16.msra.mxu0 %v2054
    %2988 = vmatmul.bf16.gmra.mxu0 %v142
    %v2989 = vpop.f32.mrf.mxu0
    %v2990 = vadd.f32 %v2976, %v2989
    %v2991 = vpop.f32.mrf.mxu0
    %v2992 = vadd.f32 %v2978, %v2991
    %2993 = vdwg.mxu0
    %2994 = vmatpush.bf16.msra.mxu0 0
    %2995 = vmatpush.bf16.msra.mxu0 0
    %2996 = vmatpush.bf16.msra.mxu0 0
    %2997 = vmatpush.bf16.msra.mxu0 0
    %2998 = vmatpush.bf16.msra.mxu0 0
    %2999 = vmatpush.bf16.msra.mxu0 0
    %3000 = vmatpush.bf16.msra.mxu0 0
    %3001 = vmatpush.bf16.msra.mxu0 %v2118
    %3002 = vmatmul.bf16.gmra.mxu0 %v2516
    %v3003 = vpop.f32.mrf.mxu0
    %v3004 = vadd.f32 %v2990, %v3003
    %v3005 = vpop.f32.mrf.mxu0
    %v3006 = vadd.f32 %v2992, %v3005
    %3007 = vdwg.mxu0
    %3008 = vmatpush.bf16.msra.mxu0 %v1791
    %3009 = vmatpush.bf16.msra.mxu0 %v1783
    %3010 = vmatpush.bf16.msra.mxu0 %v1775
    %3011 = vmatpush.bf16.msra.mxu0 %v1767
    %3012 = vmatpush.bf16.msra.mxu0 %v1759
    %3013 = vmatpush.bf16.msra.mxu0 %v1751
    %3014 = vmatpush.bf16.msra.mxu0 %v1743
    %3015 = vmatpush.bf16.msra.mxu0 %v1735
    %3016 = vmatmul.bf16.gmra.mxu0 %v137
    %v3017 = vpop.f32.mrf.mxu0
    %v3018 = vadd.f32 %v543, %v3017
    %v3019 = vpop.f32.mrf.mxu0
    %v3020 = vadd.f32 %v543, %v3019
    %3021 = vdwg.mxu0
    %3022 = vmatpush.bf16.msra.mxu0 %v1855
    %3023 = vmatpush.bf16.msra.mxu0 %v1847
    %3024 = vmatpush.bf16.msra.mxu0 %v1839
    %3025 = vmatpush.bf16.msra.mxu0 %v1831
    %3026 = vmatpush.bf16.msra.mxu0 %v1823
    %3027 = vmatpush.bf16.msra.mxu0 %v1815
    %3028 = vmatpush.bf16.msra.mxu0 %v1807
    %3029 = vmatpush.bf16.msra.mxu0 %v1799
    %3030 = vmatmul.bf16.gmra.mxu0 %v138
    %v3031 = vpop.f32.mrf.mxu0
    %v3032 = vadd.f32 %v3018, %v3031
    %v3033 = vpop.f32.mrf.mxu0
    %v3034 = vadd.f32 %v3020, %v3033
    %3035 = vdwg.mxu0
    %3036 = vmatpush.bf16.msra.mxu0 %v1919
    %3037 = vmatpush.bf16.msra.mxu0 %v1911
    %3038 = vmatpush.bf16.msra.mxu0 %v1903
    %3039 = vmatpush.bf16.msra.mxu0 %v1895
    %3040 = vmatpush.bf16.msra.mxu0 %v1887
    %3041 = vmatpush.bf16.msra.mxu0 %v1879
    %3042 = vmatpush.bf16.msra.mxu0 %v1871
    %3043 = vmatpush.bf16.msra.mxu0 %v1863
    %3044 = vmatmul.bf16.gmra.mxu0 %v139
    %v3045 = vpop.f32.mrf.mxu0
    %v3046 = vadd.f32 %v3032, %v3045
    %v3047 = vpop.f32.mrf.mxu0
    %v3048 = vadd.f32 %v3034, %v3047
    %3049 = vdwg.mxu0
    %3050 = vmatpush.bf16.msra.mxu0 %v1983
    %3051 = vmatpush.bf16.msra.mxu0 %v1975
    %3052 = vmatpush.bf16.msra.mxu0 %v1967
    %3053 = vmatpush.bf16.msra.mxu0 %v1959
    %3054 = vmatpush.bf16.msra.mxu0 %v1951
    %3055 = vmatpush.bf16.msra.mxu0 %v1943
    %3056 = vmatpush.bf16.msra.mxu0 %v1935
    %3057 = vmatpush.bf16.msra.mxu0 %v1927
    %3058 = vmatmul.bf16.gmra.mxu0 %v140
    %v3059 = vpop.f32.mrf.mxu0
    %v3060 = vadd.f32 %v3046, %v3059
    %v3061 = vpop.f32.mrf.mxu0
    %v3062 = vadd.f32 %v3048, %v3061
    %3063 = vdwg.mxu0
    %3064 = vmatpush.bf16.msra.mxu0 %v2047
    %3065 = vmatpush.bf16.msra.mxu0 %v2039
    %3066 = vmatpush.bf16.msra.mxu0 %v2031
    %3067 = vmatpush.bf16.msra.mxu0 %v2023
    %3068 = vmatpush.bf16.msra.mxu0 %v2015
    %3069 = vmatpush.bf16.msra.mxu0 %v2007
    %3070 = vmatpush.bf16.msra.mxu0 %v1999
    %3071 = vmatpush.bf16.msra.mxu0 %v1991
    %3072 = vmatmul.bf16.gmra.mxu0 %v141
    %v3073 = vpop.f32.mrf.mxu0
    %v3074 = vadd.f32 %v3060, %v3073
    %v3075 = vpop.f32.mrf.mxu0
    %v3076 = vadd.f32 %v3062, %v3075
    %3077 = vdwg.mxu0
    %3078 = vmatpush.bf16.msra.mxu0 %v2111
    %3079 = vmatpush.bf16.msra.mxu0 %v2103
    %3080 = vmatpush.bf16.msra.mxu0 %v2095
    %3081 = vmatpush.bf16.msra.mxu0 %v2087
    %3082 = vmatpush.bf16.msra.mxu0 %v2079
    %3083 = vmatpush.bf16.msra.mxu0 %v2071
    %3084 = vmatpush.bf16.msra.mxu0 %v2063
    %3085 = vmatpush.bf16.msra.mxu0 %v2055
    %3086 = vmatmul.bf16.gmra.mxu0 %v142
    %v3087 = vpop.f32.mrf.mxu0
    %v3088 = vadd.f32 %v3074, %v3087
    %v3089 = vpop.f32.mrf.mxu0
    %v3090 = vadd.f32 %v3076, %v3089
    %3091 = vdwg.mxu0
    %3092 = vmatpush.bf16.msra.mxu0 0
    %3093 = vmatpush.bf16.msra.mxu0 0
    %3094 = vmatpush.bf16.msra.mxu0 0
    %3095 = vmatpush.bf16.msra.mxu0 0
    %3096 = vmatpush.bf16.msra.mxu0 0
    %3097 = vmatpush.bf16.msra.mxu0 0
    %3098 = vmatpush.bf16.msra.mxu0 0
    %3099 = vmatpush.bf16.msra.mxu0 %v2119
    %3100 = vmatmul.bf16.gmra.mxu0 %v2516
    %v3101 = vpop.f32.mrf.mxu0
    %v3102 = vadd.f32 %v3088, %v3101
    %v3103 = vpop.f32.mrf.mxu0
    %v3104 = vadd.f32 %v3090, %v3103
    %3105 = vdwg.mxu0
    %3106 = vmatpush.bf16.msra.mxu0 %v1792
    %3107 = vmatpush.bf16.msra.mxu0 %v1784
    %3108 = vmatpush.bf16.msra.mxu0 %v1776
    %3109 = vmatpush.bf16.msra.mxu0 %v1768
    %3110 = vmatpush.bf16.msra.mxu0 %v1760
    %3111 = vmatpush.bf16.msra.mxu0 %v1752
    %3112 = vmatpush.bf16.msra.mxu0 %v1744
    %3113 = vmatpush.bf16.msra.mxu0 %v1736
    %3114 = vmatmul.bf16.gmra.mxu0 %v137
    %v3115 = vpop.f32.mrf.mxu0
    %v3116 = vadd.f32 %v544, %v3115
    %v3117 = vpop.f32.mrf.mxu0
    %v3118 = vadd.f32 %v544, %v3117
    %3119 = vdwg.mxu0
    %3120 = vmatpush.bf16.msra.mxu0 %v1856
    %3121 = vmatpush.bf16.msra.mxu0 %v1848
    %3122 = vmatpush.bf16.msra.mxu0 %v1840
    %3123 = vmatpush.bf16.msra.mxu0 %v1832
    %3124 = vmatpush.bf16.msra.mxu0 %v1824
    %3125 = vmatpush.bf16.msra.mxu0 %v1816
    %3126 = vmatpush.bf16.msra.mxu0 %v1808
    %3127 = vmatpush.bf16.msra.mxu0 %v1800
    %3128 = vmatmul.bf16.gmra.mxu0 %v138
    %v3129 = vpop.f32.mrf.mxu0
    %v3130 = vadd.f32 %v3116, %v3129
    %v3131 = vpop.f32.mrf.mxu0
    %v3132 = vadd.f32 %v3118, %v3131
    %3133 = vdwg.mxu0
    %3134 = vmatpush.bf16.msra.mxu0 %v1920
    %3135 = vmatpush.bf16.msra.mxu0 %v1912
    %3136 = vmatpush.bf16.msra.mxu0 %v1904
    %3137 = vmatpush.bf16.msra.mxu0 %v1896
    %3138 = vmatpush.bf16.msra.mxu0 %v1888
    %3139 = vmatpush.bf16.msra.mxu0 %v1880
    %3140 = vmatpush.bf16.msra.mxu0 %v1872
    %3141 = vmatpush.bf16.msra.mxu0 %v1864
    %3142 = vmatmul.bf16.gmra.mxu0 %v139
    %v3143 = vpop.f32.mrf.mxu0
    %v3144 = vadd.f32 %v3130, %v3143
    %v3145 = vpop.f32.mrf.mxu0
    %v3146 = vadd.f32 %v3132, %v3145
    %3147 = vdwg.mxu0
    %3148 = vmatpush.bf16.msra.mxu0 %v1984
    %3149 = vmatpush.bf16.msra.mxu0 %v1976
    %3150 = vmatpush.bf16.msra.mxu0 %v1968
    %3151 = vmatpush.bf16.msra.mxu0 %v1960
    %3152 = vmatpush.bf16.msra.mxu0 %v1952
    %3153 = vmatpush.bf16.msra.mxu0 %v1944
    %3154 = vmatpush.bf16.msra.mxu0 %v1936
    %3155 = vmatpush.bf16.msra.mxu0 %v1928
    %3156 = vmatmul.bf16.gmra.mxu0 %v140
    %v3157 = vpop.f32.mrf.mxu0
    %v3158 = vadd.f32 %v3144, %v3157
    %v3159 = vpop.f32.mrf.mxu0
    %v3160 = vadd.f32 %v3146, %v3159
    %3161 = vdwg.mxu0
    %3162 = vmatpush.bf16.msra.mxu0 %v2048
    %3163 = vmatpush.bf16.msra.mxu0 %v2040
    %3164 = vmatpush.bf16.msra.mxu0 %v2032
    %3165 = vmatpush.bf16.msra.mxu0 %v2024
    %3166 = vmatpush.bf16.msra.mxu0 %v2016
    %3167 = vmatpush.bf16.msra.mxu0 %v2008
    %3168 = vmatpush.bf16.msra.mxu0 %v2000
    %3169 = vmatpush.bf16.msra.mxu0 %v1992
    %3170 = vmatmul.bf16.gmra.mxu0 %v141
    %v3171 = vpop.f32.mrf.mxu0
    %v3172 = vadd.f32 %v3158, %v3171
    %v3173 = vpop.f32.mrf.mxu0
    %v3174 = vadd.f32 %v3160, %v3173
    %3175 = vdwg.mxu0
    %3176 = vmatpush.bf16.msra.mxu0 %v2112
    %3177 = vmatpush.bf16.msra.mxu0 %v2104
    %3178 = vmatpush.bf16.msra.mxu0 %v2096
    %3179 = vmatpush.bf16.msra.mxu0 %v2088
    %3180 = vmatpush.bf16.msra.mxu0 %v2080
    %3181 = vmatpush.bf16.msra.mxu0 %v2072
    %3182 = vmatpush.bf16.msra.mxu0 %v2064
    %3183 = vmatpush.bf16.msra.mxu0 %v2056
    %3184 = vmatmul.bf16.gmra.mxu0 %v142
    %v3185 = vpop.f32.mrf.mxu0
    %v3186 = vadd.f32 %v3172, %v3185
    %v3187 = vpop.f32.mrf.mxu0
    %v3188 = vadd.f32 %v3174, %v3187
    %3189 = vdwg.mxu0
    %3190 = vmatpush.bf16.msra.mxu0 0
    %3191 = vmatpush.bf16.msra.mxu0 0
    %3192 = vmatpush.bf16.msra.mxu0 0
    %3193 = vmatpush.bf16.msra.mxu0 0
    %3194 = vmatpush.bf16.msra.mxu0 0
    %3195 = vmatpush.bf16.msra.mxu0 0
    %3196 = vmatpush.bf16.msra.mxu0 0
    %3197 = vmatpush.bf16.msra.mxu0 %v2120
    %3198 = vmatmul.bf16.gmra.mxu0 %v2516
    %v3199 = vpop.f32.mrf.mxu0
    %v3200 = vadd.f32 %v3186, %v3199
    %v3201 = vpop.f32.mrf.mxu0
    %v3202 = vadd.f32 %v3188, %v3201
    %3203 = vdwg.mxu0
    %3204 = vmatpush.bf16.msra.mxu0 %v1793
    %3205 = vmatpush.bf16.msra.mxu0 %v1785
    %3206 = vmatpush.bf16.msra.mxu0 %v1777
    %3207 = vmatpush.bf16.msra.mxu0 %v1769
    %3208 = vmatpush.bf16.msra.mxu0 %v1761
    %3209 = vmatpush.bf16.msra.mxu0 %v1753
    %3210 = vmatpush.bf16.msra.mxu0 %v1745
    %3211 = vmatpush.bf16.msra.mxu0 %v1737
    %3212 = vmatmul.bf16.gmra.mxu0 %v137
    %v3213 = vpop.f32.mrf.mxu0
    %v3214 = vadd.f32 %v545, %v3213
    %v3215 = vpop.f32.mrf.mxu0
    %v3216 = vadd.f32 %v545, %v3215
    %3217 = vdwg.mxu0
    %3218 = vmatpush.bf16.msra.mxu0 %v1857
    %3219 = vmatpush.bf16.msra.mxu0 %v1849
    %3220 = vmatpush.bf16.msra.mxu0 %v1841
    %3221 = vmatpush.bf16.msra.mxu0 %v1833
    %3222 = vmatpush.bf16.msra.mxu0 %v1825
    %3223 = vmatpush.bf16.msra.mxu0 %v1817
    %3224 = vmatpush.bf16.msra.mxu0 %v1809
    %3225 = vmatpush.bf16.msra.mxu0 %v1801
    %3226 = vmatmul.bf16.gmra.mxu0 %v138
    %v3227 = vpop.f32.mrf.mxu0
    %v3228 = vadd.f32 %v3214, %v3227
    %v3229 = vpop.f32.mrf.mxu0
    %v3230 = vadd.f32 %v3216, %v3229
    %3231 = vdwg.mxu0
    %3232 = vmatpush.bf16.msra.mxu0 %v1921
    %3233 = vmatpush.bf16.msra.mxu0 %v1913
    %3234 = vmatpush.bf16.msra.mxu0 %v1905
    %3235 = vmatpush.bf16.msra.mxu0 %v1897
    %3236 = vmatpush.bf16.msra.mxu0 %v1889
    %3237 = vmatpush.bf16.msra.mxu0 %v1881
    %3238 = vmatpush.bf16.msra.mxu0 %v1873
    %3239 = vmatpush.bf16.msra.mxu0 %v1865
    %3240 = vmatmul.bf16.gmra.mxu0 %v139
    %v3241 = vpop.f32.mrf.mxu0
    %v3242 = vadd.f32 %v3228, %v3241
    %v3243 = vpop.f32.mrf.mxu0
    %v3244 = vadd.f32 %v3230, %v3243
    %3245 = vdwg.mxu0
    %3246 = vmatpush.bf16.msra.mxu0 %v1985
    %3247 = vmatpush.bf16.msra.mxu0 %v1977
    %3248 = vmatpush.bf16.msra.mxu0 %v1969
    %3249 = vmatpush.bf16.msra.mxu0 %v1961
    %3250 = vmatpush.bf16.msra.mxu0 %v1953
    %3251 = vmatpush.bf16.msra.mxu0 %v1945
    %3252 = vmatpush.bf16.msra.mxu0 %v1937
    %3253 = vmatpush.bf16.msra.mxu0 %v1929
    %3254 = vmatmul.bf16.gmra.mxu0 %v140
    %v3255 = vpop.f32.mrf.mxu0
    %v3256 = vadd.f32 %v3242, %v3255
    %v3257 = vpop.f32.mrf.mxu0
    %v3258 = vadd.f32 %v3244, %v3257
    %3259 = vdwg.mxu0
    %3260 = vmatpush.bf16.msra.mxu0 %v2049
    %3261 = vmatpush.bf16.msra.mxu0 %v2041
    %3262 = vmatpush.bf16.msra.mxu0 %v2033
    %3263 = vmatpush.bf16.msra.mxu0 %v2025
    %3264 = vmatpush.bf16.msra.mxu0 %v2017
    %3265 = vmatpush.bf16.msra.mxu0 %v2009
    %3266 = vmatpush.bf16.msra.mxu0 %v2001
    %3267 = vmatpush.bf16.msra.mxu0 %v1993
    %3268 = vmatmul.bf16.gmra.mxu0 %v141
    %v3269 = vpop.f32.mrf.mxu0
    %v3270 = vadd.f32 %v3256, %v3269
    %v3271 = vpop.f32.mrf.mxu0
    %v3272 = vadd.f32 %v3258, %v3271
    %3273 = vdwg.mxu0
    %3274 = vmatpush.bf16.msra.mxu0 %v2113
    %3275 = vmatpush.bf16.msra.mxu0 %v2105
    %3276 = vmatpush.bf16.msra.mxu0 %v2097
    %3277 = vmatpush.bf16.msra.mxu0 %v2089
    %3278 = vmatpush.bf16.msra.mxu0 %v2081
    %3279 = vmatpush.bf16.msra.mxu0 %v2073
    %3280 = vmatpush.bf16.msra.mxu0 %v2065
    %3281 = vmatpush.bf16.msra.mxu0 %v2057
    %3282 = vmatmul.bf16.gmra.mxu0 %v142
    %v3283 = vpop.f32.mrf.mxu0
    %v3284 = vadd.f32 %v3270, %v3283
    %v3285 = vpop.f32.mrf.mxu0
    %v3286 = vadd.f32 %v3272, %v3285
    %3287 = vdwg.mxu0
    %3288 = vmatpush.bf16.msra.mxu0 0
    %3289 = vmatpush.bf16.msra.mxu0 0
    %3290 = vmatpush.bf16.msra.mxu0 0
    %3291 = vmatpush.bf16.msra.mxu0 0
    %3292 = vmatpush.bf16.msra.mxu0 0
    %3293 = vmatpush.bf16.msra.mxu0 0
    %3294 = vmatpush.bf16.msra.mxu0 0
    %3295 = vmatpush.bf16.msra.mxu0 %v2121
    %3296 = vmatmul.bf16.gmra.mxu0 %v2516
    %v3297 = vpop.f32.mrf.mxu0
    %v3298 = vadd.f32 %v3284, %v3297
    %v3299 = vpop.f32.mrf.mxu0
    %v3300 = vadd.f32 %v3286, %v3299
    %3301 = vdwg.mxu0
    %v3302 = vmax.f32 %v2612, 0.0
    %v3303 = vmax.f32 %v2710, 0.0
    %v3304 = vmax.f32 %v2808, 0.0
    %v3305 = vmax.f32 %v2906, 0.0
    %v3306 = vmax.f32 %v3004, 0.0
    %v3307 = vmax.f32 %v3102, 0.0
    %v3308 = vmax.f32 %v3200, 0.0
    %v3309 = vmax.f32 %v3298, 0.0
    %v3310 = vmax.f32 %v2614, 0.0
    %v3311 = vmax.f32 %v2712, 0.0
    %v3312 = vmax.f32 %v2810, 0.0
    %v3313 = vmax.f32 %v2908, 0.0
    %v3314 = vmax.f32 %v3006, 0.0
    %v3315 = vmax.f32 %v3104, 0.0
    %v3316 = vmax.f32 %v3202, 0.0
    %v3317 = vmax.f32 %v3300, 0.0
    %v3318 = vpack.c.bf16 %v3310, %v3302
    %v3319 = vpack.c.bf16 %v3311, %v3303
    %v3320 = vpack.c.bf16 %v3312, %v3304
    %v3321 = vpack.c.bf16 %v3313, %v3305
    %v3322 = vpack.c.bf16 %v3314, %v3306
    %v3323 = vpack.c.bf16 %v3315, %v3307
    %v3324 = vpack.c.bf16 %v3316, %v3308
    %v3325 = vpack.c.bf16 %v3317, %v3309
    %v3326 = vld [vmem:[#allocation7] sm:$0xff]
    %v3327 = vld [vmem:[#allocation7 + $0x8] sm:$0xff]
    %v3328 = vld [vmem:[#allocation7 + $0x10] sm:$0xff]
    %v3329 = vld [vmem:[#allocation7 + $0x18] sm:$0xff]
    %v3330 = vld [vmem:[#allocation7 + $0x20] sm:$0xff]
    %v3331 = vld [vmem:[#allocation7 + $0x28] sm:$0xff]
    %v3332 = vld [vmem:[#allocation7 + $0x30] sm:$0xff]
    %v3333 = vld [vmem:[#allocation7 + $0x38] sm:$0xff]
    %v3334 = vld [vmem:[#allocation7 + $0x40] sm:$0xff]
    %v3335 = vld [vmem:[#allocation7 + $0x48] sm:$0xff]
    %v3336 = vld [vmem:[#allocation7 + $0x50] sm:$0xff]
    %v3337 = vld [vmem:[#allocation7 + $0x58] sm:$0xff]
    %v3338 = vld [vmem:[#allocation7 + $0x60] sm:$0xff]
    %v3339 = vld [vmem:[#allocation7 + $0x68] sm:$0xff]
    %v3340 = vld [vmem:[#allocation7 + $0x70] sm:$0xff]
    %v3341 = vld [vmem:[#allocation7 + $0x78] sm:$0xff]
    %v3342 = vld [vmem:[#allocation7 + $0x80] sm:$0xff]
    %v3343 = vld [vmem:[#allocation7 + $0x88] sm:$0xff]
    %v3344 = vld [vmem:[#allocation7 + $0x90] sm:$0xff]
    %v3345 = vld [vmem:[#allocation7 + $0x98] sm:$0xff]
    %v3346 = vld [vmem:[#allocation7 + $0xa0] sm:$0xff]
    %v3347 = vld [vmem:[#allocation7 + $0xa8] sm:$0xff]
    %v3348 = vld [vmem:[#allocation7 + $0xb0] sm:$0xff]
    %v3349 = vld [vmem:[#allocation7 + $0xb8] sm:$0xff]
    %v3350 = vld [vmem:[#allocation7 + $0xc0] sm:$0xff]
    %v3351 = vld [vmem:[#allocation7 + $0xc8] sm:$0xff]
    %v3352 = vld [vmem:[#allocation7 + $0xd0] sm:$0xff]
    %v3353 = vld [vmem:[#allocation7 + $0xd8] sm:$0xff]
    %v3354 = vld [vmem:[#allocation7 + $0xe0] sm:$0xff]
    %v3355 = vld [vmem:[#allocation7 + $0xe8] sm:$0xff]
    %v3356 = vld [vmem:[#allocation7 + $0xf0] sm:$0xff]
    %v3357 = vld [vmem:[#allocation7 + $0xf8] sm:$0xff]
    %v3358 = vld [vmem:[#allocation7 + $0x100] sm:$0xff]
    %v3359 = vld [vmem:[#allocation7 + $0x108] sm:$0xff]
    %v3360 = vld [vmem:[#allocation7 + $0x110] sm:$0xff]
    %v3361 = vld [vmem:[#allocation7 + $0x118] sm:$0xff]
    %v3362 = vld [vmem:[#allocation7 + $0x120] sm:$0xff]
    %v3363 = vld [vmem:[#allocation7 + $0x128] sm:$0xff]
    %v3364 = vld [vmem:[#allocation7 + $0x130] sm:$0xff]
    %v3365 = vld [vmem:[#allocation7 + $0x138] sm:$0xff]
    %v3366 = vld [vmem:[#allocation7 + $0x140] sm:$0xff]
    %v3367 = vld [vmem:[#allocation7 + $0x148] sm:$0xff]
    %v3368 = vld [vmem:[#allocation7 + $0x150] sm:$0xff]
    %v3369 = vld [vmem:[#allocation7 + $0x158] sm:$0xff]
    %v3370 = vld [vmem:[#allocation7 + $0x160] sm:$0xff]
    %v3371 = vld [vmem:[#allocation7 + $0x168] sm:$0xff]
    %v3372 = vld [vmem:[#allocation7 + $0x170] sm:$0xff]
    %v3373 = vld [vmem:[#allocation7 + $0x178] sm:$0xff]
    %v3374 = vld [vmem:[#allocation7 + $0x180] sm:$0xff]
    %v3375 = vld [vmem:[#allocation7 + $0x188] sm:$0xff]
    %v3376 = vld [vmem:[#allocation7 + $0x190] sm:$0xff]
    %v3377 = vld [vmem:[#allocation7 + $0x198] sm:$0xff]
    %v3378 = vld [vmem:[#allocation7 + $0x1a0] sm:$0xff]
    %v3379 = vld [vmem:[#allocation7 + $0x1a8] sm:$0xff]
    %v3380 = vld [vmem:[#allocation7 + $0x1b0] sm:$0xff]
    %v3381 = vld [vmem:[#allocation7 + $0x1b8] sm:$0xff]
    %v3382 = vld [vmem:[#allocation7 + $0x1c0] sm:$0xff]
    %v3383 = vld [vmem:[#allocation7 + $0x1c8] sm:$0xff]
    %v3384 = vld [vmem:[#allocation7 + $0x1d0] sm:$0xff]
    %v3385 = vld [vmem:[#allocation7 + $0x1d8] sm:$0xff]
    %v3386 = vld [vmem:[#allocation7 + $0x1e0] sm:$0xff]
    %v3387 = vld [vmem:[#allocation7 + $0x1e8] sm:$0xff]
    %v3388 = vld [vmem:[#allocation7 + $0x1f0] sm:$0xff]
    %v3389 = vld [vmem:[#allocation7 + $0x1f8] sm:$0xff]
    %v3390 = vld [vmem:[#allocation7 + $0x200] sm:$0xff]
    %v3391 = vld [vmem:[#allocation7 + $0x208] sm:$0xff]
    %v3392 = vld [vmem:[#allocation7 + $0x210] sm:$0xff]
    %v3393 = vld [vmem:[#allocation7 + $0x218] sm:$0xff]
    %v3394 = vld [vmem:[#allocation7 + $0x220] sm:$0xff]
    %v3395 = vld [vmem:[#allocation7 + $0x228] sm:$0xff]
    %v3396 = vld [vmem:[#allocation7 + $0x230] sm:$0xff]
    %v3397 = vld [vmem:[#allocation7 + $0x238] sm:$0xff]
    %v3398 = vld [vmem:[#allocation7 + $0x240] sm:$0xff]
    %v3399 = vld [vmem:[#allocation7 + $0x248] sm:$0xff]
    %v3400 = vld [vmem:[#allocation7 + $0x250] sm:$0xff]
    %v3401 = vld [vmem:[#allocation7 + $0x258] sm:$0xff]
    %v3402 = vld [vmem:[#allocation7 + $0x260] sm:$0xff]
    %v3403 = vld [vmem:[#allocation7 + $0x268] sm:$0xff]
    %v3404 = vld [vmem:[#allocation7 + $0x270] sm:$0xff]
    %v3405 = vld [vmem:[#allocation7 + $0x278] sm:$0xff]
    %v3406 = vld [vmem:[#allocation7 + $0x280] sm:$0xff]
    %v3407 = vld [vmem:[#allocation7 + $0x288] sm:$0xff]
    %v3408 = vld [vmem:[#allocation7 + $0x290] sm:$0xff]
    %v3409 = vld [vmem:[#allocation7 + $0x298] sm:$0xff]
    %v3410 = vld [vmem:[#allocation7 + $0x2a0] sm:$0xff]
    %v3411 = vld [vmem:[#allocation7 + $0x2a8] sm:$0xff]
    %v3412 = vld [vmem:[#allocation7 + $0x2b0] sm:$0xff]
    %v3413 = vld [vmem:[#allocation7 + $0x2b8] sm:$0xff]
    %v3414 = vld [vmem:[#allocation7 + $0x2c0] sm:$0xff]
    %v3415 = vld [vmem:[#allocation7 + $0x2c8] sm:$0xff]
    %v3416 = vld [vmem:[#allocation7 + $0x2d0] sm:$0xff]
    %v3417 = vld [vmem:[#allocation7 + $0x2d8] sm:$0xff]
    %v3418 = vld [vmem:[#allocation7 + $0x2e0] sm:$0xff]
    %v3419 = vld [vmem:[#allocation7 + $0x2e8] sm:$0xff]
    %v3420 = vld [vmem:[#allocation7 + $0x2f0] sm:$0xff]
    %v3421 = vld [vmem:[#allocation7 + $0x2f8] sm:$0xff]
    %v3422 = vld [vmem:[#allocation7 + $0x300] sm:$0xff]
    %v3423 = vld [vmem:[#allocation7 + $0x308] sm:$0xff]
    %v3424 = vld [vmem:[#allocation7 + $0x310] sm:$0xff]
    %v3425 = vld [vmem:[#allocation7 + $0x318] sm:$0xff]
    %v3426 = vld [vmem:[#allocation7 + $0x320] sm:$0xff]
    %v3427 = vld [vmem:[#allocation7 + $0x328] sm:$0xff]
    %v3428 = vld [vmem:[#allocation7 + $0x330] sm:$0xff]
    %v3429 = vld [vmem:[#allocation7 + $0x338] sm:$0xff]
    %v3430 = vld [vmem:[#allocation7 + $0x340] sm:$0xff]
    %v3431 = vld [vmem:[#allocation7 + $0x348] sm:$0xff]
    %v3432 = vld [vmem:[#allocation7 + $0x350] sm:$0xff]
    %v3433 = vld [vmem:[#allocation7 + $0x358] sm:$0xff]
    %v3434 = vld [vmem:[#allocation7 + $0x360] sm:$0xff]
    %v3435 = vld [vmem:[#allocation7 + $0x368] sm:$0xff]
    %v3436 = vld [vmem:[#allocation7 + $0x370] sm:$0xff]
    %v3437 = vld [vmem:[#allocation7 + $0x378] sm:$0xff]
    %v3438 = vld [vmem:[#allocation7 + $0x380] sm:$0xff]
    %v3439 = vld [vmem:[#allocation7 + $0x388] sm:$0xff]
    %v3440 = vld [vmem:[#allocation7 + $0x390] sm:$0xff]
    %v3441 = vld [vmem:[#allocation7 + $0x398] sm:$0xff]
    %v3442 = vld [vmem:[#allocation7 + $0x3a0] sm:$0xff]
    %v3443 = vld [vmem:[#allocation7 + $0x3a8] sm:$0xff]
    %v3444 = vld [vmem:[#allocation7 + $0x3b0] sm:$0xff]
    %v3445 = vld [vmem:[#allocation7 + $0x3b8] sm:$0xff]
    %v3446 = vld [vmem:[#allocation7 + $0x3c0] sm:$0xff]
    %v3447 = vld [vmem:[#allocation7 + $0x3c8] sm:$0xff]
    %v3448 = vld [vmem:[#allocation7 + $0x3d0] sm:$0xff]
    %v3449 = vld [vmem:[#allocation7 + $0x3d8] sm:$0xff]
    %v3450 = vld [vmem:[#allocation7 + $0x3e0] sm:$0xff]
    %v3451 = vld [vmem:[#allocation7 + $0x3e8] sm:$0xff]
    %v3452 = vld [vmem:[#allocation7 + $0x3f0] sm:$0xff]
    %v3453 = vld [vmem:[#allocation7 + $0x3f8] sm:$0xff]
    %v3454 = vld [vmem:[#allocation7 + $0x400] sm:$0xff]
    %v3455 = vld [vmem:[#allocation7 + $0x408] sm:$0xff]
    %v3456 = vld [vmem:[#allocation7 + $0x410] sm:$0xff]
    %v3457 = vld [vmem:[#allocation7 + $0x418] sm:$0xff]
    %v3458 = vld [vmem:[#allocation7 + $0x420] sm:$0xff]
    %v3459 = vld [vmem:[#allocation7 + $0x428] sm:$0xff]
    %v3460 = vld [vmem:[#allocation7 + $0x430] sm:$0xff]
    %v3461 = vld [vmem:[#allocation7 + $0x438] sm:$0xff]
    %v3462 = vld [vmem:[#allocation7 + $0x440] sm:$0xff]
    %v3463 = vld [vmem:[#allocation7 + $0x448] sm:$0xff]
    %v3464 = vld [vmem:[#allocation7 + $0x450] sm:$0xff]
    %v3465 = vld [vmem:[#allocation7 + $0x458] sm:$0xff]
    %v3466 = vld [vmem:[#allocation7 + $0x460] sm:$0xff]
    %v3467 = vld [vmem:[#allocation7 + $0x468] sm:$0xff]
    %v3468 = vld [vmem:[#allocation7 + $0x470] sm:$0xff]
    %v3469 = vld [vmem:[#allocation7 + $0x478] sm:$0xff]
    %v3470 = vld [vmem:[#allocation7 + $0x480] sm:$0xff]
    %v3471 = vld [vmem:[#allocation7 + $0x488] sm:$0xff]
    %v3472 = vld [vmem:[#allocation7 + $0x490] sm:$0xff]
    %v3473 = vld [vmem:[#allocation7 + $0x498] sm:$0xff]
    %v3474 = vld [vmem:[#allocation7 + $0x4a0] sm:$0xff]
    %v3475 = vld [vmem:[#allocation7 + $0x4a8] sm:$0xff]
    %v3476 = vld [vmem:[#allocation7 + $0x4b0] sm:$0xff]
    %v3477 = vld [vmem:[#allocation7 + $0x4b8] sm:$0xff]
    %v3478 = vld [vmem:[#allocation7 + $0x4c0] sm:$0xff]
    %v3479 = vld [vmem:[#allocation7 + $0x4c8] sm:$0xff]
    %v3480 = vld [vmem:[#allocation7 + $0x4d0] sm:$0xff]
    %v3481 = vld [vmem:[#allocation7 + $0x4d8] sm:$0xff]
    %v3482 = vld [vmem:[#allocation7 + $0x4e0] sm:$0xff]
    %v3483 = vld [vmem:[#allocation7 + $0x4e8] sm:$0xff]
    %v3484 = vld [vmem:[#allocation7 + $0x4f0] sm:$0xff]
    %v3485 = vld [vmem:[#allocation7 + $0x4f8] sm:$0xff]
    %v3486 = vld [vmem:[#allocation7 + $0x500] sm:$0xff]
    %v3487 = vld [vmem:[#allocation7 + $0x508] sm:$0xff]
    %v3488 = vld [vmem:[#allocation7 + $0x510] sm:$0xff]
    %v3489 = vld [vmem:[#allocation7 + $0x518] sm:$0xff]
    %v3490 = vld [vmem:[#allocation7 + $0x520] sm:$0xff]
    %v3491 = vld [vmem:[#allocation7 + $0x528] sm:$0xff]
    %v3492 = vld [vmem:[#allocation7 + $0x530] sm:$0xff]
    %v3493 = vld [vmem:[#allocation7 + $0x538] sm:$0xff]
    %v3494 = vld [vmem:[#allocation7 + $0x540] sm:$0xff]
    %v3495 = vld [vmem:[#allocation7 + $0x548] sm:$0xff]
    %v3496 = vld [vmem:[#allocation7 + $0x550] sm:$0xff]
    %v3497 = vld [vmem:[#allocation7 + $0x558] sm:$0xff]
    %v3498 = vld [vmem:[#allocation7 + $0x560] sm:$0xff]
    %v3499 = vld [vmem:[#allocation7 + $0x568] sm:$0xff]
    %v3500 = vld [vmem:[#allocation7 + $0x570] sm:$0xff]
    %v3501 = vld [vmem:[#allocation7 + $0x578] sm:$0xff]
    %v3502 = vld [vmem:[#allocation7 + $0x580] sm:$0xff]
    %v3503 = vld [vmem:[#allocation7 + $0x588] sm:$0xff]
    %v3504 = vld [vmem:[#allocation7 + $0x590] sm:$0xff]
    %v3505 = vld [vmem:[#allocation7 + $0x598] sm:$0xff]
    %v3506 = vld [vmem:[#allocation7 + $0x5a0] sm:$0xff]
    %v3507 = vld [vmem:[#allocation7 + $0x5a8] sm:$0xff]
    %v3508 = vld [vmem:[#allocation7 + $0x5b0] sm:$0xff]
    %v3509 = vld [vmem:[#allocation7 + $0x5b8] sm:$0xff]
    %v3510 = vld [vmem:[#allocation7 + $0x5c0] sm:$0xff]
    %v3511 = vld [vmem:[#allocation7 + $0x5c8] sm:$0xff]
    %v3512 = vld [vmem:[#allocation7 + $0x5d0] sm:$0xff]
    %v3513 = vld [vmem:[#allocation7 + $0x5d8] sm:$0xff]
    %v3514 = vld [vmem:[#allocation7 + $0x5e0] sm:$0xff]
    %v3515 = vld [vmem:[#allocation7 + $0x5e8] sm:$0xff]
    %v3516 = vld [vmem:[#allocation7 + $0x5f0] sm:$0xff]
    %v3517 = vld [vmem:[#allocation7 + $0x5f8] sm:$0xff]
    %v3518 = vld [vmem:[#allocation7 + $0x600] sm:$0xff]
    %v3519 = vld [vmem:[#allocation7 + $0x608] sm:$0xff]
    %v3520 = vld [vmem:[#allocation7 + $0x610] sm:$0xff]
    %v3521 = vld [vmem:[#allocation7 + $0x618] sm:$0xff]
    %v3522 = vld [vmem:[#allocation7 + $0x620] sm:$0xff]
    %v3523 = vld [vmem:[#allocation7 + $0x628] sm:$0xff]
    %v3524 = vld [vmem:[#allocation7 + $0x630] sm:$0xff]
    %v3525 = vld [vmem:[#allocation7 + $0x638] sm:$0xff]
    %v3526 = vld [vmem:[#allocation7 + $0x640] sm:$0xff]
    %v3527 = vld [vmem:[#allocation7 + $0x648] sm:$0xff]
    %v3528 = vld [vmem:[#allocation7 + $0x650] sm:$0xff]
    %v3529 = vld [vmem:[#allocation7 + $0x658] sm:$0xff]
    %v3530 = vld [vmem:[#allocation7 + $0x660] sm:$0xff]
    %v3531 = vld [vmem:[#allocation7 + $0x668] sm:$0xff]
    %v3532 = vld [vmem:[#allocation7 + $0x670] sm:$0xff]
    %v3533 = vld [vmem:[#allocation7 + $0x678] sm:$0xff]
    %v3534 = vld [vmem:[#allocation7 + $0x680] sm:$0xff]
    %v3535 = vld [vmem:[#allocation7 + $0x688] sm:$0xff]
    %v3536 = vld [vmem:[#allocation7 + $0x690] sm:$0xff]
    %v3537 = vld [vmem:[#allocation7 + $0x698] sm:$0xff]
    %v3538 = vld [vmem:[#allocation7 + $0x6a0] sm:$0xff]
    %v3539 = vld [vmem:[#allocation7 + $0x6a8] sm:$0xff]
    %v3540 = vld [vmem:[#allocation7 + $0x6b0] sm:$0xff]
    %v3541 = vld [vmem:[#allocation7 + $0x6b8] sm:$0xff]
    %v3542 = vld [vmem:[#allocation7 + $0x6c0] sm:$0xff]
    %v3543 = vld [vmem:[#allocation7 + $0x6c8] sm:$0xff]
    %v3544 = vld [vmem:[#allocation7 + $0x6d0] sm:$0xff]
    %v3545 = vld [vmem:[#allocation7 + $0x6d8] sm:$0xff]
    %v3546 = vld [vmem:[#allocation7 + $0x6e0] sm:$0xff]
    %v3547 = vld [vmem:[#allocation7 + $0x6e8] sm:$0xff]
    %v3548 = vld [vmem:[#allocation7 + $0x6f0] sm:$0xff]
    %v3549 = vld [vmem:[#allocation7 + $0x6f8] sm:$0xff]
    %v3550 = vld [vmem:[#allocation7 + $0x700] sm:$0xff]
    %v3551 = vld [vmem:[#allocation7 + $0x708] sm:$0xff]
    %v3552 = vld [vmem:[#allocation7 + $0x710] sm:$0xff]
    %v3553 = vld [vmem:[#allocation7 + $0x718] sm:$0xff]
    %v3554 = vld [vmem:[#allocation7 + $0x720] sm:$0xff]
    %v3555 = vld [vmem:[#allocation7 + $0x728] sm:$0xff]
    %v3556 = vld [vmem:[#allocation7 + $0x730] sm:$0xff]
    %v3557 = vld [vmem:[#allocation7 + $0x738] sm:$0xff]
    %v3558 = vld [vmem:[#allocation7 + $0x740] sm:$0xff]
    %v3559 = vld [vmem:[#allocation7 + $0x748] sm:$0xff]
    %v3560 = vld [vmem:[#allocation7 + $0x750] sm:$0xff]
    %v3561 = vld [vmem:[#allocation7 + $0x758] sm:$0xff]
    %v3562 = vld [vmem:[#allocation7 + $0x760] sm:$0xff]
    %v3563 = vld [vmem:[#allocation7 + $0x768] sm:$0xff]
    %v3564 = vld [vmem:[#allocation7 + $0x770] sm:$0xff]
    %v3565 = vld [vmem:[#allocation7 + $0x778] sm:$0xff]
    %v3566 = vld [vmem:[#allocation7 + $0x780] sm:$0xff]
    %v3567 = vld [vmem:[#allocation7 + $0x788] sm:$0xff]
    %v3568 = vld [vmem:[#allocation7 + $0x790] sm:$0xff]
    %v3569 = vld [vmem:[#allocation7 + $0x798] sm:$0xff]
    %v3570 = vld [vmem:[#allocation7 + $0x7a0] sm:$0xff]
    %v3571 = vld [vmem:[#allocation7 + $0x7a8] sm:$0xff]
    %v3572 = vld [vmem:[#allocation7 + $0x7b0] sm:$0xff]
    %v3573 = vld [vmem:[#allocation7 + $0x7b8] sm:$0xff]
    %v3574 = vld [vmem:[#allocation7 + $0x7c0] sm:$0xff]
    %v3575 = vld [vmem:[#allocation7 + $0x7c8] sm:$0xff]
    %v3576 = vld [vmem:[#allocation7 + $0x7d0] sm:$0xff]
    %v3577 = vld [vmem:[#allocation7 + $0x7d8] sm:$0xff]
    %v3578 = vld [vmem:[#allocation7 + $0x7e0] sm:$0xff]
    %v3579 = vld [vmem:[#allocation7 + $0x7e8] sm:$0xff]
    %v3580 = vld [vmem:[#allocation7 + $0x7f0] sm:$0xff]
    %v3581 = vld [vmem:[#allocation7 + $0x7f8] sm:$0xff]
    %v3582 = vld [vmem:[#allocation8] sm:$0xf]
    %v3584 = vperm.slane %v3582, 0
    %v3585 = vperm.slane %v3582, 1
    %v3586 = vperm.slane %v3582, 2
    %v3587 = vperm.slane %v3582, 3
    %v3848 = vunpack.c.l.b16 %v3326
    %v3849 = vunpack.c.h.b16 %v3326
    %v3850 = vunpack.c.l.b16 %v3327
    %v3851 = vunpack.c.h.b16 %v3327
    %v3852 = vunpack.c.l.b16 %v3328
    %v3853 = vunpack.c.h.b16 %v3328
    %v3854 = vunpack.c.l.b16 %v3329
    %v3855 = vunpack.c.h.b16 %v3329
    %v3856 = vunpack.c.l.b16 %v3330
    %v3857 = vunpack.c.h.b16 %v3330
    %v3858 = vunpack.c.l.b16 %v3331
    %v3859 = vunpack.c.h.b16 %v3331
    %v3860 = vunpack.c.l.b16 %v3332
    %v3861 = vunpack.c.h.b16 %v3332
    %v3862 = vunpack.c.l.b16 %v3333
    %v3863 = vunpack.c.h.b16 %v3333
    %v3864 = vunpack.c.l.b16 %v3334
    %v3865 = vunpack.c.h.b16 %v3334
    %v3866 = vunpack.c.l.b16 %v3335
    %v3867 = vunpack.c.h.b16 %v3335
    %v3868 = vunpack.c.l.b16 %v3336
    %v3869 = vunpack.c.h.b16 %v3336
    %v3870 = vunpack.c.l.b16 %v3337
    %v3871 = vunpack.c.h.b16 %v3337
    %v3872 = vunpack.c.l.b16 %v3338
    %v3873 = vunpack.c.h.b16 %v3338
    %v3874 = vunpack.c.l.b16 %v3339
    %v3875 = vunpack.c.h.b16 %v3339
    %v3876 = vunpack.c.l.b16 %v3340
    %v3877 = vunpack.c.h.b16 %v3340
    %v3878 = vunpack.c.l.b16 %v3341
    %v3879 = vunpack.c.h.b16 %v3341
    %v3880 = vunpack.c.l.b16 %v3342
    %v3881 = vunpack.c.h.b16 %v3342
    %v3882 = vunpack.c.l.b16 %v3343
    %v3883 = vunpack.c.h.b16 %v3343
    %v3884 = vunpack.c.l.b16 %v3344
    %v3885 = vunpack.c.h.b16 %v3344
    %v3886 = vunpack.c.l.b16 %v3345
    %v3887 = vunpack.c.h.b16 %v3345
    %v3888 = vunpack.c.l.b16 %v3346
    %v3889 = vunpack.c.h.b16 %v3346
    %v3890 = vunpack.c.l.b16 %v3347
    %v3891 = vunpack.c.h.b16 %v3347
    %v3892 = vunpack.c.l.b16 %v3348
    %v3893 = vunpack.c.h.b16 %v3348
    %v3894 = vunpack.c.l.b16 %v3349
    %v3895 = vunpack.c.h.b16 %v3349
    %v3896 = vunpack.c.l.b16 %v3350
    %v3897 = vunpack.c.h.b16 %v3350
    %v3898 = vunpack.c.l.b16 %v3351
    %v3899 = vunpack.c.h.b16 %v3351
    %v3900 = vunpack.c.l.b16 %v3352
    %v3901 = vunpack.c.h.b16 %v3352
    %v3902 = vunpack.c.l.b16 %v3353
    %v3903 = vunpack.c.h.b16 %v3353
    %v3904 = vunpack.c.l.b16 %v3354
    %v3905 = vunpack.c.h.b16 %v3354
    %v3906 = vunpack.c.l.b16 %v3355
    %v3907 = vunpack.c.h.b16 %v3355
    %v3908 = vunpack.c.l.b16 %v3356
    %v3909 = vunpack.c.h.b16 %v3356
    %v3910 = vunpack.c.l.b16 %v3357
    %v3911 = vunpack.c.h.b16 %v3357
    %v3912 = vunpack.c.l.b16 %v3358
    %v3913 = vunpack.c.h.b16 %v3358
    %v3914 = vunpack.c.l.b16 %v3359
    %v3915 = vunpack.c.h.b16 %v3359
    %v3916 = vunpack.c.l.b16 %v3360
    %v3917 = vunpack.c.h.b16 %v3360
    %v3918 = vunpack.c.l.b16 %v3361
    %v3919 = vunpack.c.h.b16 %v3361
    %v3920 = vunpack.c.l.b16 %v3362
    %v3921 = vunpack.c.h.b16 %v3362
    %v3922 = vunpack.c.l.b16 %v3363
    %v3923 = vunpack.c.h.b16 %v3363
    %v3924 = vunpack.c.l.b16 %v3364
    %v3925 = vunpack.c.h.b16 %v3364
    %v3926 = vunpack.c.l.b16 %v3365
    %v3927 = vunpack.c.h.b16 %v3365
    %v3928 = vunpack.c.l.b16 %v3366
    %v3929 = vunpack.c.h.b16 %v3366
    %v3930 = vunpack.c.l.b16 %v3367
    %v3931 = vunpack.c.h.b16 %v3367
    %v3932 = vunpack.c.l.b16 %v3368
    %v3933 = vunpack.c.h.b16 %v3368
    %v3934 = vunpack.c.l.b16 %v3369
    %v3935 = vunpack.c.h.b16 %v3369
    %v3936 = vunpack.c.l.b16 %v3370
    %v3937 = vunpack.c.h.b16 %v3370
    %v3938 = vunpack.c.l.b16 %v3371
    %v3939 = vunpack.c.h.b16 %v3371
    %v3940 = vunpack.c.l.b16 %v3372
    %v3941 = vunpack.c.h.b16 %v3372
    %v3942 = vunpack.c.l.b16 %v3373
    %v3943 = vunpack.c.h.b16 %v3373
    %v3944 = vunpack.c.l.b16 %v3374
    %v3945 = vunpack.c.h.b16 %v3374
    %v3946 = vunpack.c.l.b16 %v3375
    %v3947 = vunpack.c.h.b16 %v3375
    %v3948 = vunpack.c.l.b16 %v3376
    %v3949 = vunpack.c.h.b16 %v3376
    %v3950 = vunpack.c.l.b16 %v3377
    %v3951 = vunpack.c.h.b16 %v3377
    %v3952 = vunpack.c.l.b16 %v3378
    %v3953 = vunpack.c.h.b16 %v3378
    %v3954 = vunpack.c.l.b16 %v3379
    %v3955 = vunpack.c.h.b16 %v3379
    %v3956 = vunpack.c.l.b16 %v3380
    %v3957 = vunpack.c.h.b16 %v3380
    %v3958 = vunpack.c.l.b16 %v3381
    %v3959 = vunpack.c.h.b16 %v3381
    %v3960 = vunpack.c.l.b16 %v3382
    %v3961 = vunpack.c.h.b16 %v3382
    %v3962 = vunpack.c.l.b16 %v3383
    %v3963 = vunpack.c.h.b16 %v3383
    %v3964 = vunpack.c.l.b16 %v3384
    %v3965 = vunpack.c.h.b16 %v3384
    %v3966 = vunpack.c.l.b16 %v3385
    %v3967 = vunpack.c.h.b16 %v3385
    %v3968 = vunpack.c.l.b16 %v3386
    %v3969 = vunpack.c.h.b16 %v3386
    %v3970 = vunpack.c.l.b16 %v3387
    %v3971 = vunpack.c.h.b16 %v3387
    %v3972 = vunpack.c.l.b16 %v3388
    %v3973 = vunpack.c.h.b16 %v3388
    %v3974 = vunpack.c.l.b16 %v3389
    %v3975 = vunpack.c.h.b16 %v3389
    %v3976 = vunpack.c.l.b16 %v3390
    %v3977 = vunpack.c.h.b16 %v3390
    %v3978 = vunpack.c.l.b16 %v3391
    %v3979 = vunpack.c.h.b16 %v3391
    %v3980 = vunpack.c.l.b16 %v3392
    %v3981 = vunpack.c.h.b16 %v3392
    %v3982 = vunpack.c.l.b16 %v3393
    %v3983 = vunpack.c.h.b16 %v3393
    %v3984 = vunpack.c.l.b16 %v3394
    %v3985 = vunpack.c.h.b16 %v3394
    %v3986 = vunpack.c.l.b16 %v3395
    %v3987 = vunpack.c.h.b16 %v3395
    %v3988 = vunpack.c.l.b16 %v3396
    %v3989 = vunpack.c.h.b16 %v3396
    %v3990 = vunpack.c.l.b16 %v3397
    %v3991 = vunpack.c.h.b16 %v3397
    %v3992 = vunpack.c.l.b16 %v3398
    %v3993 = vunpack.c.h.b16 %v3398
    %v3994 = vunpack.c.l.b16 %v3399
    %v3995 = vunpack.c.h.b16 %v3399
    %v3996 = vunpack.c.l.b16 %v3400
    %v3997 = vunpack.c.h.b16 %v3400
    %v3998 = vunpack.c.l.b16 %v3401
    %v3999 = vunpack.c.h.b16 %v3401
    %v4000 = vunpack.c.l.b16 %v3402
    %v4001 = vunpack.c.h.b16 %v3402
    %v4002 = vunpack.c.l.b16 %v3403
    %v4003 = vunpack.c.h.b16 %v3403
    %v4004 = vunpack.c.l.b16 %v3404
    %v4005 = vunpack.c.h.b16 %v3404
    %v4006 = vunpack.c.l.b16 %v3405
    %v4007 = vunpack.c.h.b16 %v3405
    %v4008 = vunpack.c.l.b16 %v3406
    %v4009 = vunpack.c.h.b16 %v3406
    %v4010 = vunpack.c.l.b16 %v3407
    %v4011 = vunpack.c.h.b16 %v3407
    %v4012 = vunpack.c.l.b16 %v3408
    %v4013 = vunpack.c.h.b16 %v3408
    %v4014 = vunpack.c.l.b16 %v3409
    %v4015 = vunpack.c.h.b16 %v3409
    %v4016 = vunpack.c.l.b16 %v3410
    %v4017 = vunpack.c.h.b16 %v3410
    %v4018 = vunpack.c.l.b16 %v3411
    %v4019 = vunpack.c.h.b16 %v3411
    %v4020 = vunpack.c.l.b16 %v3412
    %v4021 = vunpack.c.h.b16 %v3412
    %v4022 = vunpack.c.l.b16 %v3413
    %v4023 = vunpack.c.h.b16 %v3413
    %v4024 = vunpack.c.l.b16 %v3414
    %v4025 = vunpack.c.h.b16 %v3414
    %v4026 = vunpack.c.l.b16 %v3415
    %v4027 = vunpack.c.h.b16 %v3415
    %v4028 = vunpack.c.l.b16 %v3416
    %v4029 = vunpack.c.h.b16 %v3416
    %v4030 = vunpack.c.l.b16 %v3417
    %v4031 = vunpack.c.h.b16 %v3417
    %v4032 = vunpack.c.l.b16 %v3418
    %v4033 = vunpack.c.h.b16 %v3418
    %v4034 = vunpack.c.l.b16 %v3419
    %v4035 = vunpack.c.h.b16 %v3419
    %v4036 = vunpack.c.l.b16 %v3420
    %v4037 = vunpack.c.h.b16 %v3420
    %v4038 = vunpack.c.l.b16 %v3421
    %v4039 = vunpack.c.h.b16 %v3421
    %v4040 = vunpack.c.l.b16 %v3422
    %v4041 = vunpack.c.h.b16 %v3422
    %v4042 = vunpack.c.l.b16 %v3423
    %v4043 = vunpack.c.h.b16 %v3423
    %v4044 = vunpack.c.l.b16 %v3424
    %v4045 = vunpack.c.h.b16 %v3424
    %v4046 = vunpack.c.l.b16 %v3425
    %v4047 = vunpack.c.h.b16 %v3425
    %v4048 = vunpack.c.l.b16 %v3426
    %v4049 = vunpack.c.h.b16 %v3426
    %v4050 = vunpack.c.l.b16 %v3427
    %v4051 = vunpack.c.h.b16 %v3427
    %v4052 = vunpack.c.l.b16 %v3428
    %v4053 = vunpack.c.h.b16 %v3428
    %v4054 = vunpack.c.l.b16 %v3429
    %v4055 = vunpack.c.h.b16 %v3429
    %v4056 = vunpack.c.l.b16 %v3430
    %v4057 = vunpack.c.h.b16 %v3430
    %v4058 = vunpack.c.l.b16 %v3431
    %v4059 = vunpack.c.h.b16 %v3431
    %v4060 = vunpack.c.l.b16 %v3432
    %v4061 = vunpack.c.h.b16 %v3432
    %v4062 = vunpack.c.l.b16 %v3433
    %v4063 = vunpack.c.h.b16 %v3433
    %v4064 = vunpack.c.l.b16 %v3434
    %v4065 = vunpack.c.h.b16 %v3434
    %v4066 = vunpack.c.l.b16 %v3435
    %v4067 = vunpack.c.h.b16 %v3435
    %v4068 = vunpack.c.l.b16 %v3436
    %v4069 = vunpack.c.h.b16 %v3436
    %v4070 = vunpack.c.l.b16 %v3437
    %v4071 = vunpack.c.h.b16 %v3437
    %v4072 = vunpack.c.l.b16 %v3438
    %v4073 = vunpack.c.h.b16 %v3438
    %v4074 = vunpack.c.l.b16 %v3439
    %v4075 = vunpack.c.h.b16 %v3439
    %v4076 = vunpack.c.l.b16 %v3440
    %v4077 = vunpack.c.h.b16 %v3440
    %v4078 = vunpack.c.l.b16 %v3441
    %v4079 = vunpack.c.h.b16 %v3441
    %v4080 = vunpack.c.l.b16 %v3442
    %v4081 = vunpack.c.h.b16 %v3442
    %v4082 = vunpack.c.l.b16 %v3443
    %v4083 = vunpack.c.h.b16 %v3443
    %v4084 = vunpack.c.l.b16 %v3444
    %v4085 = vunpack.c.h.b16 %v3444
    %v4086 = vunpack.c.l.b16 %v3445
    %v4087 = vunpack.c.h.b16 %v3445
    %v4088 = vunpack.c.l.b16 %v3446
    %v4089 = vunpack.c.h.b16 %v3446
    %v4090 = vunpack.c.l.b16 %v3447
    %v4091 = vunpack.c.h.b16 %v3447
    %v4092 = vunpack.c.l.b16 %v3448
    %v4093 = vunpack.c.h.b16 %v3448
    %v4094 = vunpack.c.l.b16 %v3449
    %v4095 = vunpack.c.h.b16 %v3449
    %v4096 = vunpack.c.l.b16 %v3450
    %v4097 = vunpack.c.h.b16 %v3450
    %v4098 = vunpack.c.l.b16 %v3451
    %v4099 = vunpack.c.h.b16 %v3451
    %v4100 = vunpack.c.l.b16 %v3452
    %v4101 = vunpack.c.h.b16 %v3452
    %v4102 = vunpack.c.l.b16 %v3453
    %v4103 = vunpack.c.h.b16 %v3453
    %v4104 = vunpack.c.l.b16 %v3454
    %v4105 = vunpack.c.h.b16 %v3454
    %v4106 = vunpack.c.l.b16 %v3455
    %v4107 = vunpack.c.h.b16 %v3455
    %v4108 = vunpack.c.l.b16 %v3456
    %v4109 = vunpack.c.h.b16 %v3456
    %v4110 = vunpack.c.l.b16 %v3457
    %v4111 = vunpack.c.h.b16 %v3457
    %v4112 = vunpack.c.l.b16 %v3458
    %v4113 = vunpack.c.h.b16 %v3458
    %v4114 = vunpack.c.l.b16 %v3459
    %v4115 = vunpack.c.h.b16 %v3459
    %v4116 = vunpack.c.l.b16 %v3460
    %v4117 = vunpack.c.h.b16 %v3460
    %v4118 = vunpack.c.l.b16 %v3461
    %v4119 = vunpack.c.h.b16 %v3461
    %v4120 = vunpack.c.l.b16 %v3462
    %v4121 = vunpack.c.h.b16 %v3462
    %v4122 = vunpack.c.l.b16 %v3463
    %v4123 = vunpack.c.h.b16 %v3463
    %v4124 = vunpack.c.l.b16 %v3464
    %v4125 = vunpack.c.h.b16 %v3464
    %v4126 = vunpack.c.l.b16 %v3465
    %v4127 = vunpack.c.h.b16 %v3465
    %v4128 = vunpack.c.l.b16 %v3466
    %v4129 = vunpack.c.h.b16 %v3466
    %v4130 = vunpack.c.l.b16 %v3467
    %v4131 = vunpack.c.h.b16 %v3467
    %v4132 = vunpack.c.l.b16 %v3468
    %v4133 = vunpack.c.h.b16 %v3468
    %v4134 = vunpack.c.l.b16 %v3469
    %v4135 = vunpack.c.h.b16 %v3469
    %v4136 = vunpack.c.l.b16 %v3470
    %v4137 = vunpack.c.h.b16 %v3470
    %v4138 = vunpack.c.l.b16 %v3471
    %v4139 = vunpack.c.h.b16 %v3471
    %v4140 = vunpack.c.l.b16 %v3472
    %v4141 = vunpack.c.h.b16 %v3472
    %v4142 = vunpack.c.l.b16 %v3473
    %v4143 = vunpack.c.h.b16 %v3473
    %v4144 = vunpack.c.l.b16 %v3474
    %v4145 = vunpack.c.h.b16 %v3474
    %v4146 = vunpack.c.l.b16 %v3475
    %v4147 = vunpack.c.h.b16 %v3475
    %v4148 = vunpack.c.l.b16 %v3476
    %v4149 = vunpack.c.h.b16 %v3476
    %v4150 = vunpack.c.l.b16 %v3477
    %v4151 = vunpack.c.h.b16 %v3477
    %v4152 = vunpack.c.l.b16 %v3478
    %v4153 = vunpack.c.h.b16 %v3478
    %v4154 = vunpack.c.l.b16 %v3479
    %v4155 = vunpack.c.h.b16 %v3479
    %v4156 = vunpack.c.l.b16 %v3480
    %v4157 = vunpack.c.h.b16 %v3480
    %v4158 = vunpack.c.l.b16 %v3481
    %v4159 = vunpack.c.h.b16 %v3481
    %v4160 = vunpack.c.l.b16 %v3482
    %v4161 = vunpack.c.h.b16 %v3482
    %v4162 = vunpack.c.l.b16 %v3483
    %v4163 = vunpack.c.h.b16 %v3483
    %v4164 = vunpack.c.l.b16 %v3484
    %v4165 = vunpack.c.h.b16 %v3484
    %v4166 = vunpack.c.l.b16 %v3485
    %v4167 = vunpack.c.h.b16 %v3485
    %v4168 = vunpack.c.l.b16 %v3486
    %v4169 = vunpack.c.h.b16 %v3486
    %v4170 = vunpack.c.l.b16 %v3487
    %v4171 = vunpack.c.h.b16 %v3487
    %v4172 = vunpack.c.l.b16 %v3488
    %v4173 = vunpack.c.h.b16 %v3488
    %v4174 = vunpack.c.l.b16 %v3489
    %v4175 = vunpack.c.h.b16 %v3489
    %v4176 = vunpack.c.l.b16 %v3490
    %v4177 = vunpack.c.h.b16 %v3490
    %v4178 = vunpack.c.l.b16 %v3491
    %v4179 = vunpack.c.h.b16 %v3491
    %v4180 = vunpack.c.l.b16 %v3492
    %v4181 = vunpack.c.h.b16 %v3492
    %v4182 = vunpack.c.l.b16 %v3493
    %v4183 = vunpack.c.h.b16 %v3493
    %v4184 = vunpack.c.l.b16 %v3494
    %v4185 = vunpack.c.h.b16 %v3494
    %v4186 = vunpack.c.l.b16 %v3495
    %v4187 = vunpack.c.h.b16 %v3495
    %v4188 = vunpack.c.l.b16 %v3496
    %v4189 = vunpack.c.h.b16 %v3496
    %v4190 = vunpack.c.l.b16 %v3497
    %v4191 = vunpack.c.h.b16 %v3497
    %v4192 = vunpack.c.l.b16 %v3498
    %v4193 = vunpack.c.h.b16 %v3498
    %v4194 = vunpack.c.l.b16 %v3499
    %v4195 = vunpack.c.h.b16 %v3499
    %v4196 = vunpack.c.l.b16 %v3500
    %v4197 = vunpack.c.h.b16 %v3500
    %v4198 = vunpack.c.l.b16 %v3501
    %v4199 = vunpack.c.h.b16 %v3501
    %v4200 = vunpack.c.l.b16 %v3502
    %v4201 = vunpack.c.h.b16 %v3502
    %v4202 = vunpack.c.l.b16 %v3503
    %v4203 = vunpack.c.h.b16 %v3503
    %v4204 = vunpack.c.l.b16 %v3504
    %v4205 = vunpack.c.h.b16 %v3504
    %v4206 = vunpack.c.l.b16 %v3505
    %v4207 = vunpack.c.h.b16 %v3505
    %v4208 = vunpack.c.l.b16 %v3506
    %v4209 = vunpack.c.h.b16 %v3506
    %v4210 = vunpack.c.l.b16 %v3507
    %v4211 = vunpack.c.h.b16 %v3507
    %v4212 = vunpack.c.l.b16 %v3508
    %v4213 = vunpack.c.h.b16 %v3508
    %v4214 = vunpack.c.l.b16 %v3509
    %v4215 = vunpack.c.h.b16 %v3509
    %v4216 = vunpack.c.l.b16 %v3510
    %v4217 = vunpack.c.h.b16 %v3510
    %v4218 = vunpack.c.l.b16 %v3511
    %v4219 = vunpack.c.h.b16 %v3511
    %v4220 = vunpack.c.l.b16 %v3512
    %v4221 = vunpack.c.h.b16 %v3512
    %v4222 = vunpack.c.l.b16 %v3513
    %v4223 = vunpack.c.h.b16 %v3513
    %v4224 = vunpack.c.l.b16 %v3514
    %v4225 = vunpack.c.h.b16 %v3514
    %v4226 = vunpack.c.l.b16 %v3515
    %v4227 = vunpack.c.h.b16 %v3515
    %v4228 = vunpack.c.l.b16 %v3516
    %v4229 = vunpack.c.h.b16 %v3516
    %v4230 = vunpack.c.l.b16 %v3517
    %v4231 = vunpack.c.h.b16 %v3517
    %v4232 = vunpack.c.l.b16 %v3518
    %v4233 = vunpack.c.h.b16 %v3518
    %v4234 = vunpack.c.l.b16 %v3519
    %v4235 = vunpack.c.h.b16 %v3519
    %v4236 = vunpack.c.l.b16 %v3520
    %v4237 = vunpack.c.h.b16 %v3520
    %v4238 = vunpack.c.l.b16 %v3521
    %v4239 = vunpack.c.h.b16 %v3521
    %v4240 = vunpack.c.l.b16 %v3522
    %v4241 = vunpack.c.h.b16 %v3522
    %v4242 = vunpack.c.l.b16 %v3523
    %v4243 = vunpack.c.h.b16 %v3523
    %v4244 = vunpack.c.l.b16 %v3524
    %v4245 = vunpack.c.h.b16 %v3524
    %v4246 = vunpack.c.l.b16 %v3525
    %v4247 = vunpack.c.h.b16 %v3525
    %v4248 = vunpack.c.l.b16 %v3526
    %v4249 = vunpack.c.h.b16 %v3526
    %v4250 = vunpack.c.l.b16 %v3527
    %v4251 = vunpack.c.h.b16 %v3527
    %v4252 = vunpack.c.l.b16 %v3528
    %v4253 = vunpack.c.h.b16 %v3528
    %v4254 = vunpack.c.l.b16 %v3529
    %v4255 = vunpack.c.h.b16 %v3529
    %v4256 = vunpack.c.l.b16 %v3530
    %v4257 = vunpack.c.h.b16 %v3530
    %v4258 = vunpack.c.l.b16 %v3531
    %v4259 = vunpack.c.h.b16 %v3531
    %v4260 = vunpack.c.l.b16 %v3532
    %v4261 = vunpack.c.h.b16 %v3532
    %v4262 = vunpack.c.l.b16 %v3533
    %v4263 = vunpack.c.h.b16 %v3533
    %v4264 = vunpack.c.l.b16 %v3534
    %v4265 = vunpack.c.h.b16 %v3534
    %v4266 = vunpack.c.l.b16 %v3535
    %v4267 = vunpack.c.h.b16 %v3535
    %v4268 = vunpack.c.l.b16 %v3536
    %v4269 = vunpack.c.h.b16 %v3536
    %v4270 = vunpack.c.l.b16 %v3537
    %v4271 = vunpack.c.h.b16 %v3537
    %v4272 = vunpack.c.l.b16 %v3538
    %v4273 = vunpack.c.h.b16 %v3538
    %v4274 = vunpack.c.l.b16 %v3539
    %v4275 = vunpack.c.h.b16 %v3539
    %v4276 = vunpack.c.l.b16 %v3540
    %v4277 = vunpack.c.h.b16 %v3540
    %v4278 = vunpack.c.l.b16 %v3541
    %v4279 = vunpack.c.h.b16 %v3541
    %v4280 = vunpack.c.l.b16 %v3542
    %v4281 = vunpack.c.h.b16 %v3542
    %v4282 = vunpack.c.l.b16 %v3543
    %v4283 = vunpack.c.h.b16 %v3543
    %v4284 = vunpack.c.l.b16 %v3544
    %v4285 = vunpack.c.h.b16 %v3544
    %v4286 = vunpack.c.l.b16 %v3545
    %v4287 = vunpack.c.h.b16 %v3545
    %v4288 = vunpack.c.l.b16 %v3546
    %v4289 = vunpack.c.h.b16 %v3546
    %v4290 = vunpack.c.l.b16 %v3547
    %v4291 = vunpack.c.h.b16 %v3547
    %v4292 = vunpack.c.l.b16 %v3548
    %v4293 = vunpack.c.h.b16 %v3548
    %v4294 = vunpack.c.l.b16 %v3549
    %v4295 = vunpack.c.h.b16 %v3549
    %v4296 = vunpack.c.l.b16 %v3550
    %v4297 = vunpack.c.h.b16 %v3550
    %v4298 = vunpack.c.l.b16 %v3551
    %v4299 = vunpack.c.h.b16 %v3551
    %v4300 = vunpack.c.l.b16 %v3552
    %v4301 = vunpack.c.h.b16 %v3552
    %v4302 = vunpack.c.l.b16 %v3553
    %v4303 = vunpack.c.h.b16 %v3553
    %v4304 = vunpack.c.l.b16 %v3554
    %v4305 = vunpack.c.h.b16 %v3554
    %v4306 = vunpack.c.l.b16 %v3555
    %v4307 = vunpack.c.h.b16 %v3555
    %v4308 = vunpack.c.l.b16 %v3556
    %v4309 = vunpack.c.h.b16 %v3556
    %v4310 = vunpack.c.l.b16 %v3557
    %v4311 = vunpack.c.h.b16 %v3557
    %v4312 = vunpack.c.l.b16 %v3558
    %v4313 = vunpack.c.h.b16 %v3558
    %v4314 = vunpack.c.l.b16 %v3559
    %v4315 = vunpack.c.h.b16 %v3559
    %v4316 = vunpack.c.l.b16 %v3560
    %v4317 = vunpack.c.h.b16 %v3560
    %v4318 = vunpack.c.l.b16 %v3561
    %v4319 = vunpack.c.h.b16 %v3561
    %v4320 = vunpack.c.l.b16 %v3562
    %v4321 = vunpack.c.h.b16 %v3562
    %v4322 = vunpack.c.l.b16 %v3563
    %v4323 = vunpack.c.h.b16 %v3563
    %v4324 = vunpack.c.l.b16 %v3564
    %v4325 = vunpack.c.h.b16 %v3564
    %v4326 = vunpack.c.l.b16 %v3565
    %v4327 = vunpack.c.h.b16 %v3565
    %v4328 = vunpack.c.l.b16 %v3566
    %v4329 = vunpack.c.h.b16 %v3566
    %v4330 = vunpack.c.l.b16 %v3567
    %v4331 = vunpack.c.h.b16 %v3567
    %v4332 = vunpack.c.l.b16 %v3568
    %v4333 = vunpack.c.h.b16 %v3568
    %v4334 = vunpack.c.l.b16 %v3569
    %v4335 = vunpack.c.h.b16 %v3569
    %v4336 = vunpack.c.l.b16 %v3570
    %v4337 = vunpack.c.h.b16 %v3570
    %v4338 = vunpack.c.l.b16 %v3571
    %v4339 = vunpack.c.h.b16 %v3571
    %v4340 = vunpack.c.l.b16 %v3572
    %v4341 = vunpack.c.h.b16 %v3572
    %v4342 = vunpack.c.l.b16 %v3573
    %v4343 = vunpack.c.h.b16 %v3573
    %v4344 = vunpack.c.l.b16 %v3574
    %v4345 = vunpack.c.h.b16 %v3574
    %v4346 = vunpack.c.l.b16 %v3575
    %v4347 = vunpack.c.h.b16 %v3575
    %v4348 = vunpack.c.l.b16 %v3576
    %v4349 = vunpack.c.h.b16 %v3576
    %v4350 = vunpack.c.l.b16 %v3577
    %v4351 = vunpack.c.h.b16 %v3577
    %v4352 = vunpack.c.l.b16 %v3578
    %v4353 = vunpack.c.h.b16 %v3578
    %v4354 = vunpack.c.l.b16 %v3579
    %v4355 = vunpack.c.h.b16 %v3579
    %v4356 = vunpack.c.l.b16 %v3580
    %v4357 = vunpack.c.h.b16 %v3580
    %v4358 = vunpack.c.l.b16 %v3581
    %v4359 = vunpack.c.h.b16 %v3581
    %v4360 = vpack.c.b16 %v3852, %v3848
    %v4361 = vpack.c.b16 %v3853, %v3849
    %v4362 = vpack.c.b16 %v3854, %v3850
    %v4363 = vpack.c.b16 %v3855, %v3851
    %v4364 = vpack.c.b16 %v3860, %v3856
    %v4365 = vpack.c.b16 %v3861, %v3857
    %v4366 = vpack.c.b16 %v3862, %v3858
    %v4367 = vpack.c.b16 %v3863, %v3859
    %v4368 = vpack.c.b16 %v3868, %v3864
    %v4369 = vpack.c.b16 %v3869, %v3865
    %v4370 = vpack.c.b16 %v3870, %v3866
    %v4371 = vpack.c.b16 %v3871, %v3867
    %v4372 = vpack.c.b16 %v3876, %v3872
    %v4373 = vpack.c.b16 %v3877, %v3873
    %v4374 = vpack.c.b16 %v3878, %v3874
    %v4375 = vpack.c.b16 %v3879, %v3875
    %v4376 = vpack.c.b16 %v3884, %v3880
    %v4377 = vpack.c.b16 %v3885, %v3881
    %v4378 = vpack.c.b16 %v3886, %v3882
    %v4379 = vpack.c.b16 %v3887, %v3883
    %v4380 = vpack.c.b16 %v3892, %v3888
    %v4381 = vpack.c.b16 %v3893, %v3889
    %v4382 = vpack.c.b16 %v3894, %v3890
    %v4383 = vpack.c.b16 %v3895, %v3891
    %v4384 = vpack.c.b16 %v3900, %v3896
    %v4385 = vpack.c.b16 %v3901, %v3897
    %v4386 = vpack.c.b16 %v3902, %v3898
    %v4387 = vpack.c.b16 %v3903, %v3899
    %v4388 = vpack.c.b16 %v3908, %v3904
    %v4389 = vpack.c.b16 %v3909, %v3905
    %v4390 = vpack.c.b16 %v3910, %v3906
    %v4391 = vpack.c.b16 %v3911, %v3907
    %v4392 = vpack.c.b16 %v3916, %v3912
    %v4393 = vpack.c.b16 %v3917, %v3913
    %v4394 = vpack.c.b16 %v3918, %v3914
    %v4395 = vpack.c.b16 %v3919, %v3915
    %v4396 = vpack.c.b16 %v3924, %v3920
    %v4397 = vpack.c.b16 %v3925, %v3921
    %v4398 = vpack.c.b16 %v3926, %v3922
    %v4399 = vpack.c.b16 %v3927, %v3923
    %v4400 = vpack.c.b16 %v3932, %v3928
    %v4401 = vpack.c.b16 %v3933, %v3929
    %v4402 = vpack.c.b16 %v3934, %v3930
    %v4403 = vpack.c.b16 %v3935, %v3931
    %v4404 = vpack.c.b16 %v3940, %v3936
    %v4405 = vpack.c.b16 %v3941, %v3937
    %v4406 = vpack.c.b16 %v3942, %v3938
    %v4407 = vpack.c.b16 %v3943, %v3939
    %v4408 = vpack.c.b16 %v3948, %v3944
    %v4409 = vpack.c.b16 %v3949, %v3945
    %v4410 = vpack.c.b16 %v3950, %v3946
    %v4411 = vpack.c.b16 %v3951, %v3947
    %v4412 = vpack.c.b16 %v3956, %v3952
    %v4413 = vpack.c.b16 %v3957, %v3953
    %v4414 = vpack.c.b16 %v3958, %v3954
    %v4415 = vpack.c.b16 %v3959, %v3955
    %v4416 = vpack.c.b16 %v3964, %v3960
    %v4417 = vpack.c.b16 %v3965, %v3961
    %v4418 = vpack.c.b16 %v3966, %v3962
    %v4419 = vpack.c.b16 %v3967, %v3963
    %v4420 = vpack.c.b16 %v3972, %v3968
    %v4421 = vpack.c.b16 %v3973, %v3969
    %v4422 = vpack.c.b16 %v3974, %v3970
    %v4423 = vpack.c.b16 %v3975, %v3971
    %v4424 = vpack.c.b16 %v3980, %v3976
    %v4425 = vpack.c.b16 %v3981, %v3977
    %v4426 = vpack.c.b16 %v3982, %v3978
    %v4427 = vpack.c.b16 %v3983, %v3979
    %v4428 = vpack.c.b16 %v3988, %v3984
    %v4429 = vpack.c.b16 %v3989, %v3985
    %v4430 = vpack.c.b16 %v3990, %v3986
    %v4431 = vpack.c.b16 %v3991, %v3987
    %v4432 = vpack.c.b16 %v3996, %v3992
    %v4433 = vpack.c.b16 %v3997, %v3993
    %v4434 = vpack.c.b16 %v3998, %v3994
    %v4435 = vpack.c.b16 %v3999, %v3995
    %v4436 = vpack.c.b16 %v4004, %v4000
    %v4437 = vpack.c.b16 %v4005, %v4001
    %v4438 = vpack.c.b16 %v4006, %v4002
    %v4439 = vpack.c.b16 %v4007, %v4003
    %v4440 = vpack.c.b16 %v4012, %v4008
    %v4441 = vpack.c.b16 %v4013, %v4009
    %v4442 = vpack.c.b16 %v4014, %v4010
    %v4443 = vpack.c.b16 %v4015, %v4011
    %v4444 = vpack.c.b16 %v4020, %v4016
    %v4445 = vpack.c.b16 %v4021, %v4017
    %v4446 = vpack.c.b16 %v4022, %v4018
    %v4447 = vpack.c.b16 %v4023, %v4019
    %v4448 = vpack.c.b16 %v4028, %v4024
    %v4449 = vpack.c.b16 %v4029, %v4025
    %v4450 = vpack.c.b16 %v4030, %v4026
    %v4451 = vpack.c.b16 %v4031, %v4027
    %v4452 = vpack.c.b16 %v4036, %v4032
    %v4453 = vpack.c.b16 %v4037, %v4033
    %v4454 = vpack.c.b16 %v4038, %v4034
    %v4455 = vpack.c.b16 %v4039, %v4035
    %v4456 = vpack.c.b16 %v4044, %v4040
    %v4457 = vpack.c.b16 %v4045, %v4041
    %v4458 = vpack.c.b16 %v4046, %v4042
    %v4459 = vpack.c.b16 %v4047, %v4043
    %v4460 = vpack.c.b16 %v4052, %v4048
    %v4461 = vpack.c.b16 %v4053, %v4049
    %v4462 = vpack.c.b16 %v4054, %v4050
    %v4463 = vpack.c.b16 %v4055, %v4051
    %v4464 = vpack.c.b16 %v4060, %v4056
    %v4465 = vpack.c.b16 %v4061, %v4057
    %v4466 = vpack.c.b16 %v4062, %v4058
    %v4467 = vpack.c.b16 %v4063, %v4059
    %v4468 = vpack.c.b16 %v4068, %v4064
    %v4469 = vpack.c.b16 %v4069, %v4065
    %v4470 = vpack.c.b16 %v4070, %v4066
    %v4471 = vpack.c.b16 %v4071, %v4067
    %v4472 = vpack.c.b16 %v4076, %v4072
    %v4473 = vpack.c.b16 %v4077, %v4073
    %v4474 = vpack.c.b16 %v4078, %v4074
    %v4475 = vpack.c.b16 %v4079, %v4075
    %v4476 = vpack.c.b16 %v4084, %v4080
    %v4477 = vpack.c.b16 %v4085, %v4081
    %v4478 = vpack.c.b16 %v4086, %v4082
    %v4479 = vpack.c.b16 %v4087, %v4083
    %v4480 = vpack.c.b16 %v4092, %v4088
    %v4481 = vpack.c.b16 %v4093, %v4089
    %v4482 = vpack.c.b16 %v4094, %v4090
    %v4483 = vpack.c.b16 %v4095, %v4091
    %v4484 = vpack.c.b16 %v4100, %v4096
    %v4485 = vpack.c.b16 %v4101, %v4097
    %v4486 = vpack.c.b16 %v4102, %v4098
    %v4487 = vpack.c.b16 %v4103, %v4099
    %v4488 = vpack.c.b16 %v4108, %v4104
    %v4489 = vpack.c.b16 %v4109, %v4105
    %v4490 = vpack.c.b16 %v4110, %v4106
    %v4491 = vpack.c.b16 %v4111, %v4107
    %v4492 = vpack.c.b16 %v4116, %v4112
    %v4493 = vpack.c.b16 %v4117, %v4113
    %v4494 = vpack.c.b16 %v4118, %v4114
    %v4495 = vpack.c.b16 %v4119, %v4115
    %v4496 = vpack.c.b16 %v4124, %v4120
    %v4497 = vpack.c.b16 %v4125, %v4121
    %v4498 = vpack.c.b16 %v4126, %v4122
    %v4499 = vpack.c.b16 %v4127, %v4123
    %v4500 = vpack.c.b16 %v4132, %v4128
    %v4501 = vpack.c.b16 %v4133, %v4129
    %v4502 = vpack.c.b16 %v4134, %v4130
    %v4503 = vpack.c.b16 %v4135, %v4131
    %v4504 = vpack.c.b16 %v4140, %v4136
    %v4505 = vpack.c.b16 %v4141, %v4137
    %v4506 = vpack.c.b16 %v4142, %v4138
    %v4507 = vpack.c.b16 %v4143, %v4139
    %v4508 = vpack.c.b16 %v4148, %v4144
    %v4509 = vpack.c.b16 %v4149, %v4145
    %v4510 = vpack.c.b16 %v4150, %v4146
    %v4511 = vpack.c.b16 %v4151, %v4147
    %v4512 = vpack.c.b16 %v4156, %v4152
    %v4513 = vpack.c.b16 %v4157, %v4153
    %v4514 = vpack.c.b16 %v4158, %v4154
    %v4515 = vpack.c.b16 %v4159, %v4155
    %v4516 = vpack.c.b16 %v4164, %v4160
    %v4517 = vpack.c.b16 %v4165, %v4161
    %v4518 = vpack.c.b16 %v4166, %v4162
    %v4519 = vpack.c.b16 %v4167, %v4163
    %v4520 = vpack.c.b16 %v4172, %v4168
    %v4521 = vpack.c.b16 %v4173, %v4169
    %v4522 = vpack.c.b16 %v4174, %v4170
    %v4523 = vpack.c.b16 %v4175, %v4171
    %v4524 = vpack.c.b16 %v4180, %v4176
    %v4525 = vpack.c.b16 %v4181, %v4177
    %v4526 = vpack.c.b16 %v4182, %v4178
    %v4527 = vpack.c.b16 %v4183, %v4179
    %v4528 = vpack.c.b16 %v4188, %v4184
    %v4529 = vpack.c.b16 %v4189, %v4185
    %v4530 = vpack.c.b16 %v4190, %v4186
    %v4531 = vpack.c.b16 %v4191, %v4187
    %v4532 = vpack.c.b16 %v4196, %v4192
    %v4533 = vpack.c.b16 %v4197, %v4193
    %v4534 = vpack.c.b16 %v4198, %v4194
    %v4535 = vpack.c.b16 %v4199, %v4195
    %v4536 = vpack.c.b16 %v4204, %v4200
    %v4537 = vpack.c.b16 %v4205, %v4201
    %v4538 = vpack.c.b16 %v4206, %v4202
    %v4539 = vpack.c.b16 %v4207, %v4203
    %v4540 = vpack.c.b16 %v4212, %v4208
    %v4541 = vpack.c.b16 %v4213, %v4209
    %v4542 = vpack.c.b16 %v4214, %v4210
    %v4543 = vpack.c.b16 %v4215, %v4211
    %v4544 = vpack.c.b16 %v4220, %v4216
    %v4545 = vpack.c.b16 %v4221, %v4217
    %v4546 = vpack.c.b16 %v4222, %v4218
    %v4547 = vpack.c.b16 %v4223, %v4219
    %v4548 = vpack.c.b16 %v4228, %v4224
    %v4549 = vpack.c.b16 %v4229, %v4225
    %v4550 = vpack.c.b16 %v4230, %v4226
    %v4551 = vpack.c.b16 %v4231, %v4227
    %v4552 = vpack.c.b16 %v4236, %v4232
    %v4553 = vpack.c.b16 %v4237, %v4233
    %v4554 = vpack.c.b16 %v4238, %v4234
    %v4555 = vpack.c.b16 %v4239, %v4235
    %v4556 = vpack.c.b16 %v4244, %v4240
    %v4557 = vpack.c.b16 %v4245, %v4241
    %v4558 = vpack.c.b16 %v4246, %v4242
    %v4559 = vpack.c.b16 %v4247, %v4243
    %v4560 = vpack.c.b16 %v4252, %v4248
    %v4561 = vpack.c.b16 %v4253, %v4249
    %v4562 = vpack.c.b16 %v4254, %v4250
    %v4563 = vpack.c.b16 %v4255, %v4251
    %v4564 = vpack.c.b16 %v4260, %v4256
    %v4565 = vpack.c.b16 %v4261, %v4257
    %v4566 = vpack.c.b16 %v4262, %v4258
    %v4567 = vpack.c.b16 %v4263, %v4259
    %v4568 = vpack.c.b16 %v4268, %v4264
    %v4569 = vpack.c.b16 %v4269, %v4265
    %v4570 = vpack.c.b16 %v4270, %v4266
    %v4571 = vpack.c.b16 %v4271, %v4267
    %v4572 = vpack.c.b16 %v4276, %v4272
    %v4573 = vpack.c.b16 %v4277, %v4273
    %v4574 = vpack.c.b16 %v4278, %v4274
    %v4575 = vpack.c.b16 %v4279, %v4275
    %v4576 = vpack.c.b16 %v4284, %v4280
    %v4577 = vpack.c.b16 %v4285, %v4281
    %v4578 = vpack.c.b16 %v4286, %v4282
    %v4579 = vpack.c.b16 %v4287, %v4283
    %v4580 = vpack.c.b16 %v4292, %v4288
    %v4581 = vpack.c.b16 %v4293, %v4289
    %v4582 = vpack.c.b16 %v4294, %v4290
    %v4583 = vpack.c.b16 %v4295, %v4291
    %v4584 = vpack.c.b16 %v4300, %v4296
    %v4585 = vpack.c.b16 %v4301, %v4297
    %v4586 = vpack.c.b16 %v4302, %v4298
    %v4587 = vpack.c.b16 %v4303, %v4299
    %v4588 = vpack.c.b16 %v4308, %v4304
    %v4589 = vpack.c.b16 %v4309, %v4305
    %v4590 = vpack.c.b16 %v4310, %v4306
    %v4591 = vpack.c.b16 %v4311, %v4307
    %v4592 = vpack.c.b16 %v4316, %v4312
    %v4593 = vpack.c.b16 %v4317, %v4313
    %v4594 = vpack.c.b16 %v4318, %v4314
    %v4595 = vpack.c.b16 %v4319, %v4315
    %v4596 = vpack.c.b16 %v4324, %v4320
    %v4597 = vpack.c.b16 %v4325, %v4321
    %v4598 = vpack.c.b16 %v4326, %v4322
    %v4599 = vpack.c.b16 %v4327, %v4323
    %v4600 = vpack.c.b16 %v4332, %v4328
    %v4601 = vpack.c.b16 %v4333, %v4329
    %v4602 = vpack.c.b16 %v4334, %v4330
    %v4603 = vpack.c.b16 %v4335, %v4331
    %v4604 = vpack.c.b16 %v4340, %v4336
    %v4605 = vpack.c.b16 %v4341, %v4337
    %v4606 = vpack.c.b16 %v4342, %v4338
    %v4607 = vpack.c.b16 %v4343, %v4339
    %v4608 = vpack.c.b16 %v4348, %v4344
    %v4609 = vpack.c.b16 %v4349, %v4345
    %v4610 = vpack.c.b16 %v4350, %v4346
    %v4611 = vpack.c.b16 %v4351, %v4347
    %v4612 = vpack.c.b16 %v4356, %v4352
    %v4613 = vpack.c.b16 %v4357, %v4353
    %v4614 = vpack.c.b16 %v4358, %v4354
    %v4615 = vpack.c.b16 %v4359, %v4355
    %4872 = vmatpush.bf16.msra.mxu0 %v4388
    %4873 = vmatpush.bf16.msra.mxu0 %v4384
    %4874 = vmatpush.bf16.msra.mxu0 %v4380
    %4875 = vmatpush.bf16.msra.mxu0 %v4376
    %4876 = vmatpush.bf16.msra.mxu0 %v4372
    %4877 = vmatpush.bf16.msra.mxu0 %v4368
    %4878 = vmatpush.bf16.msra.mxu0 %v4364
    %4879 = vmatpush.bf16.msra.mxu0 %v4360
    %4880 = vmatmul.bf16.gmra.mxu0 %v3318
    %v4881 = vpop.f32.mrf.mxu0
    %v4882 = vadd.f32 %v3584, %v4881
    %v4883 = vpop.f32.mrf.mxu0
    %v4884 = vadd.f32 %v3584, %v4883
    %4885 = vdwg.mxu0
    %4886 = vmatpush.bf16.msra.mxu0 %v4420
    %4887 = vmatpush.bf16.msra.mxu0 %v4416
    %4888 = vmatpush.bf16.msra.mxu0 %v4412
    %4889 = vmatpush.bf16.msra.mxu0 %v4408
    %4890 = vmatpush.bf16.msra.mxu0 %v4404
    %4891 = vmatpush.bf16.msra.mxu0 %v4400
    %4892 = vmatpush.bf16.msra.mxu0 %v4396
    %4893 = vmatpush.bf16.msra.mxu0 %v4392
    %4894 = vmatmul.bf16.gmra.mxu0 %v3319
    %v4895 = vpop.f32.mrf.mxu0
    %v4896 = vadd.f32 %v4882, %v4895
    %v4897 = vpop.f32.mrf.mxu0
    %v4898 = vadd.f32 %v4884, %v4897
    %4899 = vdwg.mxu0
    %4900 = vmatpush.bf16.msra.mxu0 %v4452
    %4901 = vmatpush.bf16.msra.mxu0 %v4448
    %4902 = vmatpush.bf16.msra.mxu0 %v4444
    %4903 = vmatpush.bf16.msra.mxu0 %v4440
    %4904 = vmatpush.bf16.msra.mxu0 %v4436
    %4905 = vmatpush.bf16.msra.mxu0 %v4432
    %4906 = vmatpush.bf16.msra.mxu0 %v4428
    %4907 = vmatpush.bf16.msra.mxu0 %v4424
    %4908 = vmatmul.bf16.gmra.mxu0 %v3320
    %v4909 = vpop.f32.mrf.mxu0
    %v4910 = vadd.f32 %v4896, %v4909
    %v4911 = vpop.f32.mrf.mxu0
    %v4912 = vadd.f32 %v4898, %v4911
    %4913 = vdwg.mxu0
    %4914 = vmatpush.bf16.msra.mxu0 %v4484
    %4915 = vmatpush.bf16.msra.mxu0 %v4480
    %4916 = vmatpush.bf16.msra.mxu0 %v4476
    %4917 = vmatpush.bf16.msra.mxu0 %v4472
    %4918 = vmatpush.bf16.msra.mxu0 %v4468
    %4919 = vmatpush.bf16.msra.mxu0 %v4464
    %4920 = vmatpush.bf16.msra.mxu0 %v4460
    %4921 = vmatpush.bf16.msra.mxu0 %v4456
    %4922 = vmatmul.bf16.gmra.mxu0 %v3321
    %v4923 = vpop.f32.mrf.mxu0
    %v4924 = vadd.f32 %v4910, %v4923
    %v4925 = vpop.f32.mrf.mxu0
    %v4926 = vadd.f32 %v4912, %v4925
    %4927 = vdwg.mxu0
    %4928 = vmatpush.bf16.msra.mxu0 %v4516
    %4929 = vmatpush.bf16.msra.mxu0 %v4512
    %4930 = vmatpush.bf16.msra.mxu0 %v4508
    %4931 = vmatpush.bf16.msra.mxu0 %v4504
    %4932 = vmatpush.bf16.msra.mxu0 %v4500
    %4933 = vmatpush.bf16.msra.mxu0 %v4496
    %4934 = vmatpush.bf16.msra.mxu0 %v4492
    %4935 = vmatpush.bf16.msra.mxu0 %v4488
    %4936 = vmatmul.bf16.gmra.mxu0 %v3322
    %v4937 = vpop.f32.mrf.mxu0
    %v4938 = vadd.f32 %v4924, %v4937
    %v4939 = vpop.f32.mrf.mxu0
    %v4940 = vadd.f32 %v4926, %v4939
    %4941 = vdwg.mxu0
    %4942 = vmatpush.bf16.msra.mxu0 %v4548
    %4943 = vmatpush.bf16.msra.mxu0 %v4544
    %4944 = vmatpush.bf16.msra.mxu0 %v4540
    %4945 = vmatpush.bf16.msra.mxu0 %v4536
    %4946 = vmatpush.bf16.msra.mxu0 %v4532
    %4947 = vmatpush.bf16.msra.mxu0 %v4528
    %4948 = vmatpush.bf16.msra.mxu0 %v4524
    %4949 = vmatpush.bf16.msra.mxu0 %v4520
    %4950 = vmatmul.bf16.gmra.mxu0 %v3323
    %v4951 = vpop.f32.mrf.mxu0
    %v4952 = vadd.f32 %v4938, %v4951
    %v4953 = vpop.f32.mrf.mxu0
    %v4954 = vadd.f32 %v4940, %v4953
    %4955 = vdwg.mxu0
    %4956 = vmatpush.bf16.msra.mxu0 %v4580
    %4957 = vmatpush.bf16.msra.mxu0 %v4576
    %4958 = vmatpush.bf16.msra.mxu0 %v4572
    %4959 = vmatpush.bf16.msra.mxu0 %v4568
    %4960 = vmatpush.bf16.msra.mxu0 %v4564
    %4961 = vmatpush.bf16.msra.mxu0 %v4560
    %4962 = vmatpush.bf16.msra.mxu0 %v4556
    %4963 = vmatpush.bf16.msra.mxu0 %v4552
    %4964 = vmatmul.bf16.gmra.mxu0 %v3324
    %v4965 = vpop.f32.mrf.mxu0
    %v4966 = vadd.f32 %v4952, %v4965
    %v4967 = vpop.f32.mrf.mxu0
    %v4968 = vadd.f32 %v4954, %v4967
    %4969 = vdwg.mxu0
    %4970 = vmatpush.bf16.msra.mxu0 %v4612
    %4971 = vmatpush.bf16.msra.mxu0 %v4608
    %4972 = vmatpush.bf16.msra.mxu0 %v4604
    %4973 = vmatpush.bf16.msra.mxu0 %v4600
    %4974 = vmatpush.bf16.msra.mxu0 %v4596
    %4975 = vmatpush.bf16.msra.mxu0 %v4592
    %4976 = vmatpush.bf16.msra.mxu0 %v4588
    %4977 = vmatpush.bf16.msra.mxu0 %v4584
    %4978 = vmatmul.bf16.gmra.mxu0 %v3325
    %v4979 = vpop.f32.mrf.mxu0
    %v4980 = vadd.f32 %v4966, %v4979
    %v4981 = vpop.f32.mrf.mxu0
    %v4982 = vadd.f32 %v4968, %v4981
    %4983 = vdwg.mxu0
    %4984 = vmatpush.bf16.msra.mxu0 %v4389
    %4985 = vmatpush.bf16.msra.mxu0 %v4385
    %4986 = vmatpush.bf16.msra.mxu0 %v4381
    %4987 = vmatpush.bf16.msra.mxu0 %v4377
    %4988 = vmatpush.bf16.msra.mxu0 %v4373
    %4989 = vmatpush.bf16.msra.mxu0 %v4369
    %4990 = vmatpush.bf16.msra.mxu0 %v4365
    %4991 = vmatpush.bf16.msra.mxu0 %v4361
    %4992 = vmatmul.bf16.gmra.mxu0 %v3318
    %v4993 = vpop.f32.mrf.mxu0
    %v4994 = vadd.f32 %v3585, %v4993
    %v4995 = vpop.f32.mrf.mxu0
    %v4996 = vadd.f32 %v3585, %v4995
    %4997 = vdwg.mxu0
    %4998 = vmatpush.bf16.msra.mxu0 %v4421
    %4999 = vmatpush.bf16.msra.mxu0 %v4417
    %5000 = vmatpush.bf16.msra.mxu0 %v4413
    %5001 = vmatpush.bf16.msra.mxu0 %v4409
    %5002 = vmatpush.bf16.msra.mxu0 %v4405
    %5003 = vmatpush.bf16.msra.mxu0 %v4401
    %5004 = vmatpush.bf16.msra.mxu0 %v4397
    %5005 = vmatpush.bf16.msra.mxu0 %v4393
    %5006 = vmatmul.bf16.gmra.mxu0 %v3319
    %v5007 = vpop.f32.mrf.mxu0
    %v5008 = vadd.f32 %v4994, %v5007
    %v5009 = vpop.f32.mrf.mxu0
    %v5010 = vadd.f32 %v4996, %v5009
    %5011 = vdwg.mxu0
    %5012 = vmatpush.bf16.msra.mxu0 %v4453
    %5013 = vmatpush.bf16.msra.mxu0 %v4449
    %5014 = vmatpush.bf16.msra.mxu0 %v4445
    %5015 = vmatpush.bf16.msra.mxu0 %v4441
    %5016 = vmatpush.bf16.msra.mxu0 %v4437
    %5017 = vmatpush.bf16.msra.mxu0 %v4433
    %5018 = vmatpush.bf16.msra.mxu0 %v4429
    %5019 = vmatpush.bf16.msra.mxu0 %v4425
    %5020 = vmatmul.bf16.gmra.mxu0 %v3320
    %v5021 = vpop.f32.mrf.mxu0
    %v5022 = vadd.f32 %v5008, %v5021
    %v5023 = vpop.f32.mrf.mxu0
    %v5024 = vadd.f32 %v5010, %v5023
    %5025 = vdwg.mxu0
    %5026 = vmatpush.bf16.msra.mxu0 %v4485
    %5027 = vmatpush.bf16.msra.mxu0 %v4481
    %5028 = vmatpush.bf16.msra.mxu0 %v4477
    %5029 = vmatpush.bf16.msra.mxu0 %v4473
    %5030 = vmatpush.bf16.msra.mxu0 %v4469
    %5031 = vmatpush.bf16.msra.mxu0 %v4465
    %5032 = vmatpush.bf16.msra.mxu0 %v4461
    %5033 = vmatpush.bf16.msra.mxu0 %v4457
    %5034 = vmatmul.bf16.gmra.mxu0 %v3321
    %v5035 = vpop.f32.mrf.mxu0
    %v5036 = vadd.f32 %v5022, %v5035
    %v5037 = vpop.f32.mrf.mxu0
    %v5038 = vadd.f32 %v5024, %v5037
    %5039 = vdwg.mxu0
    %5040 = vmatpush.bf16.msra.mxu0 %v4517
    %5041 = vmatpush.bf16.msra.mxu0 %v4513
    %5042 = vmatpush.bf16.msra.mxu0 %v4509
    %5043 = vmatpush.bf16.msra.mxu0 %v4505
    %5044 = vmatpush.bf16.msra.mxu0 %v4501
    %5045 = vmatpush.bf16.msra.mxu0 %v4497
    %5046 = vmatpush.bf16.msra.mxu0 %v4493
    %5047 = vmatpush.bf16.msra.mxu0 %v4489
    %5048 = vmatmul.bf16.gmra.mxu0 %v3322
    %v5049 = vpop.f32.mrf.mxu0
    %v5050 = vadd.f32 %v5036, %v5049
    %v5051 = vpop.f32.mrf.mxu0
    %v5052 = vadd.f32 %v5038, %v5051
    %5053 = vdwg.mxu0
    %5054 = vmatpush.bf16.msra.mxu0 %v4549
    %5055 = vmatpush.bf16.msra.mxu0 %v4545
    %5056 = vmatpush.bf16.msra.mxu0 %v4541
    %5057 = vmatpush.bf16.msra.mxu0 %v4537
    %5058 = vmatpush.bf16.msra.mxu0 %v4533
    %5059 = vmatpush.bf16.msra.mxu0 %v4529
    %5060 = vmatpush.bf16.msra.mxu0 %v4525
    %5061 = vmatpush.bf16.msra.mxu0 %v4521
    %5062 = vmatmul.bf16.gmra.mxu0 %v3323
    %v5063 = vpop.f32.mrf.mxu0
    %v5064 = vadd.f32 %v5050, %v5063
    %v5065 = vpop.f32.mrf.mxu0
    %v5066 = vadd.f32 %v5052, %v5065
    %5067 = vdwg.mxu0
    %5068 = vmatpush.bf16.msra.mxu0 %v4581
    %5069 = vmatpush.bf16.msra.mxu0 %v4577
    %5070 = vmatpush.bf16.msra.mxu0 %v4573
    %5071 = vmatpush.bf16.msra.mxu0 %v4569
    %5072 = vmatpush.bf16.msra.mxu0 %v4565
    %5073 = vmatpush.bf16.msra.mxu0 %v4561
    %5074 = vmatpush.bf16.msra.mxu0 %v4557
    %5075 = vmatpush.bf16.msra.mxu0 %v4553
    %5076 = vmatmul.bf16.gmra.mxu0 %v3324
    %v5077 = vpop.f32.mrf.mxu0
    %v5078 = vadd.f32 %v5064, %v5077
    %v5079 = vpop.f32.mrf.mxu0
    %v5080 = vadd.f32 %v5066, %v5079
    %5081 = vdwg.mxu0
    %5082 = vmatpush.bf16.msra.mxu0 %v4613
    %5083 = vmatpush.bf16.msra.mxu0 %v4609
    %5084 = vmatpush.bf16.msra.mxu0 %v4605
    %5085 = vmatpush.bf16.msra.mxu0 %v4601
    %5086 = vmatpush.bf16.msra.mxu0 %v4597
    %5087 = vmatpush.bf16.msra.mxu0 %v4593
    %5088 = vmatpush.bf16.msra.mxu0 %v4589
    %5089 = vmatpush.bf16.msra.mxu0 %v4585
    %5090 = vmatmul.bf16.gmra.mxu0 %v3325
    %v5091 = vpop.f32.mrf.mxu0
    %v5092 = vadd.f32 %v5078, %v5091
    %v5093 = vpop.f32.mrf.mxu0
    %v5094 = vadd.f32 %v5080, %v5093
    %5095 = vdwg.mxu0
    %5096 = vmatpush.bf16.msra.mxu0 %v4390
    %5097 = vmatpush.bf16.msra.mxu0 %v4386
    %5098 = vmatpush.bf16.msra.mxu0 %v4382
    %5099 = vmatpush.bf16.msra.mxu0 %v4378
    %5100 = vmatpush.bf16.msra.mxu0 %v4374
    %5101 = vmatpush.bf16.msra.mxu0 %v4370
    %5102 = vmatpush.bf16.msra.mxu0 %v4366
    %5103 = vmatpush.bf16.msra.mxu0 %v4362
    %5104 = vmatmul.bf16.gmra.mxu0 %v3318
    %v5105 = vpop.f32.mrf.mxu0
    %v5106 = vadd.f32 %v3586, %v5105
    %v5107 = vpop.f32.mrf.mxu0
    %v5108 = vadd.f32 %v3586, %v5107
    %5109 = vdwg.mxu0
    %5110 = vmatpush.bf16.msra.mxu0 %v4422
    %5111 = vmatpush.bf16.msra.mxu0 %v4418
    %5112 = vmatpush.bf16.msra.mxu0 %v4414
    %5113 = vmatpush.bf16.msra.mxu0 %v4410
    %5114 = vmatpush.bf16.msra.mxu0 %v4406
    %5115 = vmatpush.bf16.msra.mxu0 %v4402
    %5116 = vmatpush.bf16.msra.mxu0 %v4398
    %5117 = vmatpush.bf16.msra.mxu0 %v4394
    %5118 = vmatmul.bf16.gmra.mxu0 %v3319
    %v5119 = vpop.f32.mrf.mxu0
    %v5120 = vadd.f32 %v5106, %v5119
    %v5121 = vpop.f32.mrf.mxu0
    %v5122 = vadd.f32 %v5108, %v5121
    %5123 = vdwg.mxu0
    %5124 = vmatpush.bf16.msra.mxu0 %v4454
    %5125 = vmatpush.bf16.msra.mxu0 %v4450
    %5126 = vmatpush.bf16.msra.mxu0 %v4446
    %5127 = vmatpush.bf16.msra.mxu0 %v4442
    %5128 = vmatpush.bf16.msra.mxu0 %v4438
    %5129 = vmatpush.bf16.msra.mxu0 %v4434
    %5130 = vmatpush.bf16.msra.mxu0 %v4430
    %5131 = vmatpush.bf16.msra.mxu0 %v4426
    %5132 = vmatmul.bf16.gmra.mxu0 %v3320
    %v5133 = vpop.f32.mrf.mxu0
    %v5134 = vadd.f32 %v5120, %v5133
    %v5135 = vpop.f32.mrf.mxu0
    %v5136 = vadd.f32 %v5122, %v5135
    %5137 = vdwg.mxu0
    %5138 = vmatpush.bf16.msra.mxu0 %v4486
    %5139 = vmatpush.bf16.msra.mxu0 %v4482
    %5140 = vmatpush.bf16.msra.mxu0 %v4478
    %5141 = vmatpush.bf16.msra.mxu0 %v4474
    %5142 = vmatpush.bf16.msra.mxu0 %v4470
    %5143 = vmatpush.bf16.msra.mxu0 %v4466
    %5144 = vmatpush.bf16.msra.mxu0 %v4462
    %5145 = vmatpush.bf16.msra.mxu0 %v4458
    %5146 = vmatmul.bf16.gmra.mxu0 %v3321
    %v5147 = vpop.f32.mrf.mxu0
    %v5148 = vadd.f32 %v5134, %v5147
    %v5149 = vpop.f32.mrf.mxu0
    %v5150 = vadd.f32 %v5136, %v5149
    %5151 = vdwg.mxu0
    %5152 = vmatpush.bf16.msra.mxu0 %v4518
    %5153 = vmatpush.bf16.msra.mxu0 %v4514
    %5154 = vmatpush.bf16.msra.mxu0 %v4510
    %5155 = vmatpush.bf16.msra.mxu0 %v4506
    %5156 = vmatpush.bf16.msra.mxu0 %v4502
    %5157 = vmatpush.bf16.msra.mxu0 %v4498
    %5158 = vmatpush.bf16.msra.mxu0 %v4494
    %5159 = vmatpush.bf16.msra.mxu0 %v4490
    %5160 = vmatmul.bf16.gmra.mxu0 %v3322
    %v5161 = vpop.f32.mrf.mxu0
    %v5162 = vadd.f32 %v5148, %v5161
    %v5163 = vpop.f32.mrf.mxu0
    %v5164 = vadd.f32 %v5150, %v5163
    %5165 = vdwg.mxu0
    %5166 = vmatpush.bf16.msra.mxu0 %v4550
    %5167 = vmatpush.bf16.msra.mxu0 %v4546
    %5168 = vmatpush.bf16.msra.mxu0 %v4542
    %5169 = vmatpush.bf16.msra.mxu0 %v4538
    %5170 = vmatpush.bf16.msra.mxu0 %v4534
    %5171 = vmatpush.bf16.msra.mxu0 %v4530
    %5172 = vmatpush.bf16.msra.mxu0 %v4526
    %5173 = vmatpush.bf16.msra.mxu0 %v4522
    %5174 = vmatmul.bf16.gmra.mxu0 %v3323
    %v5175 = vpop.f32.mrf.mxu0
    %v5176 = vadd.f32 %v5162, %v5175
    %v5177 = vpop.f32.mrf.mxu0
    %v5178 = vadd.f32 %v5164, %v5177
    %5179 = vdwg.mxu0
    %5180 = vmatpush.bf16.msra.mxu0 %v4582
    %5181 = vmatpush.bf16.msra.mxu0 %v4578
    %5182 = vmatpush.bf16.msra.mxu0 %v4574
    %5183 = vmatpush.bf16.msra.mxu0 %v4570
    %5184 = vmatpush.bf16.msra.mxu0 %v4566
    %5185 = vmatpush.bf16.msra.mxu0 %v4562
    %5186 = vmatpush.bf16.msra.mxu0 %v4558
    %5187 = vmatpush.bf16.msra.mxu0 %v4554
    %5188 = vmatmul.bf16.gmra.mxu0 %v3324
    %v5189 = vpop.f32.mrf.mxu0
    %v5190 = vadd.f32 %v5176, %v5189
    %v5191 = vpop.f32.mrf.mxu0
    %v5192 = vadd.f32 %v5178, %v5191
    %5193 = vdwg.mxu0
    %5194 = vmatpush.bf16.msra.mxu0 %v4614
    %5195 = vmatpush.bf16.msra.mxu0 %v4610
    %5196 = vmatpush.bf16.msra.mxu0 %v4606
    %5197 = vmatpush.bf16.msra.mxu0 %v4602
    %5198 = vmatpush.bf16.msra.mxu0 %v4598
    %5199 = vmatpush.bf16.msra.mxu0 %v4594
    %5200 = vmatpush.bf16.msra.mxu0 %v4590
    %5201 = vmatpush.bf16.msra.mxu0 %v4586
    %5202 = vmatmul.bf16.gmra.mxu0 %v3325
    %v5203 = vpop.f32.mrf.mxu0
    %v5204 = vadd.f32 %v5190, %v5203
    %v5205 = vpop.f32.mrf.mxu0
    %v5206 = vadd.f32 %v5192, %v5205
    %5207 = vdwg.mxu0
    %5208 = vmatpush.bf16.msra.mxu0 %v4391
    %5209 = vmatpush.bf16.msra.mxu0 %v4387
    %5210 = vmatpush.bf16.msra.mxu0 %v4383
    %5211 = vmatpush.bf16.msra.mxu0 %v4379
    %5212 = vmatpush.bf16.msra.mxu0 %v4375
    %5213 = vmatpush.bf16.msra.mxu0 %v4371
    %5214 = vmatpush.bf16.msra.mxu0 %v4367
    %5215 = vmatpush.bf16.msra.mxu0 %v4363
    %5216 = vmatmul.bf16.gmra.mxu0 %v3318
    %v5217 = vpop.f32.mrf.mxu0
    %v5218 = vadd.f32 %v3587, %v5217
    %v5219 = vpop.f32.mrf.mxu0
    %v5220 = vadd.f32 %v3587, %v5219
    %5221 = vdwg.mxu0
    %5222 = vmatpush.bf16.msra.mxu0 %v4423
    %5223 = vmatpush.bf16.msra.mxu0 %v4419
    %5224 = vmatpush.bf16.msra.mxu0 %v4415
    %5225 = vmatpush.bf16.msra.mxu0 %v4411
    %5226 = vmatpush.bf16.msra.mxu0 %v4407
    %5227 = vmatpush.bf16.msra.mxu0 %v4403
    %5228 = vmatpush.bf16.msra.mxu0 %v4399
    %5229 = vmatpush.bf16.msra.mxu0 %v4395
    %5230 = vmatmul.bf16.gmra.mxu0 %v3319
    %v5231 = vpop.f32.mrf.mxu0
    %v5232 = vadd.f32 %v5218, %v5231
    %v5233 = vpop.f32.mrf.mxu0
    %v5234 = vadd.f32 %v5220, %v5233
    %5235 = vdwg.mxu0
    %5236 = vmatpush.bf16.msra.mxu0 %v4455
    %5237 = vmatpush.bf16.msra.mxu0 %v4451
    %5238 = vmatpush.bf16.msra.mxu0 %v4447
    %5239 = vmatpush.bf16.msra.mxu0 %v4443
    %5240 = vmatpush.bf16.msra.mxu0 %v4439
    %5241 = vmatpush.bf16.msra.mxu0 %v4435
    %5242 = vmatpush.bf16.msra.mxu0 %v4431
    %5243 = vmatpush.bf16.msra.mxu0 %v4427
    %5244 = vmatmul.bf16.gmra.mxu0 %v3320
    %v5245 = vpop.f32.mrf.mxu0
    %v5246 = vadd.f32 %v5232, %v5245
    %v5247 = vpop.f32.mrf.mxu0
    %v5248 = vadd.f32 %v5234, %v5247
    %5249 = vdwg.mxu0
    %5250 = vmatpush.bf16.msra.mxu0 %v4487
    %5251 = vmatpush.bf16.msra.mxu0 %v4483
    %5252 = vmatpush.bf16.msra.mxu0 %v4479
    %5253 = vmatpush.bf16.msra.mxu0 %v4475
    %5254 = vmatpush.bf16.msra.mxu0 %v4471
    %5255 = vmatpush.bf16.msra.mxu0 %v4467
    %5256 = vmatpush.bf16.msra.mxu0 %v4463
    %5257 = vmatpush.bf16.msra.mxu0 %v4459
    %5258 = vmatmul.bf16.gmra.mxu0 %v3321
    %v5259 = vpop.f32.mrf.mxu0
    %v5260 = vadd.f32 %v5246, %v5259
    %v5261 = vpop.f32.mrf.mxu0
    %v5262 = vadd.f32 %v5248, %v5261
    %5263 = vdwg.mxu0
    %5264 = vmatpush.bf16.msra.mxu0 %v4519
    %5265 = vmatpush.bf16.msra.mxu0 %v4515
    %5266 = vmatpush.bf16.msra.mxu0 %v4511
    %5267 = vmatpush.bf16.msra.mxu0 %v4507
    %5268 = vmatpush.bf16.msra.mxu0 %v4503
    %5269 = vmatpush.bf16.msra.mxu0 %v4499
    %5270 = vmatpush.bf16.msra.mxu0 %v4495
    %5271 = vmatpush.bf16.msra.mxu0 %v4491
    %5272 = vmatmul.bf16.gmra.mxu0 %v3322
    %v5273 = vpop.f32.mrf.mxu0
    %v5274 = vadd.f32 %v5260, %v5273
    %v5275 = vpop.f32.mrf.mxu0
    %v5276 = vadd.f32 %v5262, %v5275
    %5277 = vdwg.mxu0
    %5278 = vmatpush.bf16.msra.mxu0 %v4551
    %5279 = vmatpush.bf16.msra.mxu0 %v4547
    %5280 = vmatpush.bf16.msra.mxu0 %v4543
    %5281 = vmatpush.bf16.msra.mxu0 %v4539
    %5282 = vmatpush.bf16.msra.mxu0 %v4535
    %5283 = vmatpush.bf16.msra.mxu0 %v4531
    %5284 = vmatpush.bf16.msra.mxu0 %v4527
    %5285 = vmatpush.bf16.msra.mxu0 %v4523
    %5286 = vmatmul.bf16.gmra.mxu0 %v3323
    %v5287 = vpop.f32.mrf.mxu0
    %v5288 = vadd.f32 %v5274, %v5287
    %v5289 = vpop.f32.mrf.mxu0
    %v5290 = vadd.f32 %v5276, %v5289
    %5291 = vdwg.mxu0
    %5292 = vmatpush.bf16.msra.mxu0 %v4583
    %5293 = vmatpush.bf16.msra.mxu0 %v4579
    %5294 = vmatpush.bf16.msra.mxu0 %v4575
    %5295 = vmatpush.bf16.msra.mxu0 %v4571
    %5296 = vmatpush.bf16.msra.mxu0 %v4567
    %5297 = vmatpush.bf16.msra.mxu0 %v4563
    %5298 = vmatpush.bf16.msra.mxu0 %v4559
    %5299 = vmatpush.bf16.msra.mxu0 %v4555
    %5300 = vmatmul.bf16.gmra.mxu0 %v3324
    %v5301 = vpop.f32.mrf.mxu0
    %v5302 = vadd.f32 %v5288, %v5301
    %v5303 = vpop.f32.mrf.mxu0
    %v5304 = vadd.f32 %v5290, %v5303
    %5305 = vdwg.mxu0
    %5306 = vmatpush.bf16.msra.mxu0 %v4615
    %5307 = vmatpush.bf16.msra.mxu0 %v4611
    %5308 = vmatpush.bf16.msra.mxu0 %v4607
    %5309 = vmatpush.bf16.msra.mxu0 %v4603
    %5310 = vmatpush.bf16.msra.mxu0 %v4599
    %5311 = vmatpush.bf16.msra.mxu0 %v4595
    %5312 = vmatpush.bf16.msra.mxu0 %v4591
    %5313 = vmatpush.bf16.msra.mxu0 %v4587
    %5314 = vmatmul.bf16.gmra.mxu0 %v3325
    %v5315 = vpop.f32.mrf.mxu0
    %v5316 = vadd.f32 %v5302, %v5315
    %v5317 = vpop.f32.mrf.mxu0
    %v5318 = vadd.f32 %v5304, %v5317
    %5319 = vdwg.mxu0
    %v5320 = vmax.f32 %v4980, 0.0
    %v5321 = vmax.f32 %v5092, 0.0
    %v5322 = vmax.f32 %v5204, 0.0
    %v5323 = vmax.f32 %v5316, 0.0
    %v5324 = vmax.f32 %v4982, 0.0
    %v5325 = vmax.f32 %v5094, 0.0
    %v5326 = vmax.f32 %v5206, 0.0
    %v5327 = vmax.f32 %v5318, 0.0
    %v5328 = vpack.c.bf16 %v5324, %v5320
    %v5329 = vpack.c.bf16 %v5325, %v5321
    %v5330 = vpack.c.bf16 %v5326, %v5322
    %v5331 = vpack.c.bf16 %v5327, %v5323
    %v5332 = vld [vmem:[#allocation10] sm:$0xff]
    %v5333 = vld [vmem:[#allocation10 + $0x8] sm:$0xff]
    %v5334 = vld [vmem:[#allocation10 + $0x10] sm:$0xff]
    %v5335 = vld [vmem:[#allocation10 + $0x18] sm:$0xff]
    %v5336 = vld [vmem:[#allocation10 + $0x20] sm:$0xff]
    %v5337 = vld [vmem:[#allocation10 + $0x28] sm:$0xff]
    %v5338 = vld [vmem:[#allocation10 + $0x30] sm:$0xff]
    %v5339 = vld [vmem:[#allocation10 + $0x38] sm:$0xff]
    %v5340 = vld [vmem:[#allocation10 + $0x40] sm:$0xff]
    %v5341 = vld [vmem:[#allocation10 + $0x48] sm:$0xff]
    %v5342 = vld [vmem:[#allocation10 + $0x50] sm:$0xff]
    %v5343 = vld [vmem:[#allocation10 + $0x58] sm:$0xff]
    %v5344 = vld [vmem:[#allocation10 + $0x60] sm:$0xff]
    %v5345 = vld [vmem:[#allocation10 + $0x68] sm:$0xff]
    %v5346 = vld [vmem:[#allocation10 + $0x70] sm:$0xff]
    %v5347 = vld [vmem:[#allocation10 + $0x78] sm:$0xff]
    %v5348 = vld [vmem:[#allocation10 + $0x80] sm:$0xff]
    %v5349 = vld [vmem:[#allocation10 + $0x88] sm:$0xff]
    %v5350 = vld [vmem:[#allocation10 + $0x90] sm:$0xff]
    %v5351 = vld [vmem:[#allocation10 + $0x98] sm:$0xff]
    %v5352 = vld [vmem:[#allocation10 + $0xa0] sm:$0xff]
    %v5353 = vld [vmem:[#allocation10 + $0xa8] sm:$0xff]
    %v5354 = vld [vmem:[#allocation10 + $0xb0] sm:$0xff]
    %v5355 = vld [vmem:[#allocation10 + $0xb8] sm:$0xff]
    %v5356 = vld [vmem:[#allocation10 + $0xc0] sm:$0xff]
    %v5357 = vld [vmem:[#allocation10 + $0xc8] sm:$0xff]
    %v5358 = vld [vmem:[#allocation10 + $0xd0] sm:$0xff]
    %v5359 = vld [vmem:[#allocation10 + $0xd8] sm:$0xff]
    %v5360 = vld [vmem:[#allocation10 + $0xe0] sm:$0xff]
    %v5361 = vld [vmem:[#allocation10 + $0xe8] sm:$0xff]
    %v5362 = vld [vmem:[#allocation10 + $0xf0] sm:$0xff]
    %v5363 = vld [vmem:[#allocation10 + $0xf8] sm:$0xff]
    %v5364 = vld [vmem:[#allocation10 + $0x100] sm:$0xff]
    %v5365 = vld [vmem:[#allocation10 + $0x108] sm:$0xff]
    %v5366 = vld [vmem:[#allocation10 + $0x110] sm:$0xff]
    %v5367 = vld [vmem:[#allocation10 + $0x118] sm:$0xff]
    %v5368 = vld [vmem:[#allocation10 + $0x120] sm:$0xff]
    %v5369 = vld [vmem:[#allocation10 + $0x128] sm:$0xff]
    %v5370 = vld [vmem:[#allocation10 + $0x130] sm:$0xff]
    %v5371 = vld [vmem:[#allocation10 + $0x138] sm:$0xff]
    %v5372 = vld [vmem:[#allocation10 + $0x140] sm:$0xff]
    %v5373 = vld [vmem:[#allocation10 + $0x148] sm:$0xff]
    %v5374 = vld [vmem:[#allocation10 + $0x150] sm:$0xff]
    %v5375 = vld [vmem:[#allocation10 + $0x158] sm:$0xff]
    %v5376 = vld [vmem:[#allocation10 + $0x160] sm:$0xff]
    %v5377 = vld [vmem:[#allocation10 + $0x168] sm:$0xff]
    %v5378 = vld [vmem:[#allocation10 + $0x170] sm:$0xff]
    %v5379 = vld [vmem:[#allocation10 + $0x178] sm:$0xff]
    %v5380 = vld [vmem:[#allocation10 + $0x180] sm:$0xff]
    %v5381 = vld [vmem:[#allocation10 + $0x188] sm:$0xff]
    %v5382 = vld [vmem:[#allocation10 + $0x190] sm:$0xff]
    %v5383 = vld [vmem:[#allocation10 + $0x198] sm:$0xff]
    %v5384 = vld [vmem:[#allocation10 + $0x1a0] sm:$0xff]
    %v5385 = vld [vmem:[#allocation10 + $0x1a8] sm:$0xff]
    %v5386 = vld [vmem:[#allocation10 + $0x1b0] sm:$0xff]
    %v5387 = vld [vmem:[#allocation10 + $0x1b8] sm:$0xff]
    %v5388 = vld [vmem:[#allocation10 + $0x1c0] sm:$0xff]
    %v5389 = vld [vmem:[#allocation10 + $0x1c8] sm:$0xff]
    %v5390 = vld [vmem:[#allocation10 + $0x1d0] sm:$0xff]
    %v5391 = vld [vmem:[#allocation10 + $0x1d8] sm:$0xff]
    %v5392 = vld [vmem:[#allocation10 + $0x1e0] sm:$0xff]
    %v5393 = vld [vmem:[#allocation10 + $0x1e8] sm:$0xff]
    %v5394 = vld [vmem:[#allocation10 + $0x1f0] sm:$0xff]
    %v5395 = vld [vmem:[#allocation10 + $0x1f8] sm:$0xff]
    %v5396 = vld [vmem:[#allocation11] sm:$0x3]
    %v5398 = vperm.slane %v5396, 0
    %v5399 = vperm.slane %v5396, 1
    %v5466 = vunpack.c.l.b16 %v5332
    %v5467 = vunpack.c.h.b16 %v5332
    %v5468 = vunpack.c.l.b16 %v5333
    %v5469 = vunpack.c.h.b16 %v5333
    %v5470 = vunpack.c.l.b16 %v5334
    %v5471 = vunpack.c.h.b16 %v5334
    %v5472 = vunpack.c.l.b16 %v5335
    %v5473 = vunpack.c.h.b16 %v5335
    %v5474 = vunpack.c.l.b16 %v5336
    %v5475 = vunpack.c.h.b16 %v5336
    %v5476 = vunpack.c.l.b16 %v5337
    %v5477 = vunpack.c.h.b16 %v5337
    %v5478 = vunpack.c.l.b16 %v5338
    %v5479 = vunpack.c.h.b16 %v5338
    %v5480 = vunpack.c.l.b16 %v5339
    %v5481 = vunpack.c.h.b16 %v5339
    %v5482 = vunpack.c.l.b16 %v5340
    %v5483 = vunpack.c.h.b16 %v5340
    %v5484 = vunpack.c.l.b16 %v5341
    %v5485 = vunpack.c.h.b16 %v5341
    %v5486 = vunpack.c.l.b16 %v5342
    %v5487 = vunpack.c.h.b16 %v5342
    %v5488 = vunpack.c.l.b16 %v5343
    %v5489 = vunpack.c.h.b16 %v5343
    %v5490 = vunpack.c.l.b16 %v5344
    %v5491 = vunpack.c.h.b16 %v5344
    %v5492 = vunpack.c.l.b16 %v5345
    %v5493 = vunpack.c.h.b16 %v5345
    %v5494 = vunpack.c.l.b16 %v5346
    %v5495 = vunpack.c.h.b16 %v5346
    %v5496 = vunpack.c.l.b16 %v5347
    %v5497 = vunpack.c.h.b16 %v5347
    %v5498 = vunpack.c.l.b16 %v5348
    %v5499 = vunpack.c.h.b16 %v5348
    %v5500 = vunpack.c.l.b16 %v5349
    %v5501 = vunpack.c.h.b16 %v5349
    %v5502 = vunpack.c.l.b16 %v5350
    %v5503 = vunpack.c.h.b16 %v5350
    %v5504 = vunpack.c.l.b16 %v5351
    %v5505 = vunpack.c.h.b16 %v5351
    %v5506 = vunpack.c.l.b16 %v5352
    %v5507 = vunpack.c.h.b16 %v5352
    %v5508 = vunpack.c.l.b16 %v5353
    %v5509 = vunpack.c.h.b16 %v5353
    %v5510 = vunpack.c.l.b16 %v5354
    %v5511 = vunpack.c.h.b16 %v5354
    %v5512 = vunpack.c.l.b16 %v5355
    %v5513 = vunpack.c.h.b16 %v5355
    %v5514 = vunpack.c.l.b16 %v5356
    %v5515 = vunpack.c.h.b16 %v5356
    %v5516 = vunpack.c.l.b16 %v5357
    %v5517 = vunpack.c.h.b16 %v5357
    %v5518 = vunpack.c.l.b16 %v5358
    %v5519 = vunpack.c.h.b16 %v5358
    %v5520 = vunpack.c.l.b16 %v5359
    %v5521 = vunpack.c.h.b16 %v5359
    %v5522 = vunpack.c.l.b16 %v5360
    %v5523 = vunpack.c.h.b16 %v5360
    %v5524 = vunpack.c.l.b16 %v5361
    %v5525 = vunpack.c.h.b16 %v5361
    %v5526 = vunpack.c.l.b16 %v5362
    %v5527 = vunpack.c.h.b16 %v5362
    %v5528 = vunpack.c.l.b16 %v5363
    %v5529 = vunpack.c.h.b16 %v5363
    %v5530 = vunpack.c.l.b16 %v5364
    %v5531 = vunpack.c.h.b16 %v5364
    %v5532 = vunpack.c.l.b16 %v5365
    %v5533 = vunpack.c.h.b16 %v5365
    %v5534 = vunpack.c.l.b16 %v5366
    %v5535 = vunpack.c.h.b16 %v5366
    %v5536 = vunpack.c.l.b16 %v5367
    %v5537 = vunpack.c.h.b16 %v5367
    %v5538 = vunpack.c.l.b16 %v5368
    %v5539 = vunpack.c.h.b16 %v5368
    %v5540 = vunpack.c.l.b16 %v5369
    %v5541 = vunpack.c.h.b16 %v5369
    %v5542 = vunpack.c.l.b16 %v5370
    %v5543 = vunpack.c.h.b16 %v5370
    %v5544 = vunpack.c.l.b16 %v5371
    %v5545 = vunpack.c.h.b16 %v5371
    %v5546 = vunpack.c.l.b16 %v5372
    %v5547 = vunpack.c.h.b16 %v5372
    %v5548 = vunpack.c.l.b16 %v5373
    %v5549 = vunpack.c.h.b16 %v5373
    %v5550 = vunpack.c.l.b16 %v5374
    %v5551 = vunpack.c.h.b16 %v5374
    %v5552 = vunpack.c.l.b16 %v5375
    %v5553 = vunpack.c.h.b16 %v5375
    %v5554 = vunpack.c.l.b16 %v5376
    %v5555 = vunpack.c.h.b16 %v5376
    %v5556 = vunpack.c.l.b16 %v5377
    %v5557 = vunpack.c.h.b16 %v5377
    %v5558 = vunpack.c.l.b16 %v5378
    %v5559 = vunpack.c.h.b16 %v5378
    %v5560 = vunpack.c.l.b16 %v5379
    %v5561 = vunpack.c.h.b16 %v5379
    %v5562 = vunpack.c.l.b16 %v5380
    %v5563 = vunpack.c.h.b16 %v5380
    %v5564 = vunpack.c.l.b16 %v5381
    %v5565 = vunpack.c.h.b16 %v5381
    %v5566 = vunpack.c.l.b16 %v5382
    %v5567 = vunpack.c.h.b16 %v5382
    %v5568 = vunpack.c.l.b16 %v5383
    %v5569 = vunpack.c.h.b16 %v5383
    %v5570 = vunpack.c.l.b16 %v5384
    %v5571 = vunpack.c.h.b16 %v5384
    %v5572 = vunpack.c.l.b16 %v5385
    %v5573 = vunpack.c.h.b16 %v5385
    %v5574 = vunpack.c.l.b16 %v5386
    %v5575 = vunpack.c.h.b16 %v5386
    %v5576 = vunpack.c.l.b16 %v5387
    %v5577 = vunpack.c.h.b16 %v5387
    %v5578 = vunpack.c.l.b16 %v5388
    %v5579 = vunpack.c.h.b16 %v5388
    %v5580 = vunpack.c.l.b16 %v5389
    %v5581 = vunpack.c.h.b16 %v5389
    %v5582 = vunpack.c.l.b16 %v5390
    %v5583 = vunpack.c.h.b16 %v5390
    %v5584 = vunpack.c.l.b16 %v5391
    %v5585 = vunpack.c.h.b16 %v5391
    %v5586 = vunpack.c.l.b16 %v5392
    %v5587 = vunpack.c.h.b16 %v5392
    %v5588 = vunpack.c.l.b16 %v5393
    %v5589 = vunpack.c.h.b16 %v5393
    %v5590 = vunpack.c.l.b16 %v5394
    %v5591 = vunpack.c.h.b16 %v5394
    %v5592 = vunpack.c.l.b16 %v5395
    %v5593 = vunpack.c.h.b16 %v5395
    %v5594 = vpack.c.b16 %v5468, %v5466
    %v5595 = vpack.c.b16 %v5469, %v5467
    %v5596 = vpack.c.b16 %v5472, %v5470
    %v5597 = vpack.c.b16 %v5473, %v5471
    %v5598 = vpack.c.b16 %v5476, %v5474
    %v5599 = vpack.c.b16 %v5477, %v5475
    %v5600 = vpack.c.b16 %v5480, %v5478
    %v5601 = vpack.c.b16 %v5481, %v5479
    %v5602 = vpack.c.b16 %v5484, %v5482
    %v5603 = vpack.c.b16 %v5485, %v5483
    %v5604 = vpack.c.b16 %v5488, %v5486
    %v5605 = vpack.c.b16 %v5489, %v5487
    %v5606 = vpack.c.b16 %v5492, %v5490
    %v5607 = vpack.c.b16 %v5493, %v5491
    %v5608 = vpack.c.b16 %v5496, %v5494
    %v5609 = vpack.c.b16 %v5497, %v5495
    %v5610 = vpack.c.b16 %v5500, %v5498
    %v5611 = vpack.c.b16 %v5501, %v5499
    %v5612 = vpack.c.b16 %v5504, %v5502
    %v5613 = vpack.c.b16 %v5505, %v5503
    %v5614 = vpack.c.b16 %v5508, %v5506
    %v5615 = vpack.c.b16 %v5509, %v5507
    %v5616 = vpack.c.b16 %v5512, %v5510
    %v5617 = vpack.c.b16 %v5513, %v5511
    %v5618 = vpack.c.b16 %v5516, %v5514
    %v5619 = vpack.c.b16 %v5517, %v5515
    %v5620 = vpack.c.b16 %v5520, %v5518
    %v5621 = vpack.c.b16 %v5521, %v5519
    %v5622 = vpack.c.b16 %v5524, %v5522
    %v5623 = vpack.c.b16 %v5525, %v5523
    %v5624 = vpack.c.b16 %v5528, %v5526
    %v5625 = vpack.c.b16 %v5529, %v5527
    %v5626 = vpack.c.b16 %v5532, %v5530
    %v5627 = vpack.c.b16 %v5533, %v5531
    %v5628 = vpack.c.b16 %v5536, %v5534
    %v5629 = vpack.c.b16 %v5537, %v5535
    %v5630 = vpack.c.b16 %v5540, %v5538
    %v5631 = vpack.c.b16 %v5541, %v5539
    %v5632 = vpack.c.b16 %v5544, %v5542
    %v5633 = vpack.c.b16 %v5545, %v5543
    %v5634 = vpack.c.b16 %v5548, %v5546
    %v5635 = vpack.c.b16 %v5549, %v5547
    %v5636 = vpack.c.b16 %v5552, %v5550
    %v5637 = vpack.c.b16 %v5553, %v5551
    %v5638 = vpack.c.b16 %v5556, %v5554
    %v5639 = vpack.c.b16 %v5557, %v5555
    %v5640 = vpack.c.b16 %v5560, %v5558
    %v5641 = vpack.c.b16 %v5561, %v5559
    %v5642 = vpack.c.b16 %v5564, %v5562
    %v5643 = vpack.c.b16 %v5565, %v5563
    %v5644 = vpack.c.b16 %v5568, %v5566
    %v5645 = vpack.c.b16 %v5569, %v5567
    %v5646 = vpack.c.b16 %v5572, %v5570
    %v5647 = vpack.c.b16 %v5573, %v5571
    %v5648 = vpack.c.b16 %v5576, %v5574
    %v5649 = vpack.c.b16 %v5577, %v5575
    %v5650 = vpack.c.b16 %v5580, %v5578
    %v5651 = vpack.c.b16 %v5581, %v5579
    %v5652 = vpack.c.b16 %v5584, %v5582
    %v5653 = vpack.c.b16 %v5585, %v5583
    %v5654 = vpack.c.b16 %v5588, %v5586
    %v5655 = vpack.c.b16 %v5589, %v5587
    %v5656 = vpack.c.b16 %v5592, %v5590
    %v5657 = vpack.c.b16 %v5593, %v5591
    %5722 = vmatpush.bf16.msra.mxu0 %v5608
    %5723 = vmatpush.bf16.msra.mxu0 %v5606
    %5724 = vmatpush.bf16.msra.mxu0 %v5604
    %5725 = vmatpush.bf16.msra.mxu0 %v5602
    %5726 = vmatpush.bf16.msra.mxu0 %v5600
    %5727 = vmatpush.bf16.msra.mxu0 %v5598
    %5728 = vmatpush.bf16.msra.mxu0 %v5596
    %5729 = vmatpush.bf16.msra.mxu0 %v5594
    %5730 = vmatmul.bf16.gmra.mxu0 %v5328
    %v5731 = vpop.f32.mrf.mxu0
    %v5732 = vadd.f32 %v5398, %v5731
    %v5733 = vpop.f32.mrf.mxu0
    %v5734 = vadd.f32 %v5398, %v5733
    %5735 = vdwg.mxu0
    %5736 = vmatpush.bf16.msra.mxu0 %v5624
    %5737 = vmatpush.bf16.msra.mxu0 %v5622
    %5738 = vmatpush.bf16.msra.mxu0 %v5620
    %5739 = vmatpush.bf16.msra.mxu0 %v5618
    %5740 = vmatpush.bf16.msra.mxu0 %v5616
    %5741 = vmatpush.bf16.msra.mxu0 %v5614
    %5742 = vmatpush.bf16.msra.mxu0 %v5612
    %5743 = vmatpush.bf16.msra.mxu0 %v5610
    %5744 = vmatmul.bf16.gmra.mxu0 %v5329
    %v5745 = vpop.f32.mrf.mxu0
    %v5746 = vadd.f32 %v5732, %v5745
    %v5747 = vpop.f32.mrf.mxu0
    %v5748 = vadd.f32 %v5734, %v5747
    %5749 = vdwg.mxu0
    %5750 = vmatpush.bf16.msra.mxu0 %v5640
    %5751 = vmatpush.bf16.msra.mxu0 %v5638
    %5752 = vmatpush.bf16.msra.mxu0 %v5636
    %5753 = vmatpush.bf16.msra.mxu0 %v5634
    %5754 = vmatpush.bf16.msra.mxu0 %v5632
    %5755 = vmatpush.bf16.msra.mxu0 %v5630
    %5756 = vmatpush.bf16.msra.mxu0 %v5628
    %5757 = vmatpush.bf16.msra.mxu0 %v5626
    %5758 = vmatmul.bf16.gmra.mxu0 %v5330
    %v5759 = vpop.f32.mrf.mxu0
    %v5760 = vadd.f32 %v5746, %v5759
    %v5761 = vpop.f32.mrf.mxu0
    %v5762 = vadd.f32 %v5748, %v5761
    %5763 = vdwg.mxu0
    %5764 = vmatpush.bf16.msra.mxu0 %v5656
    %5765 = vmatpush.bf16.msra.mxu0 %v5654
    %5766 = vmatpush.bf16.msra.mxu0 %v5652
    %5767 = vmatpush.bf16.msra.mxu0 %v5650
    %5768 = vmatpush.bf16.msra.mxu0 %v5648
    %5769 = vmatpush.bf16.msra.mxu0 %v5646
    %5770 = vmatpush.bf16.msra.mxu0 %v5644
    %5771 = vmatpush.bf16.msra.mxu0 %v5642
    %5772 = vmatmul.bf16.gmra.mxu0 %v5331
    %v5773 = vpop.f32.mrf.mxu0
    %v5774 = vadd.f32 %v5760, %v5773
    %v5775 = vpop.f32.mrf.mxu0
    %v5776 = vadd.f32 %v5762, %v5775
    %5777 = vdwg.mxu0
    %5778 = vmatpush.bf16.msra.mxu0 %v5609
    %5779 = vmatpush.bf16.msra.mxu0 %v5607
    %5780 = vmatpush.bf16.msra.mxu0 %v5605
    %5781 = vmatpush.bf16.msra.mxu0 %v5603
    %5782 = vmatpush.bf16.msra.mxu0 %v5601
    %5783 = vmatpush.bf16.msra.mxu0 %v5599
    %5784 = vmatpush.bf16.msra.mxu0 %v5597
    %5785 = vmatpush.bf16.msra.mxu0 %v5595
    %5786 = vmatmul.bf16.gmra.mxu0 %v5328
    %v5787 = vpop.f32.mrf.mxu0
    %v5788 = vadd.f32 %v5399, %v5787
    %v5789 = vpop.f32.mrf.mxu0
    %v5790 = vadd.f32 %v5399, %v5789
    %5791 = vdwg.mxu0
    %5792 = vmatpush.bf16.msra.mxu0 %v5625
    %5793 = vmatpush.bf16.msra.mxu0 %v5623
    %5794 = vmatpush.bf16.msra.mxu0 %v5621
    %5795 = vmatpush.bf16.msra.mxu0 %v5619
    %5796 = vmatpush.bf16.msra.mxu0 %v5617
    %5797 = vmatpush.bf16.msra.mxu0 %v5615
    %5798 = vmatpush.bf16.msra.mxu0 %v5613
    %5799 = vmatpush.bf16.msra.mxu0 %v5611
    %5800 = vmatmul.bf16.gmra.mxu0 %v5329
    %v5801 = vpop.f32.mrf.mxu0
    %v5802 = vadd.f32 %v5788, %v5801
    %v5803 = vpop.f32.mrf.mxu0
    %v5804 = vadd.f32 %v5790, %v5803
    %5805 = vdwg.mxu0
    %5806 = vmatpush.bf16.msra.mxu0 %v5641
    %5807 = vmatpush.bf16.msra.mxu0 %v5639
    %5808 = vmatpush.bf16.msra.mxu0 %v5637
    %5809 = vmatpush.bf16.msra.mxu0 %v5635
    %5810 = vmatpush.bf16.msra.mxu0 %v5633
    %5811 = vmatpush.bf16.msra.mxu0 %v5631
    %5812 = vmatpush.bf16.msra.mxu0 %v5629
    %5813 = vmatpush.bf16.msra.mxu0 %v5627
    %5814 = vmatmul.bf16.gmra.mxu0 %v5330
    %v5815 = vpop.f32.mrf.mxu0
    %v5816 = vadd.f32 %v5802, %v5815
    %v5817 = vpop.f32.mrf.mxu0
    %v5818 = vadd.f32 %v5804, %v5817
    %5819 = vdwg.mxu0
    %5820 = vmatpush.bf16.msra.mxu0 %v5657
    %5821 = vmatpush.bf16.msra.mxu0 %v5655
    %5822 = vmatpush.bf16.msra.mxu0 %v5653
    %5823 = vmatpush.bf16.msra.mxu0 %v5651
    %5824 = vmatpush.bf16.msra.mxu0 %v5649
    %5825 = vmatpush.bf16.msra.mxu0 %v5647
    %5826 = vmatpush.bf16.msra.mxu0 %v5645
    %5827 = vmatpush.bf16.msra.mxu0 %v5643
    %5828 = vmatmul.bf16.gmra.mxu0 %v5331
    %v5829 = vpop.f32.mrf.mxu0
    %v5830 = vadd.f32 %v5816, %v5829
    %v5831 = vpop.f32.mrf.mxu0
    %v5832 = vadd.f32 %v5818, %v5831
    %5833 = vdwg.mxu0
    %v5834 = vmax.f32 %v5774, 0.0
    %v5835 = vmax.f32 %v5830, 0.0
    %v5836 = vmax.f32 %v5776, 0.0
    %v5837 = vmax.f32 %v5832, 0.0
    %v5838 = vpack.c.bf16 %v5836, %v5834
    %v5839 = vpack.c.bf16 %v5837, %v5835
    %v5840 = vld [vmem:[%s7] sm:$0xf]
    %v5841 = vld [vmem:[%s7 + $0x4] sm:$0xf]
    %v5842 = vld [vmem:[%s7 + $0x8] sm:$0xf]
    %v5843 = vld [vmem:[%s7 + $0xc] sm:$0xf]
    %v5844 = vld [vmem:[%s7 + $0x10] sm:$0xf]
    %v5845 = vld [vmem:[%s7 + $0x14] sm:$0xf]
    %v5846 = vld [vmem:[%s7 + $0x18] sm:$0xf]
    %v5847 = vld [vmem:[%s7 + $0x1c] sm:$0xf]
    %v5848 = vld [vmem:[%s7 + $0x20] sm:$0xf]
    %v5849 = vld [vmem:[%s7 + $0x24] sm:$0xf]
    %v5850 = vld [vmem:[%s7 + $0x28] sm:$0xf]
    %v5851 = vld [vmem:[%s7 + $0x2c] sm:$0xf]
    %v5852 = vld [vmem:[%s7 + $0x30] sm:$0xf]
    %v5853 = vld [vmem:[%s7 + $0x34] sm:$0xf]
    %v5854 = vld [vmem:[%s7 + $0x38] sm:$0xf]
    %v5855 = vld [vmem:[%s7 + $0x3c] sm:$0xf]
    %v5856 = vld [vmem:[%s7 + $0x40] sm:$0xf]
    %v5857 = vld [vmem:[%s7 + $0x44] sm:$0xf]
    %v5858 = vld [vmem:[%s7 + $0x48] sm:$0xf]
    %v5859 = vld [vmem:[%s7 + $0x4c] sm:$0xf]
    %v5860 = vld [vmem:[%s7 + $0x50] sm:$0xf]
    %v5861 = vld [vmem:[%s7 + $0x54] sm:$0xf]
    %v5862 = vld [vmem:[%s7 + $0x58] sm:$0xf]
    %v5863 = vld [vmem:[%s7 + $0x5c] sm:$0xf]
    %v5864 = vld [vmem:[%s7 + $0x60] sm:$0xf]
    %v5865 = vld [vmem:[%s7 + $0x64] sm:$0xf]
    %v5866 = vld [vmem:[%s7 + $0x68] sm:$0xf]
    %v5867 = vld [vmem:[%s7 + $0x6c] sm:$0xf]
    %v5868 = vld [vmem:[%s7 + $0x70] sm:$0xf]
    %v5869 = vld [vmem:[%s7 + $0x74] sm:$0xf]
    %v5870 = vld [vmem:[%s7 + $0x78] sm:$0xf]
    %v5871 = vld [vmem:[%s7 + $0x7c] sm:$0xf]
    %v5872 = vld [vmem:[#allocation2] sm:$0x1]
    %v5874 = vperm.slane %v5872, 0
    %v5908 = vunpack.c.l.b16 %v5840
    %v5909 = vunpack.c.l.b16 %v5841
    %v5910 = vunpack.c.l.b16 %v5842
    %v5911 = vunpack.c.l.b16 %v5843
    %v5912 = vunpack.c.l.b16 %v5844
    %v5913 = vunpack.c.l.b16 %v5845
    %v5914 = vunpack.c.l.b16 %v5846
    %v5915 = vunpack.c.l.b16 %v5847
    %v5916 = vunpack.c.l.b16 %v5848
    %v5917 = vunpack.c.l.b16 %v5849
    %v5918 = vunpack.c.l.b16 %v5850
    %v5919 = vunpack.c.l.b16 %v5851
    %v5920 = vunpack.c.l.b16 %v5852
    %v5921 = vunpack.c.l.b16 %v5853
    %v5922 = vunpack.c.l.b16 %v5854
    %v5923 = vunpack.c.l.b16 %v5855
    %v5924 = vunpack.c.l.b16 %v5856
    %v5925 = vunpack.c.l.b16 %v5857
    %v5926 = vunpack.c.l.b16 %v5858
    %v5927 = vunpack.c.l.b16 %v5859
    %v5928 = vunpack.c.l.b16 %v5860
    %v5929 = vunpack.c.l.b16 %v5861
    %v5930 = vunpack.c.l.b16 %v5862
    %v5931 = vunpack.c.l.b16 %v5863
    %v5932 = vunpack.c.l.b16 %v5864
    %v5933 = vunpack.c.l.b16 %v5865
    %v5934 = vunpack.c.l.b16 %v5866
    %v5935 = vunpack.c.l.b16 %v5867
    %v5936 = vunpack.c.l.b16 %v5868
    %v5937 = vunpack.c.l.b16 %v5869
    %v5938 = vunpack.c.l.b16 %v5870
    %v5939 = vunpack.c.l.b16 %v5871
    %v5940 = vpack.c.b16 %v5909, %v5908
    %v5941 = vpack.c.b16 %v5911, %v5910
    %v5942 = vpack.c.b16 %v5913, %v5912
    %v5943 = vpack.c.b16 %v5915, %v5914
    %v5944 = vpack.c.b16 %v5917, %v5916
    %v5945 = vpack.c.b16 %v5919, %v5918
    %v5946 = vpack.c.b16 %v5921, %v5920
    %v5947 = vpack.c.b16 %v5923, %v5922
    %v5948 = vpack.c.b16 %v5925, %v5924
    %v5949 = vpack.c.b16 %v5927, %v5926
    %v5950 = vpack.c.b16 %v5929, %v5928
    %v5951 = vpack.c.b16 %v5931, %v5930
    %v5952 = vpack.c.b16 %v5933, %v5932
    %v5953 = vpack.c.b16 %v5935, %v5934
    %v5954 = vpack.c.b16 %v5937, %v5936
    %v5955 = vpack.c.b16 %v5939, %v5938
    %5972 = vmatpush.bf16.msra.mxu0 %v5947
    %5973 = vmatpush.bf16.msra.mxu0 %v5946
    %5974 = vmatpush.bf16.msra.mxu0 %v5945
    %5975 = vmatpush.bf16.msra.mxu0 %v5944
    %5976 = vmatpush.bf16.msra.mxu0 %v5943
    %5977 = vmatpush.bf16.msra.mxu0 %v5942
    %5978 = vmatpush.bf16.msra.mxu0 %v5941
    %5979 = vmatpush.bf16.msra.mxu0 %v5940
    %5980 = vmatmul.bf16.gmra.mxu0 %v5838
    %v5981 = vpop.f32.mrf.mxu0
    %v5982 = vadd.f32 %v5874, %v5981
    %v5983 = vpop.f32.mrf.mxu0
    %v5984 = vadd.f32 %v5874, %v5983
    %5985 = vdwg.mxu0
    %5986 = vmatpush.bf16.msra.mxu0 %v5955
    %5987 = vmatpush.bf16.msra.mxu0 %v5954
    %5988 = vmatpush.bf16.msra.mxu0 %v5953
    %5989 = vmatpush.bf16.msra.mxu0 %v5952
    %5990 = vmatpush.bf16.msra.mxu0 %v5951
    %5991 = vmatpush.bf16.msra.mxu0 %v5950
    %5992 = vmatpush.bf16.msra.mxu0 %v5949
    %5993 = vmatpush.bf16.msra.mxu0 %v5948
    %5994 = vmatmul.bf16.gmra.mxu0 %v5839
    %v5995 = vpop.f32.mrf.mxu0
    %v5996 = vadd.f32 %v5982, %v5995
    %v5997 = vpop.f32.mrf.mxu0
    %v5998 = vadd.f32 %v5984, %v5997
    %5999 = vdwg.mxu0
    %vm6000 = vcmask 7168
    %6001 = vst.msk [vmem:[%s9] sm:$0xff] %vm6000, %v5996
    %6002 = vst.msk [vmem:[%s9 + $0x8] sm:$0xff] %vm6000, %v5998
    // Predicated region
    $region62: #{critic_forward.1} parent=1 // pred_check
      _
    $region63: #{critic_forward.1} parent=1 // pred_check_branch
      %6004 = sbr.rel (0) target = $region65
    $region64: #{critic_forward.1} parent=1 // pred_region
      _
    $region65: #{critic_forward.1} parent=1 // pred_fallthru
      _
    // Predicated region
    $region66: #{critic_forward.1} parent=1 // pred_check
      _
    $region67: #{critic_forward.1} parent=1 // pred_check_branch
      %6006 = sbr.rel (0) target = $region69
    $region68: #{critic_forward.1} parent=1 // pred_region
      _
    $region69: #{critic_forward.1} parent=1 // pred_fallthru
      _
    %6007 = vsyncpa [#allocation4], 1
    %6008 = vsyncpa [#allocation6], 1
    %6009 = vsyncpa [#allocation9], 1
    %6010 = vsyncpa [#allocation12], 1

</llo_original>
